<compile_context>
chip_gen: v7x
topology: tpu7x:2x2x1
jax: 0.10.0
libtpu: 0.0.40
codegen_flags: <defaults>
</compile_context>

<pallas_src>
import functools

import jax
import jax.numpy as jnp
from jax.experimental import pallas as pl
from jax.experimental.pallas import tpu as pltpu


# --------------------------------- kernel ------------------------------------

def _mims_kernel(inp_ref, c_ref, w_ref, mask_ref, b_ref, pat_ref,
                 h_out_ref, c_out_ref, *, C, H, W, n_sets):
    """Fused MIMS cell for one batch element (all activations are (rows, H*W))."""
    HW = H * W
    xin = inp_ref[0]                       # (n_sets*C, HW) f32   [h_t ; x]
    ct = c_ref[0]                          # (C, HW)        f32   c_t
    bias = b_ref[...]                      # (4C, 1)        f32   b_h (+ b_x)

    # ---- fused 3x3 'same' convolutions: in-VMEM im2col via static lane rolls.
    # acc rows 0:4C  = conv_h(h_t) channels (i, g, f, o)
    # acc rows 4C:8C = conv_x(x)   channels (i, g, f, o)   (only if n_sets == 2)
    acc = jnp.zeros((4 * C * n_sets, HW), jnp.float32)
    for di in range(3):
        for dj in range(3):
            k = di * 3 + dj
            s = (di - 1) * W + (dj - 1)                 # flattened-spatial shift
            shifted = xin if s == 0 else pltpu.roll(xin, shift=(-s) % HW, axis=1)
            tap = (shifted * mask_ref[k]).astype(jnp.bfloat16)  # bf16 MXU operand
            acc = acc + jnp.dot(w_ref[k], tap,
                                preferred_element_type=jnp.float32)

    pre_i = acc[0 * C:1 * C] + bias[0 * C:1 * C]
    pre_g = acc[1 * C:2 * C] + bias[1 * C:2 * C]
    pre_f = acc[2 * C:3 * C] + bias[2 * C:3 * C]
    pre_o = acc[3 * C:4 * C] + bias[3 * C:4 * C]
    if n_sets == 2:
        pre_i = pre_i + acc[4 * C:5 * C]
        pre_g = pre_g + acc[5 * C:6 * C]
        pre_f = pre_f + acc[6 * C:7 * C]
        pre_o = pre_o + acc[7 * C:8 * C]

    # ---- per-channel spatial matmul  y[c] = m[c] (H,W) @ w[c] (W,W), kept flat:
    #      y[c, h*W+v] = sum_d  roll(m, d)[c, h*W+v] * pat[d][c, h*W+v]
    def chan_matmul(m, pat_ids):
        outs = [jnp.zeros((C, HW), jnp.float32) for _ in pat_ids]
        for d in range(-(W - 1), W):
            rolled = m if d == 0 else pltpu.roll(m, shift=d % HW, axis=1)
            for j, pid in enumerate(pat_ids):
                outs[j] = outs[j] + rolled * pat_ref[pid, d + W - 1]
        return outs

    i_c, f_c = chan_matmul(ct, (0, 1))              # ct_activation halves

    i_ = jax.nn.sigmoid(pre_i + i_c)
    f_ = jax.nn.sigmoid(pre_f + f_c + 1.0)          # _forget_bias = 1.0
    g_ = jnp.tanh(pre_g)
    c_new = f_ * ct + i_ * g_

    (o_c,) = chan_matmul(c_new, (2,))               # oc_weight
    h_new = jax.nn.sigmoid(pre_o + o_c) * jnp.tanh(c_new)

    h_out_ref[0] = h_new                            # lane-dense (C, H*W) stores
    c_out_ref[0] = c_new


# ----------------------------- host-side helpers -----------------------------

def _conv_taps(w):
    """(O, I, 3, 3) OIHW conv weight -> (9, O, I) per-tap matrices."""
    O, I = w.shape[0], w.shape[1]
    return jnp.transpose(w, (2, 3, 0, 1)).reshape(9, O, I)


def _conv_boundary_masks(H, W):
    """(9, 1, H*W) 0/1 masks implementing 'same' zero padding per 3x3 tap."""
    pos = jnp.arange(H * W)
    r, c = pos // W, pos % W
    rows = []
    for di in range(3):
        for dj in range(3):
            dr, dc = di - 1, dj - 1
            ok = (r + dr >= 0) & (r + dr < H) & (c + dc >= 0) & (c + dc < W)
            rows.append(ok.astype(jnp.float32))
    return jnp.stack(rows, axis=0).reshape(9, 1, H * W)


def _shift_scale_patterns(wmat, H, W):
    """Per-channel (W,W) matmul -> lane shift-and-scale patterns.

    wmat: (C, W, W) with indices [c, w, v]; returns (2W-1, C, H*W) where
    pattern[d+W-1][c, h*W+v] = wmat[c, v-d, v]  (0 when v-d falls outside [0, W)).
    """
    HW = H * W
    v = jnp.arange(HW) % W
    pats = []
    for d in range(-(W - 1), W):
        w = v - d
        valid = (w >= 0) & (w < W)
        pat = wmat[:, jnp.clip(w, 0, W - 1), v]          # (C, HW)
        pats.append(jnp.where(valid[None, :], pat, 0.0))
    return jnp.stack(pats, axis=0)


# --------------------------------- wrapper ------------------------------------

def mims_forward(params, x, h_t, c_t, shape=None):
    """Pallas TPU implementation of MIMS.forward (tln=False path)."""
    if h_t is None:
        h_t = jnp.zeros(shape, jnp.float32)
    if c_t is None:
        c_t = jnp.zeros(shape, jnp.float32)
    B, C, H, W = c_t.shape
    if H != W:
        raise ValueError(f"MIMS gating matmuls require H == W (got H={H}, W={W}).")
    HW = H * W
    n_sets = 2 if x is not None else 1

    # Lane-dense (B, rows, H*W) activations; h_t and x are stacked so the two
    # 3x3 convolutions run as one block-diagonal matmul per tap.
    h_flat = h_t.astype(jnp.float32).reshape(B, C, HW)
    c_flat = c_t.astype(jnp.float32).reshape(B, C, HW)
    if n_sets == 2:
        inp = jnp.concatenate(
            [h_flat, x.astype(jnp.float32).reshape(B, C, HW)], axis=1)  # (B,2C,HW)
        zer = jnp.zeros((9, 4 * C, C), jnp.float32)
        w_taps = jnp.concatenate(
            [jnp.concatenate([_conv_taps(params['w_h']), zer], axis=2),
             jnp.concatenate([zer, _conv_taps(params['w_x'])], axis=2)],
            axis=1)                                                     # (9,8C,2C)
        bias = params['b_h'] + params['b_x']
    else:
        inp = h_flat
        w_taps = _conv_taps(params['w_h'])                              # (9,4C,C)
        bias = params['b_h']
    w_taps = w_taps.astype(jnp.bfloat16)        # bf16 MXU operands, f32 accum
    bias = bias.astype(jnp.float32).reshape(4 * C, 1)
    conv_mask = _conv_boundary_masks(H, W)

    ctw = params['ct_weight'].astype(jnp.float32)
    pats = jnp.stack(
        [_shift_scale_patterns(ctw[:C], H, W),                          # i gate
         _shift_scale_patterns(ctw[C:], H, W),                          # f gate
         _shift_scale_patterns(params['oc_weight'].astype(jnp.float32), H, W)],
        axis=0)                                                         # (3,2W-1,C,HW)

    kernel = functools.partial(_mims_kernel, C=C, H=H, W=W, n_sets=n_sets)
    h_new, c_new = pl.pallas_call(
        kernel,
        out_shape=(jax.ShapeDtypeStruct((B, C, HW), jnp.float32),
                   jax.ShapeDtypeStruct((B, C, HW), jnp.float32)),
        grid_spec=pltpu.PrefetchScalarGridSpec(
            num_scalar_prefetch=0,
            grid=(B,),
            in_specs=[
                pl.BlockSpec((1, n_sets * C, HW), lambda b: (b, 0, 0)),
                pl.BlockSpec((1, C, HW), lambda b: (b, 0, 0)),
                pl.BlockSpec((9, 4 * C * n_sets, C * n_sets), lambda b: (0, 0, 0)),
                pl.BlockSpec((9, 1, HW), lambda b: (0, 0, 0)),
                pl.BlockSpec((4 * C, 1), lambda b: (0, 0)),
                pl.BlockSpec((3, 2 * W - 1, C, HW), lambda b: (0, 0, 0, 0)),
            ],
            out_specs=(pl.BlockSpec((1, C, HW), lambda b: (b, 0, 0)),
                       pl.BlockSpec((1, C, HW), lambda b: (b, 0, 0))),
        ),
        # NOTE: the grid is only over B; on v7x a B==1 call would feed a single
        # TensorCore -- add a spatial/channel "parallel" axis for that regime.
        compiler_params=pltpu.CompilerParams(dimension_semantics=("parallel",)),
    )(inp, c_flat, w_taps, conv_mask, bias, pats)

    return h_new.reshape(B, C, H, W), c_new.reshape(B, C, H, W)


# --------------------------- pure-JAX reference ------------------------------

def mims_reference(params, x, h_t, c_t):
    C = c_t.shape[1]
    hi = jax.lax.Precision.HIGHEST

    def conv(inp, w, b):
        out = jax.lax.conv_general_dilated(
            inp, w, (1, 1), 'SAME',
            dimension_numbers=('NCHW', 'OIHW', 'NCHW'), precision=hi)
        return out + b[None, :, None, None]

    ch = conv(h_t, params['w_h'], params['b_h'])
    cx = conv(x, params['w_x'], params['b_x'])
    i_h, g_h, f_h, o_h = jnp.split(ch, 4, axis=1)
    i_x, g_x, f_x, o_x = jnp.split(cx, 4, axis=1)
    c_rep = jnp.concatenate([c_t, c_t], axis=1)
    ct_act = jnp.einsum('bchw,cwv->bchv', c_rep, params['ct_weight'], precision=hi)
    i_c, f_c = jnp.split(ct_act, 2, axis=1)
    i_ = jax.nn.sigmoid(i_h + i_c + i_x)
    f_ = jax.nn.sigmoid(f_h + f_c + f_x + 1.0)
    g_ = jnp.tanh(g_h + g_x)
    c_new = f_ * c_t + i_ * g_
    o_c = jnp.einsum('bchw,cwv->bchv', c_new, params['oc_weight'], precision=hi)
    h_new = jax.nn.sigmoid(o_h + o_x + o_c) * jnp.tanh(c_new)
    return h_new, c_new


# ----------------------------------- main ------------------------------------

if __name__ == "__main__":
    # H must equal W (torch.matmul of (B,C,H,W) with a (C,H,W) weight).
    B, C, H, W = 2, 4, 16, 16
    key = jax.random.PRNGKey(0)
    ks = jax.random.split(key, 9)
    params = dict(
        w_h=0.1 * jax.random.normal(ks[0], (4 * C, C, 3, 3), jnp.float32),
        b_h=0.1 * jax.random.normal(ks[1], (4 * C,), jnp.float32),
        w_x=0.1 * jax.random.normal(ks[2], (4 * C, C, 3, 3), jnp.float32),
        b_x=0.1 * jax.random.normal(ks[3], (4 * C,), jnp.float32),
        ct_weight=jax.random.normal(ks[4], (2 * C, H, W), jnp.float32),  # N(0,1)
        oc_weight=jax.random.normal(ks[5], (C, H, W), jnp.float32),      # N(0,1)
    )
    x = jax.random.normal(ks[6], (B, C, H, W), jnp.float32)
    h_t = jax.random.normal(ks[7], (B, C, H, W), jnp.float32)
    c_t = jax.random.normal(ks[8], (B, C, H, W), jnp.float32)

    fwd = jax.jit(mims_forward)
    h_new, c_new = fwd(params, x, h_t, c_t)
    jax.block_until_ready((h_new, c_new))

    h_ref, c_ref_out = mims_reference(params, x, h_t, c_t)
    assert h_new.shape == (B, C, H, W) and c_new.shape == (B, C, H, W)
    assert bool(jnp.allclose(h_new, h_ref, rtol=0, atol=5e-2)), \
        float(jnp.max(jnp.abs(h_new - h_ref)))
    assert bool(jnp.allclose(c_new, c_ref_out, rtol=0, atol=5e-2)), \
        float(jnp.max(jnp.abs(c_new - c_ref_out)))
    print("KERNEL_OK")
</pallas_src>

<mosaic_0001>
module attributes {stable_mosaic.version = 11 : i64} {
  func.func @_mims_kernel(%arg0: i32, %arg1: memref<1x8x256xf32, #tpu.memory_space<vmem>>, %arg2: memref<1x4x256xf32, #tpu.memory_space<vmem>>, %arg3: memref<9x32x8xbf16, #tpu.memory_space<vmem>>, %arg4: memref<9x1x256xf32, #tpu.memory_space<vmem>>, %arg5: memref<16x1xf32, #tpu.memory_space<vmem>>, %arg6: memref<3x31x4x256xf32, #tpu.memory_space<vmem>>, %arg7: memref<1x4x256xf32, #tpu.memory_space<vmem>>, %arg8: memref<1x4x256xf32, #tpu.memory_space<vmem>>) attributes {dimension_semantics = [#tpu.dimension_semantics<parallel>], iteration_bounds = array<i64: 2>, scalar_prefetch = 0 : i64, scratch_operands = 0 : i64, tpu.core_type = #tpu.core_type<tc>, window_params = [{transform_indices = @transform_0, window_bounds = array<i64: 1, 8, 256>}, {transform_indices = @transform_1, window_bounds = array<i64: 1, 4, 256>}, {pipeline_mode = #tpu.pipeline_mode<synchronous>, transform_indices = @transform_2, window_bounds = array<i64: 9, 32, 8>}, {pipeline_mode = #tpu.pipeline_mode<synchronous>, transform_indices = @transform_3, window_bounds = array<i64: 9, 1, 256>}, {pipeline_mode = #tpu.pipeline_mode<synchronous>, transform_indices = @transform_4, window_bounds = array<i64: 16, 1>}, {pipeline_mode = #tpu.pipeline_mode<synchronous>, transform_indices = @transform_5, window_bounds = array<i64: 3, 31, 4, 256>}, {transform_indices = @transform_6, window_bounds = array<i64: 1, 4, 256>}, {transform_indices = @transform_7, window_bounds = array<i64: 1, 4, 256>}]} {
    %c0 = arith.constant 0 : index
    %c0_0 = arith.constant 0 : index
    %c0_1 = arith.constant 0 : index
    %0 = vector.load %arg1[%c0, %c0_0, %c0_1] : memref<1x8x256xf32, #tpu.memory_space<vmem>>, vector<1x8x256xf32>
    %1 = vector.shape_cast %0 : vector<1x8x256xf32> to vector<8x256xf32>
    %c0_2 = arith.constant 0 : index
    %c0_3 = arith.constant 0 : index
    %c0_4 = arith.constant 0 : index
    %2 = vector.load %arg2[%c0_2, %c0_3, %c0_4] : memref<1x4x256xf32, #tpu.memory_space<vmem>>, vector<1x4x256xf32>
    %3 = vector.shape_cast %2 : vector<1x4x256xf32> to vector<4x256xf32>
    %c0_5 = arith.constant 0 : index
    %c0_6 = arith.constant 0 : index
    %4 = vector.load %arg5[%c0_5, %c0_6] : memref<16x1xf32, #tpu.memory_space<vmem>>, vector<16x1xf32>
    %cst = arith.constant 0.000000e+00 : f32
    %5 = vector.broadcast %cst : f32 to vector<32x256xf32>
    %c17_i32 = arith.constant 17 : i32
    %6 = tpu.dynamic_rotate %1 by %c17_i32 dim 1 : vector<8x256xf32>, i32 -> vector<8x256xf32>
    %c0_7 = arith.constant 0 : index
    %c0_8 = arith.constant 0 : index
    %c0_9 = arith.constant 0 : index
    %7 = vector.load %arg4[%c0_7, %c0_8, %c0_9] : memref<9x1x256xf32, #tpu.memory_space<vmem>>, vector<1x1x256xf32>
    %8 = vector.shape_cast %7 : vector<1x1x256xf32> to vector<1x256xf32>
    %9 = vector.broadcast %8 : vector<1x256xf32> to vector<8x256xf32>
    %10 = arith.mulf %6, %9 : vector<8x256xf32>
    %11 = arith.truncf %10 : vector<8x256xf32> to vector<8x256xbf16>
    %c0_10 = arith.constant 0 : index
    %c0_11 = arith.constant 0 : index
    %c0_12 = arith.constant 0 : index
    %12 = vector.load %arg3[%c0_10, %c0_11, %c0_12] : memref<9x32x8xbf16, #tpu.memory_space<vmem>>, vector<1x32x8xbf16>
    %13 = vector.shape_cast %12 : vector<1x32x8xbf16> to vector<32x8xbf16>
    %cst_13 = arith.constant dense<0.000000e+00> : vector<32x256xf32>
    %14 = tpu.matmul %13, %11, %cst_13 {dimension_numbers = #tpu.dot_dimension_numbers<[1], [0], [0], [1], [0, 0, 1, 1], [], []>} : vector<32x8xbf16>, vector<8x256xbf16>, vector<32x256xf32> -> vector<32x256xf32>
    %15 = arith.addf %5, %14 : vector<32x256xf32>
    %c16_i32 = arith.constant 16 : i32
    %16 = tpu.dynamic_rotate %1 by %c16_i32 dim 1 : vector<8x256xf32>, i32 -> vector<8x256xf32>
    %c1 = arith.constant 1 : index
    %c0_14 = arith.constant 0 : index
    %c0_15 = arith.constant 0 : index
    %17 = vector.load %arg4[%c1, %c0_14, %c0_15] : memref<9x1x256xf32, #tpu.memory_space<vmem>>, vector<1x1x256xf32>
    %18 = vector.shape_cast %17 : vector<1x1x256xf32> to vector<1x256xf32>
    %19 = vector.broadcast %18 : vector<1x256xf32> to vector<8x256xf32>
    %20 = arith.mulf %16, %19 : vector<8x256xf32>
    %21 = arith.truncf %20 : vector<8x256xf32> to vector<8x256xbf16>
    %c1_16 = arith.constant 1 : index
    %c0_17 = arith.constant 0 : index
    %c0_18 = arith.constant 0 : index
    %22 = vector.load %arg3[%c1_16, %c0_17, %c0_18] : memref<9x32x8xbf16, #tpu.memory_space<vmem>>, vector<1x32x8xbf16>
    %23 = vector.shape_cast %22 : vector<1x32x8xbf16> to vector<32x8xbf16>
    %cst_19 = arith.constant dense<0.000000e+00> : vector<32x256xf32>
    %24 = tpu.matmul %23, %21, %cst_19 {dimension_numbers = #tpu.dot_dimension_numbers<[1], [0], [0], [1], [0, 0, 1, 1], [], []>} : vector<32x8xbf16>, vector<8x256xbf16>, vector<32x256xf32> -> vector<32x256xf32>
    %25 = arith.addf %15, %24 : vector<32x256xf32>
    %c15_i32 = arith.constant 15 : i32
    %26 = tpu.dynamic_rotate %1 by %c15_i32 dim 1 : vector<8x256xf32>, i32 -> vector<8x256xf32>
    %c2 = arith.constant 2 : index
    %c0_20 = arith.constant 0 : index
    %c0_21 = arith.constant 0 : index
    %27 = vector.load %arg4[%c2, %c0_20, %c0_21] : memref<9x1x256xf32, #tpu.memory_space<vmem>>, vector<1x1x256xf32>
    %28 = vector.shape_cast %27 : vector<1x1x256xf32> to vector<1x256xf32>
    %29 = vector.broadcast %28 : vector<1x256xf32> to vector<8x256xf32>
    %30 = arith.mulf %26, %29 : vector<8x256xf32>
    %31 = arith.truncf %30 : vector<8x256xf32> to vector<8x256xbf16>
    %c2_22 = arith.constant 2 : index
    %c0_23 = arith.constant 0 : index
    %c0_24 = arith.constant 0 : index
    %32 = vector.load %arg3[%c2_22, %c0_23, %c0_24] : memref<9x32x8xbf16, #tpu.memory_space<vmem>>, vector<1x32x8xbf16>
    %33 = vector.shape_cast %32 : vector<1x32x8xbf16> to vector<32x8xbf16>
    %cst_25 = arith.constant dense<0.000000e+00> : vector<32x256xf32>
    %34 = tpu.matmul %33, %31, %cst_25 {dimension_numbers = #tpu.dot_dimension_numbers<[1], [0], [0], [1], [0, 0, 1, 1], [], []>} : vector<32x8xbf16>, vector<8x256xbf16>, vector<32x256xf32> -> vector<32x256xf32>
    %35 = arith.addf %25, %34 : vector<32x256xf32>
    %c1_i32 = arith.constant 1 : i32
    %36 = tpu.dynamic_rotate %1 by %c1_i32 dim 1 : vector<8x256xf32>, i32 -> vector<8x256xf32>
    %c3 = arith.constant 3 : index
    %c0_26 = arith.constant 0 : index
    %c0_27 = arith.constant 0 : index
    %37 = vector.load %arg4[%c3, %c0_26, %c0_27] : memref<9x1x256xf32, #tpu.memory_space<vmem>>, vector<1x1x256xf32>
    %38 = vector.shape_cast %37 : vector<1x1x256xf32> to vector<1x256xf32>
    %39 = vector.broadcast %38 : vector<1x256xf32> to vector<8x256xf32>
    %40 = arith.mulf %36, %39 : vector<8x256xf32>
    %41 = arith.truncf %40 : vector<8x256xf32> to vector<8x256xbf16>
    %c3_28 = arith.constant 3 : index
    %c0_29 = arith.constant 0 : index
    %c0_30 = arith.constant 0 : index
    %42 = vector.load %arg3[%c3_28, %c0_29, %c0_30] : memref<9x32x8xbf16, #tpu.memory_space<vmem>>, vector<1x32x8xbf16>
    %43 = vector.shape_cast %42 : vector<1x32x8xbf16> to vector<32x8xbf16>
    %cst_31 = arith.constant dense<0.000000e+00> : vector<32x256xf32>
    %44 = tpu.matmul %43, %41, %cst_31 {dimension_numbers = #tpu.dot_dimension_numbers<[1], [0], [0], [1], [0, 0, 1, 1], [], []>} : vector<32x8xbf16>, vector<8x256xbf16>, vector<32x256xf32> -> vector<32x256xf32>
    %45 = arith.addf %35, %44 : vector<32x256xf32>
    %c4 = arith.constant 4 : index
    %c0_32 = arith.constant 0 : index
    %c0_33 = arith.constant 0 : index
    %46 = vector.load %arg4[%c4, %c0_32, %c0_33] : memref<9x1x256xf32, #tpu.memory_space<vmem>>, vector<1x1x256xf32>
    %47 = vector.shape_cast %46 : vector<1x1x256xf32> to vector<1x256xf32>
    %48 = vector.broadcast %47 : vector<1x256xf32> to vector<8x256xf32>
    %49 = arith.mulf %1, %48 : vector<8x256xf32>
    %50 = arith.truncf %49 : vector<8x256xf32> to vector<8x256xbf16>
    %c4_34 = arith.constant 4 : index
    %c0_35 = arith.constant 0 : index
    %c0_36 = arith.constant 0 : index
    %51 = vector.load %arg3[%c4_34, %c0_35, %c0_36] : memref<9x32x8xbf16, #tpu.memory_space<vmem>>, vector<1x32x8xbf16>
    %52 = vector.shape_cast %51 : vector<1x32x8xbf16> to vector<32x8xbf16>
    %cst_37 = arith.constant dense<0.000000e+00> : vector<32x256xf32>
    %53 = tpu.matmul %52, %50, %cst_37 {dimension_numbers = #tpu.dot_dimension_numbers<[1], [0], [0], [1], [0, 0, 1, 1], [], []>} : vector<32x8xbf16>, vector<8x256xbf16>, vector<32x256xf32> -> vector<32x256xf32>
    %54 = arith.addf %45, %53 : vector<32x256xf32>
    %c255_i32 = arith.constant 255 : i32
    %55 = tpu.dynamic_rotate %1 by %c255_i32 dim 1 : vector<8x256xf32>, i32 -> vector<8x256xf32>
    %c5 = arith.constant 5 : index
    %c0_38 = arith.constant 0 : index
    %c0_39 = arith.constant 0 : index
    %56 = vector.load %arg4[%c5, %c0_38, %c0_39] : memref<9x1x256xf32, #tpu.memory_space<vmem>>, vector<1x1x256xf32>
    %57 = vector.shape_cast %56 : vector<1x1x256xf32> to vector<1x256xf32>
    %58 = vector.broadcast %57 : vector<1x256xf32> to vector<8x256xf32>
    %59 = arith.mulf %55, %58 : vector<8x256xf32>
    %60 = arith.truncf %59 : vector<8x256xf32> to vector<8x256xbf16>
    %c5_40 = arith.constant 5 : index
    %c0_41 = arith.constant 0 : index
    %c0_42 = arith.constant 0 : index
    %61 = vector.load %arg3[%c5_40, %c0_41, %c0_42] : memref<9x32x8xbf16, #tpu.memory_space<vmem>>, vector<1x32x8xbf16>
    %62 = vector.shape_cast %61 : vector<1x32x8xbf16> to vector<32x8xbf16>
    %cst_43 = arith.constant dense<0.000000e+00> : vector<32x256xf32>
    %63 = tpu.matmul %62, %60, %cst_43 {dimension_numbers = #tpu.dot_dimension_numbers<[1], [0], [0], [1], [0, 0, 1, 1], [], []>} : vector<32x8xbf16>, vector<8x256xbf16>, vector<32x256xf32> -> vector<32x256xf32>
    %64 = arith.addf %54, %63 : vector<32x256xf32>
    %c241_i32 = arith.constant 241 : i32
    %65 = tpu.dynamic_rotate %1 by %c241_i32 dim 1 : vector<8x256xf32>, i32 -> vector<8x256xf32>
    %c6 = arith.constant 6 : index
    %c0_44 = arith.constant 0 : index
    %c0_45 = arith.constant 0 : index
    %66 = vector.load %arg4[%c6, %c0_44, %c0_45] : memref<9x1x256xf32, #tpu.memory_space<vmem>>, vector<1x1x256xf32>
    %67 = vector.shape_cast %66 : vector<1x1x256xf32> to vector<1x256xf32>
    %68 = vector.broadcast %67 : vector<1x256xf32> to vector<8x256xf32>
    %69 = arith.mulf %65, %68 : vector<8x256xf32>
    %70 = arith.truncf %69 : vector<8x256xf32> to vector<8x256xbf16>
    %c6_46 = arith.constant 6 : index
    %c0_47 = arith.constant 0 : index
    %c0_48 = arith.constant 0 : index
    %71 = vector.load %arg3[%c6_46, %c0_47, %c0_48] : memref<9x32x8xbf16, #tpu.memory_space<vmem>>, vector<1x32x8xbf16>
    %72 = vector.shape_cast %71 : vector<1x32x8xbf16> to vector<32x8xbf16>
    %cst_49 = arith.constant dense<0.000000e+00> : vector<32x256xf32>
    %73 = tpu.matmul %72, %70, %cst_49 {dimension_numbers = #tpu.dot_dimension_numbers<[1], [0], [0], [1], [0, 0, 1, 1], [], []>} : vector<32x8xbf16>, vector<8x256xbf16>, vector<32x256xf32> -> vector<32x256xf32>
    %74 = arith.addf %64, %73 : vector<32x256xf32>
    %c240_i32 = arith.constant 240 : i32
    %75 = tpu.dynamic_rotate %1 by %c240_i32 dim 1 : vector<8x256xf32>, i32 -> vector<8x256xf32>
    %c7 = arith.constant 7 : index
    %c0_50 = arith.constant 0 : index
    %c0_51 = arith.constant 0 : index
    %76 = vector.load %arg4[%c7, %c0_50, %c0_51] : memref<9x1x256xf32, #tpu.memory_space<vmem>>, vector<1x1x256xf32>
    %77 = vector.shape_cast %76 : vector<1x1x256xf32> to vector<1x256xf32>
    %78 = vector.broadcast %77 : vector<1x256xf32> to vector<8x256xf32>
    %79 = arith.mulf %75, %78 : vector<8x256xf32>
    %80 = arith.truncf %79 : vector<8x256xf32> to vector<8x256xbf16>
    %c7_52 = arith.constant 7 : index
    %c0_53 = arith.constant 0 : index
    %c0_54 = arith.constant 0 : index
    %81 = vector.load %arg3[%c7_52, %c0_53, %c0_54] : memref<9x32x8xbf16, #tpu.memory_space<vmem>>, vector<1x32x8xbf16>
    %82 = vector.shape_cast %81 : vector<1x32x8xbf16> to vector<32x8xbf16>
    %cst_55 = arith.constant dense<0.000000e+00> : vector<32x256xf32>
    %83 = tpu.matmul %82, %80, %cst_55 {dimension_numbers = #tpu.dot_dimension_numbers<[1], [0], [0], [1], [0, 0, 1, 1], [], []>} : vector<32x8xbf16>, vector<8x256xbf16>, vector<32x256xf32> -> vector<32x256xf32>
    %84 = arith.addf %74, %83 : vector<32x256xf32>
    %c239_i32 = arith.constant 239 : i32
    %85 = tpu.dynamic_rotate %1 by %c239_i32 dim 1 : vector<8x256xf32>, i32 -> vector<8x256xf32>
    %c8 = arith.constant 8 : index
    %c0_56 = arith.constant 0 : index
    %c0_57 = arith.constant 0 : index
    %86 = vector.load %arg4[%c8, %c0_56, %c0_57] : memref<9x1x256xf32, #tpu.memory_space<vmem>>, vector<1x1x256xf32>
    %87 = vector.shape_cast %86 : vector<1x1x256xf32> to vector<1x256xf32>
    %88 = vector.broadcast %87 : vector<1x256xf32> to vector<8x256xf32>
    %89 = arith.mulf %85, %88 : vector<8x256xf32>
    %90 = arith.truncf %89 : vector<8x256xf32> to vector<8x256xbf16>
    %c8_58 = arith.constant 8 : index
    %c0_59 = arith.constant 0 : index
    %c0_60 = arith.constant 0 : index
    %91 = vector.load %arg3[%c8_58, %c0_59, %c0_60] : memref<9x32x8xbf16, #tpu.memory_space<vmem>>, vector<1x32x8xbf16>
    %92 = vector.shape_cast %91 : vector<1x32x8xbf16> to vector<32x8xbf16>
    %cst_61 = arith.constant dense<0.000000e+00> : vector<32x256xf32>
    %93 = tpu.matmul %92, %90, %cst_61 {dimension_numbers = #tpu.dot_dimension_numbers<[1], [0], [0], [1], [0, 0, 1, 1], [], []>} : vector<32x8xbf16>, vector<8x256xbf16>, vector<32x256xf32> -> vector<32x256xf32>
    %94 = arith.addf %84, %93 : vector<32x256xf32>
    %95 = vector.extract_strided_slice %94 {offsets = [0, 0], sizes = [4, 256], strides = [1, 1]} : vector<32x256xf32> to vector<4x256xf32>
    %96 = vector.extract_strided_slice %4 {offsets = [0, 0], sizes = [4, 1], strides = [1, 1]} : vector<16x1xf32> to vector<4x1xf32>
    %97 = vector.broadcast %96 : vector<4x1xf32> to vector<4x256xf32>
    %98 = arith.addf %95, %97 : vector<4x256xf32>
    %99 = vector.extract_strided_slice %94 {offsets = [4, 0], sizes = [4, 256], strides = [1, 1]} : vector<32x256xf32> to vector<4x256xf32>
    %100 = vector.extract_strided_slice %4 {offsets = [4, 0], sizes = [4, 1], strides = [1, 1]} : vector<16x1xf32> to vector<4x1xf32>
    %101 = vector.broadcast %100 : vector<4x1xf32> to vector<4x256xf32>
    %102 = arith.addf %99, %101 : vector<4x256xf32>
    %103 = vector.extract_strided_slice %94 {offsets = [8, 0], sizes = [4, 256], strides = [1, 1]} : vector<32x256xf32> to vector<4x256xf32>
    %104 = vector.extract_strided_slice %4 {offsets = [8, 0], sizes = [4, 1], strides = [1, 1]} : vector<16x1xf32> to vector<4x1xf32>
    %105 = vector.broadcast %104 : vector<4x1xf32> to vector<4x256xf32>
    %106 = arith.addf %103, %105 : vector<4x256xf32>
    %107 = vector.extract_strided_slice %94 {offsets = [12, 0], sizes = [4, 256], strides = [1, 1]} : vector<32x256xf32> to vector<4x256xf32>
    %108 = vector.extract_strided_slice %4 {offsets = [12, 0], sizes = [4, 1], strides = [1, 1]} : vector<16x1xf32> to vector<4x1xf32>
    %109 = vector.broadcast %108 : vector<4x1xf32> to vector<4x256xf32>
    %110 = arith.addf %107, %109 : vector<4x256xf32>
    %111 = vector.extract_strided_slice %94 {offsets = [16, 0], sizes = [4, 256], strides = [1, 1]} : vector<32x256xf32> to vector<4x256xf32>
    %112 = arith.addf %98, %111 : vector<4x256xf32>
    %113 = vector.extract_strided_slice %94 {offsets = [20, 0], sizes = [4, 256], strides = [1, 1]} : vector<32x256xf32> to vector<4x256xf32>
    %114 = arith.addf %102, %113 : vector<4x256xf32>
    %115 = vector.extract_strided_slice %94 {offsets = [24, 0], sizes = [4, 256], strides = [1, 1]} : vector<32x256xf32> to vector<4x256xf32>
    %116 = arith.addf %106, %115 : vector<4x256xf32>
    %117 = vector.extract_strided_slice %94 {offsets = [28, 0], sizes = [4, 256], strides = [1, 1]} : vector<32x256xf32> to vector<4x256xf32>
    %118 = arith.addf %110, %117 : vector<4x256xf32>
    %cst_62 = arith.constant 0.000000e+00 : f32
    %119 = vector.broadcast %cst_62 : f32 to vector<4x256xf32>
    %cst_63 = arith.constant 0.000000e+00 : f32
    %120 = vector.broadcast %cst_63 : f32 to vector<4x256xf32>
    %c241_i32_64 = arith.constant 241 : i32
    %121 = tpu.dynamic_rotate %3 by %c241_i32_64 dim 1 : vector<4x256xf32>, i32 -> vector<4x256xf32>
    %c0_65 = arith.constant 0 : index
    %c0_66 = arith.constant 0 : index
    %c0_67 = arith.constant 0 : index
    %c0_68 = arith.constant 0 : index
    %122 = vector.load %arg6[%c0_65, %c0_66, %c0_67, %c0_68] : memref<3x31x4x256xf32, #tpu.memory_space<vmem>>, vector<1x1x4x256xf32>
    %123 = vector.shape_cast %122 : vector<1x1x4x256xf32> to vector<4x256xf32>
    %124 = arith.mulf %121, %123 : vector<4x256xf32>
    %125 = arith.addf %119, %124 : vector<4x256xf32>
    %c1_69 = arith.constant 1 : index
    %c0_70 = arith.constant 0 : index
    %c0_71 = arith.constant 0 : index
    %c0_72 = arith.constant 0 : index
    %126 = vector.load %arg6[%c1_69, %c0_70, %c0_71, %c0_72] : memref<3x31x4x256xf32, #tpu.memory_space<vmem>>, vector<1x1x4x256xf32>
    %127 = vector.shape_cast %126 : vector<1x1x4x256xf32> to vector<4x256xf32>
    %128 = arith.mulf %121, %127 : vector<4x256xf32>
    %129 = arith.addf %120, %128 : vector<4x256xf32>
    %c242_i32 = arith.constant 242 : i32
    %130 = tpu.dynamic_rotate %3 by %c242_i32 dim 1 : vector<4x256xf32>, i32 -> vector<4x256xf32>
    %c0_73 = arith.constant 0 : index
    %c1_74 = arith.constant 1 : index
    %c0_75 = arith.constant 0 : index
    %c0_76 = arith.constant 0 : index
    %131 = vector.load %arg6[%c0_73, %c1_74, %c0_75, %c0_76] : memref<3x31x4x256xf32, #tpu.memory_space<vmem>>, vector<1x1x4x256xf32>
    %132 = vector.shape_cast %131 : vector<1x1x4x256xf32> to vector<4x256xf32>
    %133 = arith.mulf %130, %132 : vector<4x256xf32>
    %134 = arith.addf %125, %133 : vector<4x256xf32>
    %c1_77 = arith.constant 1 : index
    %c1_78 = arith.constant 1 : index
    %c0_79 = arith.constant 0 : index
    %c0_80 = arith.constant 0 : index
    %135 = vector.load %arg6[%c1_77, %c1_78, %c0_79, %c0_80] : memref<3x31x4x256xf32, #tpu.memory_space<vmem>>, vector<1x1x4x256xf32>
    %136 = vector.shape_cast %135 : vector<1x1x4x256xf32> to vector<4x256xf32>
    %137 = arith.mulf %130, %136 : vector<4x256xf32>
    %138 = arith.addf %129, %137 : vector<4x256xf32>
    %c243_i32 = arith.constant 243 : i32
    %139 = tpu.dynamic_rotate %3 by %c243_i32 dim 1 : vector<4x256xf32>, i32 -> vector<4x256xf32>
    %c0_81 = arith.constant 0 : index
    %c2_82 = arith.constant 2 : index
    %c0_83 = arith.constant 0 : index
    %c0_84 = arith.constant 0 : index
    %140 = vector.load %arg6[%c0_81, %c2_82, %c0_83, %c0_84] : memref<3x31x4x256xf32, #tpu.memory_space<vmem>>, vector<1x1x4x256xf32>
    %141 = vector.shape_cast %140 : vector<1x1x4x256xf32> to vector<4x256xf32>
    %142 = arith.mulf %139, %141 : vector<4x256xf32>
    %143 = arith.addf %134, %142 : vector<4x256xf32>
    %c1_85 = arith.constant 1 : index
    %c2_86 = arith.constant 2 : index
    %c0_87 = arith.constant 0 : index
    %c0_88 = arith.constant 0 : index
    %144 = vector.load %arg6[%c1_85, %c2_86, %c0_87, %c0_88] : memref<3x31x4x256xf32, #tpu.memory_space<vmem>>, vector<1x1x4x256xf32>
    %145 = vector.shape_cast %144 : vector<1x1x4x256xf32> to vector<4x256xf32>
    %146 = arith.mulf %139, %145 : vector<4x256xf32>
    %147 = arith.addf %138, %146 : vector<4x256xf32>
    %c244_i32 = arith.constant 244 : i32
    %148 = tpu.dynamic_rotate %3 by %c244_i32 dim 1 : vector<4x256xf32>, i32 -> vector<4x256xf32>
    %c0_89 = arith.constant 0 : index
    %c3_90 = arith.constant 3 : index
    %c0_91 = arith.constant 0 : index
    %c0_92 = arith.constant 0 : index
    %149 = vector.load %arg6[%c0_89, %c3_90, %c0_91, %c0_92] : memref<3x31x4x256xf32, #tpu.memory_space<vmem>>, vector<1x1x4x256xf32>
    %150 = vector.shape_cast %149 : vector<1x1x4x256xf32> to vector<4x256xf32>
    %151 = arith.mulf %148, %150 : vector<4x256xf32>
    %152 = arith.addf %143, %151 : vector<4x256xf32>
    %c1_93 = arith.constant 1 : index
    %c3_94 = arith.constant 3 : index
    %c0_95 = arith.constant 0 : index
    %c0_96 = arith.constant 0 : index
    %153 = vector.load %arg6[%c1_93, %c3_94, %c0_95, %c0_96] : memref<3x31x4x256xf32, #tpu.memory_space<vmem>>, vector<1x1x4x256xf32>
    %154 = vector.shape_cast %153 : vector<1x1x4x256xf32> to vector<4x256xf32>
    %155 = arith.mulf %148, %154 : vector<4x256xf32>
    %156 = arith.addf %147, %155 : vector<4x256xf32>
    %c245_i32 = arith.constant 245 : i32
    %157 = tpu.dynamic_rotate %3 by %c245_i32 dim 1 : vector<4x256xf32>, i32 -> vector<4x256xf32>
    %c0_97 = arith.constant 0 : index
    %c4_98 = arith.constant 4 : index
    %c0_99 = arith.constant 0 : index
    %c0_100 = arith.constant 0 : index
    %158 = vector.load %arg6[%c0_97, %c4_98, %c0_99, %c0_100] : memref<3x31x4x256xf32, #tpu.memory_space<vmem>>, vector<1x1x4x256xf32>
    %159 = vector.shape_cast %158 : vector<1x1x4x256xf32> to vector<4x256xf32>
    %160 = arith.mulf %157, %159 : vector<4x256xf32>
    %161 = arith.addf %152, %160 : vector<4x256xf32>
    %c1_101 = arith.constant 1 : index
    %c4_102 = arith.constant 4 : index
    %c0_103 = arith.constant 0 : index
    %c0_104 = arith.constant 0 : index
    %162 = vector.load %arg6[%c1_101, %c4_102, %c0_103, %c0_104] : memref<3x31x4x256xf32, #tpu.memory_space<vmem>>, vector<1x1x4x256xf32>
    %163 = vector.shape_cast %162 : vector<1x1x4x256xf32> to vector<4x256xf32>
    %164 = arith.mulf %157, %163 : vector<4x256xf32>
    %165 = arith.addf %156, %164 : vector<4x256xf32>
    %c246_i32 = arith.constant 246 : i32
    %166 = tpu.dynamic_rotate %3 by %c246_i32 dim 1 : vector<4x256xf32>, i32 -> vector<4x256xf32>
    %c0_105 = arith.constant 0 : index
    %c5_106 = arith.constant 5 : index
    %c0_107 = arith.constant 0 : index
    %c0_108 = arith.constant 0 : index
    %167 = vector.load %arg6[%c0_105, %c5_106, %c0_107, %c0_108] : memref<3x31x4x256xf32, #tpu.memory_space<vmem>>, vector<1x1x4x256xf32>
    %168 = vector.shape_cast %167 : vector<1x1x4x256xf32> to vector<4x256xf32>
    %169 = arith.mulf %166, %168 : vector<4x256xf32>
    %170 = arith.addf %161, %169 : vector<4x256xf32>
    %c1_109 = arith.constant 1 : index
    %c5_110 = arith.constant 5 : index
    %c0_111 = arith.constant 0 : index
    %c0_112 = arith.constant 0 : index
    %171 = vector.load %arg6[%c1_109, %c5_110, %c0_111, %c0_112] : memref<3x31x4x256xf32, #tpu.memory_space<vmem>>, vector<1x1x4x256xf32>
    %172 = vector.shape_cast %171 : vector<1x1x4x256xf32> to vector<4x256xf32>
    %173 = arith.mulf %166, %172 : vector<4x256xf32>
    %174 = arith.addf %165, %173 : vector<4x256xf32>
    %c247_i32 = arith.constant 247 : i32
    %175 = tpu.dynamic_rotate %3 by %c247_i32 dim 1 : vector<4x256xf32>, i32 -> vector<4x256xf32>
    %c0_113 = arith.constant 0 : index
    %c6_114 = arith.constant 6 : index
    %c0_115 = arith.constant 0 : index
    %c0_116 = arith.constant 0 : index
    %176 = vector.load %arg6[%c0_113, %c6_114, %c0_115, %c0_116] : memref<3x31x4x256xf32, #tpu.memory_space<vmem>>, vector<1x1x4x256xf32>
    %177 = vector.shape_cast %176 : vector<1x1x4x256xf32> to vector<4x256xf32>
    %178 = arith.mulf %175, %177 : vector<4x256xf32>
    %179 = arith.addf %170, %178 : vector<4x256xf32>
    %c1_117 = arith.constant 1 : index
    %c6_118 = arith.constant 6 : index
    %c0_119 = arith.constant 0 : index
    %c0_120 = arith.constant 0 : index
    %180 = vector.load %arg6[%c1_117, %c6_118, %c0_119, %c0_120] : memref<3x31x4x256xf32, #tpu.memory_space<vmem>>, vector<1x1x4x256xf32>
    %181 = vector.shape_cast %180 : vector<1x1x4x256xf32> to vector<4x256xf32>
    %182 = arith.mulf %175, %181 : vector<4x256xf32>
    %183 = arith.addf %174, %182 : vector<4x256xf32>
    %c248_i32 = arith.constant 248 : i32
    %184 = tpu.dynamic_rotate %3 by %c248_i32 dim 1 : vector<4x256xf32>, i32 -> vector<4x256xf32>
    %c0_121 = arith.constant 0 : index
    %c7_122 = arith.constant 7 : index
    %c0_123 = arith.constant 0 : index
    %c0_124 = arith.constant 0 : index
    %185 = vector.load %arg6[%c0_121, %c7_122, %c0_123, %c0_124] : memref<3x31x4x256xf32, #tpu.memory_space<vmem>>, vector<1x1x4x256xf32>
    %186 = vector.shape_cast %185 : vector<1x1x4x256xf32> to vector<4x256xf32>
    %187 = arith.mulf %184, %186 : vector<4x256xf32>
    %188 = arith.addf %179, %187 : vector<4x256xf32>
    %c1_125 = arith.constant 1 : index
    %c7_126 = arith.constant 7 : index
    %c0_127 = arith.constant 0 : index
    %c0_128 = arith.constant 0 : index
    %189 = vector.load %arg6[%c1_125, %c7_126, %c0_127, %c0_128] : memref<3x31x4x256xf32, #tpu.memory_space<vmem>>, vector<1x1x4x256xf32>
    %190 = vector.shape_cast %189 : vector<1x1x4x256xf32> to vector<4x256xf32>
    %191 = arith.mulf %184, %190 : vector<4x256xf32>
    %192 = arith.addf %183, %191 : vector<4x256xf32>
    %c249_i32 = arith.constant 249 : i32
    %193 = tpu.dynamic_rotate %3 by %c249_i32 dim 1 : vector<4x256xf32>, i32 -> vector<4x256xf32>
    %c0_129 = arith.constant 0 : index
    %c8_130 = arith.constant 8 : index
    %c0_131 = arith.constant 0 : index
    %c0_132 = arith.constant 0 : index
    %194 = vector.load %arg6[%c0_129, %c8_130, %c0_131, %c0_132] : memref<3x31x4x256xf32, #tpu.memory_space<vmem>>, vector<1x1x4x256xf32>
    %195 = vector.shape_cast %194 : vector<1x1x4x256xf32> to vector<4x256xf32>
    %196 = arith.mulf %193, %195 : vector<4x256xf32>
    %197 = arith.addf %188, %196 : vector<4x256xf32>
    %c1_133 = arith.constant 1 : index
    %c8_134 = arith.constant 8 : index
    %c0_135 = arith.constant 0 : index
    %c0_136 = arith.constant 0 : index
    %198 = vector.load %arg6[%c1_133, %c8_134, %c0_135, %c0_136] : memref<3x31x4x256xf32, #tpu.memory_space<vmem>>, vector<1x1x4x256xf32>
    %199 = vector.shape_cast %198 : vector<1x1x4x256xf32> to vector<4x256xf32>
    %200 = arith.mulf %193, %199 : vector<4x256xf32>
    %201 = arith.addf %192, %200 : vector<4x256xf32>
    %c250_i32 = arith.constant 250 : i32
    %202 = tpu.dynamic_rotate %3 by %c250_i32 dim 1 : vector<4x256xf32>, i32 -> vector<4x256xf32>
    %c0_137 = arith.constant 0 : index
    %c9 = arith.constant 9 : index
    %c0_138 = arith.constant 0 : index
    %c0_139 = arith.constant 0 : index
    %203 = vector.load %arg6[%c0_137, %c9, %c0_138, %c0_139] : memref<3x31x4x256xf32, #tpu.memory_space<vmem>>, vector<1x1x4x256xf32>
    %204 = vector.shape_cast %203 : vector<1x1x4x256xf32> to vector<4x256xf32>
    %205 = arith.mulf %202, %204 : vector<4x256xf32>
    %206 = arith.addf %197, %205 : vector<4x256xf32>
    %c1_140 = arith.constant 1 : index
    %c9_141 = arith.constant 9 : index
    %c0_142 = arith.constant 0 : index
    %c0_143 = arith.constant 0 : index
    %207 = vector.load %arg6[%c1_140, %c9_141, %c0_142, %c0_143] : memref<3x31x4x256xf32, #tpu.memory_space<vmem>>, vector<1x1x4x256xf32>
    %208 = vector.shape_cast %207 : vector<1x1x4x256xf32> to vector<4x256xf32>
    %209 = arith.mulf %202, %208 : vector<4x256xf32>
    %210 = arith.addf %201, %209 : vector<4x256xf32>
    %c251_i32 = arith.constant 251 : i32
    %211 = tpu.dynamic_rotate %3 by %c251_i32 dim 1 : vector<4x256xf32>, i32 -> vector<4x256xf32>
    %c0_144 = arith.constant 0 : index
    %c10 = arith.constant 10 : index
    %c0_145 = arith.constant 0 : index
    %c0_146 = arith.constant 0 : index
    %212 = vector.load %arg6[%c0_144, %c10, %c0_145, %c0_146] : memref<3x31x4x256xf32, #tpu.memory_space<vmem>>, vector<1x1x4x256xf32>
    %213 = vector.shape_cast %212 : vector<1x1x4x256xf32> to vector<4x256xf32>
    %214 = arith.mulf %211, %213 : vector<4x256xf32>
    %215 = arith.addf %206, %214 : vector<4x256xf32>
    %c1_147 = arith.constant 1 : index
    %c10_148 = arith.constant 10 : index
    %c0_149 = arith.constant 0 : index
    %c0_150 = arith.constant 0 : index
    %216 = vector.load %arg6[%c1_147, %c10_148, %c0_149, %c0_150] : memref<3x31x4x256xf32, #tpu.memory_space<vmem>>, vector<1x1x4x256xf32>
    %217 = vector.shape_cast %216 : vector<1x1x4x256xf32> to vector<4x256xf32>
    %218 = arith.mulf %211, %217 : vector<4x256xf32>
    %219 = arith.addf %210, %218 : vector<4x256xf32>
    %c252_i32 = arith.constant 252 : i32
    %220 = tpu.dynamic_rotate %3 by %c252_i32 dim 1 : vector<4x256xf32>, i32 -> vector<4x256xf32>
    %c0_151 = arith.constant 0 : index
    %c11 = arith.constant 11 : index
    %c0_152 = arith.constant 0 : index
    %c0_153 = arith.constant 0 : index
    %221 = vector.load %arg6[%c0_151, %c11, %c0_152, %c0_153] : memref<3x31x4x256xf32, #tpu.memory_space<vmem>>, vector<1x1x4x256xf32>
    %222 = vector.shape_cast %221 : vector<1x1x4x256xf32> to vector<4x256xf32>
    %223 = arith.mulf %220, %222 : vector<4x256xf32>
    %224 = arith.addf %215, %223 : vector<4x256xf32>
    %c1_154 = arith.constant 1 : index
    %c11_155 = arith.constant 11 : index
    %c0_156 = arith.constant 0 : index
    %c0_157 = arith.constant 0 : index
    %225 = vector.load %arg6[%c1_154, %c11_155, %c0_156, %c0_157] : memref<3x31x4x256xf32, #tpu.memory_space<vmem>>, vector<1x1x4x256xf32>
    %226 = vector.shape_cast %225 : vector<1x1x4x256xf32> to vector<4x256xf32>
    %227 = arith.mulf %220, %226 : vector<4x256xf32>
    %228 = arith.addf %219, %227 : vector<4x256xf32>
    %c253_i32 = arith.constant 253 : i32
    %229 = tpu.dynamic_rotate %3 by %c253_i32 dim 1 : vector<4x256xf32>, i32 -> vector<4x256xf32>
    %c0_158 = arith.constant 0 : index
    %c12 = arith.constant 12 : index
    %c0_159 = arith.constant 0 : index
    %c0_160 = arith.constant 0 : index
    %230 = vector.load %arg6[%c0_158, %c12, %c0_159, %c0_160] : memref<3x31x4x256xf32, #tpu.memory_space<vmem>>, vector<1x1x4x256xf32>
    %231 = vector.shape_cast %230 : vector<1x1x4x256xf32> to vector<4x256xf32>
    %232 = arith.mulf %229, %231 : vector<4x256xf32>
    %233 = arith.addf %224, %232 : vector<4x256xf32>
    %c1_161 = arith.constant 1 : index
    %c12_162 = arith.constant 12 : index
    %c0_163 = arith.constant 0 : index
    %c0_164 = arith.constant 0 : index
    %234 = vector.load %arg6[%c1_161, %c12_162, %c0_163, %c0_164] : memref<3x31x4x256xf32, #tpu.memory_space<vmem>>, vector<1x1x4x256xf32>
    %235 = vector.shape_cast %234 : vector<1x1x4x256xf32> to vector<4x256xf32>
    %236 = arith.mulf %229, %235 : vector<4x256xf32>
    %237 = arith.addf %228, %236 : vector<4x256xf32>
    %c254_i32 = arith.constant 254 : i32
    %238 = tpu.dynamic_rotate %3 by %c254_i32 dim 1 : vector<4x256xf32>, i32 -> vector<4x256xf32>
    %c0_165 = arith.constant 0 : index
    %c13 = arith.constant 13 : index
    %c0_166 = arith.constant 0 : index
    %c0_167 = arith.constant 0 : index
    %239 = vector.load %arg6[%c0_165, %c13, %c0_166, %c0_167] : memref<3x31x4x256xf32, #tpu.memory_space<vmem>>, vector<1x1x4x256xf32>
    %240 = vector.shape_cast %239 : vector<1x1x4x256xf32> to vector<4x256xf32>
    %241 = arith.mulf %238, %240 : vector<4x256xf32>
    %242 = arith.addf %233, %241 : vector<4x256xf32>
    %c1_168 = arith.constant 1 : index
    %c13_169 = arith.constant 13 : index
    %c0_170 = arith.constant 0 : index
    %c0_171 = arith.constant 0 : index
    %243 = vector.load %arg6[%c1_168, %c13_169, %c0_170, %c0_171] : memref<3x31x4x256xf32, #tpu.memory_space<vmem>>, vector<1x1x4x256xf32>
    %244 = vector.shape_cast %243 : vector<1x1x4x256xf32> to vector<4x256xf32>
    %245 = arith.mulf %238, %244 : vector<4x256xf32>
    %246 = arith.addf %237, %245 : vector<4x256xf32>
    %c255_i32_172 = arith.constant 255 : i32
    %247 = tpu.dynamic_rotate %3 by %c255_i32_172 dim 1 : vector<4x256xf32>, i32 -> vector<4x256xf32>
    %c0_173 = arith.constant 0 : index
    %c14 = arith.constant 14 : index
    %c0_174 = arith.constant 0 : index
    %c0_175 = arith.constant 0 : index
    %248 = vector.load %arg6[%c0_173, %c14, %c0_174, %c0_175] : memref<3x31x4x256xf32, #tpu.memory_space<vmem>>, vector<1x1x4x256xf32>
    %249 = vector.shape_cast %248 : vector<1x1x4x256xf32> to vector<4x256xf32>
    %250 = arith.mulf %247, %249 : vector<4x256xf32>
    %251 = arith.addf %242, %250 : vector<4x256xf32>
    %c1_176 = arith.constant 1 : index
    %c14_177 = arith.constant 14 : index
    %c0_178 = arith.constant 0 : index
    %c0_179 = arith.constant 0 : index
    %252 = vector.load %arg6[%c1_176, %c14_177, %c0_178, %c0_179] : memref<3x31x4x256xf32, #tpu.memory_space<vmem>>, vector<1x1x4x256xf32>
    %253 = vector.shape_cast %252 : vector<1x1x4x256xf32> to vector<4x256xf32>
    %254 = arith.mulf %247, %253 : vector<4x256xf32>
    %255 = arith.addf %246, %254 : vector<4x256xf32>
    %c0_180 = arith.constant 0 : index
    %c15 = arith.constant 15 : index
    %c0_181 = arith.constant 0 : index
    %c0_182 = arith.constant 0 : index
    %256 = vector.load %arg6[%c0_180, %c15, %c0_181, %c0_182] : memref<3x31x4x256xf32, #tpu.memory_space<vmem>>, vector<1x1x4x256xf32>
    %257 = vector.shape_cast %256 : vector<1x1x4x256xf32> to vector<4x256xf32>
    %258 = arith.mulf %3, %257 : vector<4x256xf32>
    %259 = arith.addf %251, %258 : vector<4x256xf32>
    %c1_183 = arith.constant 1 : index
    %c15_184 = arith.constant 15 : index
    %c0_185 = arith.constant 0 : index
    %c0_186 = arith.constant 0 : index
    %260 = vector.load %arg6[%c1_183, %c15_184, %c0_185, %c0_186] : memref<3x31x4x256xf32, #tpu.memory_space<vmem>>, vector<1x1x4x256xf32>
    %261 = vector.shape_cast %260 : vector<1x1x4x256xf32> to vector<4x256xf32>
    %262 = arith.mulf %3, %261 : vector<4x256xf32>
    %263 = arith.addf %255, %262 : vector<4x256xf32>
    %c1_i32_187 = arith.constant 1 : i32
    %264 = tpu.dynamic_rotate %3 by %c1_i32_187 dim 1 : vector<4x256xf32>, i32 -> vector<4x256xf32>
    %c0_188 = arith.constant 0 : index
    %c16 = arith.constant 16 : index
    %c0_189 = arith.constant 0 : index
    %c0_190 = arith.constant 0 : index
    %265 = vector.load %arg6[%c0_188, %c16, %c0_189, %c0_190] : memref<3x31x4x256xf32, #tpu.memory_space<vmem>>, vector<1x1x4x256xf32>
    %266 = vector.shape_cast %265 : vector<1x1x4x256xf32> to vector<4x256xf32>
    %267 = arith.mulf %264, %266 : vector<4x256xf32>
    %268 = arith.addf %259, %267 : vector<4x256xf32>
    %c1_191 = arith.constant 1 : index
    %c16_192 = arith.constant 16 : index
    %c0_193 = arith.constant 0 : index
    %c0_194 = arith.constant 0 : index
    %269 = vector.load %arg6[%c1_191, %c16_192, %c0_193, %c0_194] : memref<3x31x4x256xf32, #tpu.memory_space<vmem>>, vector<1x1x4x256xf32>
    %270 = vector.shape_cast %269 : vector<1x1x4x256xf32> to vector<4x256xf32>
    %271 = arith.mulf %264, %270 : vector<4x256xf32>
    %272 = arith.addf %263, %271 : vector<4x256xf32>
    %c2_i32 = arith.constant 2 : i32
    %273 = tpu.dynamic_rotate %3 by %c2_i32 dim 1 : vector<4x256xf32>, i32 -> vector<4x256xf32>
    %c0_195 = arith.constant 0 : index
    %c17 = arith.constant 17 : index
    %c0_196 = arith.constant 0 : index
    %c0_197 = arith.constant 0 : index
    %274 = vector.load %arg6[%c0_195, %c17, %c0_196, %c0_197] : memref<3x31x4x256xf32, #tpu.memory_space<vmem>>, vector<1x1x4x256xf32>
    %275 = vector.shape_cast %274 : vector<1x1x4x256xf32> to vector<4x256xf32>
    %276 = arith.mulf %273, %275 : vector<4x256xf32>
    %277 = arith.addf %268, %276 : vector<4x256xf32>
    %c1_198 = arith.constant 1 : index
    %c17_199 = arith.constant 17 : index
    %c0_200 = arith.constant 0 : index
    %c0_201 = arith.constant 0 : index
    %278 = vector.load %arg6[%c1_198, %c17_199, %c0_200, %c0_201] : memref<3x31x4x256xf32, #tpu.memory_space<vmem>>, vector<1x1x4x256xf32>
    %279 = vector.shape_cast %278 : vector<1x1x4x256xf32> to vector<4x256xf32>
    %280 = arith.mulf %273, %279 : vector<4x256xf32>
    %281 = arith.addf %272, %280 : vector<4x256xf32>
    %c3_i32 = arith.constant 3 : i32
    %282 = tpu.dynamic_rotate %3 by %c3_i32 dim 1 : vector<4x256xf32>, i32 -> vector<4x256xf32>
    %c0_202 = arith.constant 0 : index
    %c18 = arith.constant 18 : index
    %c0_203 = arith.constant 0 : index
    %c0_204 = arith.constant 0 : index
    %283 = vector.load %arg6[%c0_202, %c18, %c0_203, %c0_204] : memref<3x31x4x256xf32, #tpu.memory_space<vmem>>, vector<1x1x4x256xf32>
    %284 = vector.shape_cast %283 : vector<1x1x4x256xf32> to vector<4x256xf32>
    %285 = arith.mulf %282, %284 : vector<4x256xf32>
    %286 = arith.addf %277, %285 : vector<4x256xf32>
    %c1_205 = arith.constant 1 : index
    %c18_206 = arith.constant 18 : index
    %c0_207 = arith.constant 0 : index
    %c0_208 = arith.constant 0 : index
    %287 = vector.load %arg6[%c1_205, %c18_206, %c0_207, %c0_208] : memref<3x31x4x256xf32, #tpu.memory_space<vmem>>, vector<1x1x4x256xf32>
    %288 = vector.shape_cast %287 : vector<1x1x4x256xf32> to vector<4x256xf32>
    %289 = arith.mulf %282, %288 : vector<4x256xf32>
    %290 = arith.addf %281, %289 : vector<4x256xf32>
    %c4_i32 = arith.constant 4 : i32
    %291 = tpu.dynamic_rotate %3 by %c4_i32 dim 1 : vector<4x256xf32>, i32 -> vector<4x256xf32>
    %c0_209 = arith.constant 0 : index
    %c19 = arith.constant 19 : index
    %c0_210 = arith.constant 0 : index
    %c0_211 = arith.constant 0 : index
    %292 = vector.load %arg6[%c0_209, %c19, %c0_210, %c0_211] : memref<3x31x4x256xf32, #tpu.memory_space<vmem>>, vector<1x1x4x256xf32>
    %293 = vector.shape_cast %292 : vector<1x1x4x256xf32> to vector<4x256xf32>
    %294 = arith.mulf %291, %293 : vector<4x256xf32>
    %295 = arith.addf %286, %294 : vector<4x256xf32>
    %c1_212 = arith.constant 1 : index
    %c19_213 = arith.constant 19 : index
    %c0_214 = arith.constant 0 : index
    %c0_215 = arith.constant 0 : index
    %296 = vector.load %arg6[%c1_212, %c19_213, %c0_214, %c0_215] : memref<3x31x4x256xf32, #tpu.memory_space<vmem>>, vector<1x1x4x256xf32>
    %297 = vector.shape_cast %296 : vector<1x1x4x256xf32> to vector<4x256xf32>
    %298 = arith.mulf %291, %297 : vector<4x256xf32>
    %299 = arith.addf %290, %298 : vector<4x256xf32>
    %c5_i32 = arith.constant 5 : i32
    %300 = tpu.dynamic_rotate %3 by %c5_i32 dim 1 : vector<4x256xf32>, i32 -> vector<4x256xf32>
    %c0_216 = arith.constant 0 : index
    %c20 = arith.constant 20 : index
    %c0_217 = arith.constant 0 : index
    %c0_218 = arith.constant 0 : index
    %301 = vector.load %arg6[%c0_216, %c20, %c0_217, %c0_218] : memref<3x31x4x256xf32, #tpu.memory_space<vmem>>, vector<1x1x4x256xf32>
    %302 = vector.shape_cast %301 : vector<1x1x4x256xf32> to vector<4x256xf32>
    %303 = arith.mulf %300, %302 : vector<4x256xf32>
    %304 = arith.addf %295, %303 : vector<4x256xf32>
    %c1_219 = arith.constant 1 : index
    %c20_220 = arith.constant 20 : index
    %c0_221 = arith.constant 0 : index
    %c0_222 = arith.constant 0 : index
    %305 = vector.load %arg6[%c1_219, %c20_220, %c0_221, %c0_222] : memref<3x31x4x256xf32, #tpu.memory_space<vmem>>, vector<1x1x4x256xf32>
    %306 = vector.shape_cast %305 : vector<1x1x4x256xf32> to vector<4x256xf32>
    %307 = arith.mulf %300, %306 : vector<4x256xf32>
    %308 = arith.addf %299, %307 : vector<4x256xf32>
    %c6_i32 = arith.constant 6 : i32
    %309 = tpu.dynamic_rotate %3 by %c6_i32 dim 1 : vector<4x256xf32>, i32 -> vector<4x256xf32>
    %c0_223 = arith.constant 0 : index
    %c21 = arith.constant 21 : index
    %c0_224 = arith.constant 0 : index
    %c0_225 = arith.constant 0 : index
    %310 = vector.load %arg6[%c0_223, %c21, %c0_224, %c0_225] : memref<3x31x4x256xf32, #tpu.memory_space<vmem>>, vector<1x1x4x256xf32>
    %311 = vector.shape_cast %310 : vector<1x1x4x256xf32> to vector<4x256xf32>
    %312 = arith.mulf %309, %311 : vector<4x256xf32>
    %313 = arith.addf %304, %312 : vector<4x256xf32>
    %c1_226 = arith.constant 1 : index
    %c21_227 = arith.constant 21 : index
    %c0_228 = arith.constant 0 : index
    %c0_229 = arith.constant 0 : index
    %314 = vector.load %arg6[%c1_226, %c21_227, %c0_228, %c0_229] : memref<3x31x4x256xf32, #tpu.memory_space<vmem>>, vector<1x1x4x256xf32>
    %315 = vector.shape_cast %314 : vector<1x1x4x256xf32> to vector<4x256xf32>
    %316 = arith.mulf %309, %315 : vector<4x256xf32>
    %317 = arith.addf %308, %316 : vector<4x256xf32>
    %c7_i32 = arith.constant 7 : i32
    %318 = tpu.dynamic_rotate %3 by %c7_i32 dim 1 : vector<4x256xf32>, i32 -> vector<4x256xf32>
    %c0_230 = arith.constant 0 : index
    %c22 = arith.constant 22 : index
    %c0_231 = arith.constant 0 : index
    %c0_232 = arith.constant 0 : index
    %319 = vector.load %arg6[%c0_230, %c22, %c0_231, %c0_232] : memref<3x31x4x256xf32, #tpu.memory_space<vmem>>, vector<1x1x4x256xf32>
    %320 = vector.shape_cast %319 : vector<1x1x4x256xf32> to vector<4x256xf32>
    %321 = arith.mulf %318, %320 : vector<4x256xf32>
    %322 = arith.addf %313, %321 : vector<4x256xf32>
    %c1_233 = arith.constant 1 : index
    %c22_234 = arith.constant 22 : index
    %c0_235 = arith.constant 0 : index
    %c0_236 = arith.constant 0 : index
    %323 = vector.load %arg6[%c1_233, %c22_234, %c0_235, %c0_236] : memref<3x31x4x256xf32, #tpu.memory_space<vmem>>, vector<1x1x4x256xf32>
    %324 = vector.shape_cast %323 : vector<1x1x4x256xf32> to vector<4x256xf32>
    %325 = arith.mulf %318, %324 : vector<4x256xf32>
    %326 = arith.addf %317, %325 : vector<4x256xf32>
    %c8_i32 = arith.constant 8 : i32
    %327 = tpu.dynamic_rotate %3 by %c8_i32 dim 1 : vector<4x256xf32>, i32 -> vector<4x256xf32>
    %c0_237 = arith.constant 0 : index
    %c23 = arith.constant 23 : index
    %c0_238 = arith.constant 0 : index
    %c0_239 = arith.constant 0 : index
    %328 = vector.load %arg6[%c0_237, %c23, %c0_238, %c0_239] : memref<3x31x4x256xf32, #tpu.memory_space<vmem>>, vector<1x1x4x256xf32>
    %329 = vector.shape_cast %328 : vector<1x1x4x256xf32> to vector<4x256xf32>
    %330 = arith.mulf %327, %329 : vector<4x256xf32>
    %331 = arith.addf %322, %330 : vector<4x256xf32>
    %c1_240 = arith.constant 1 : index
    %c23_241 = arith.constant 23 : index
    %c0_242 = arith.constant 0 : index
    %c0_243 = arith.constant 0 : index
    %332 = vector.load %arg6[%c1_240, %c23_241, %c0_242, %c0_243] : memref<3x31x4x256xf32, #tpu.memory_space<vmem>>, vector<1x1x4x256xf32>
    %333 = vector.shape_cast %332 : vector<1x1x4x256xf32> to vector<4x256xf32>
    %334 = arith.mulf %327, %333 : vector<4x256xf32>
    %335 = arith.addf %326, %334 : vector<4x256xf32>
    %c9_i32 = arith.constant 9 : i32
    %336 = tpu.dynamic_rotate %3 by %c9_i32 dim 1 : vector<4x256xf32>, i32 -> vector<4x256xf32>
    %c0_244 = arith.constant 0 : index
    %c24 = arith.constant 24 : index
    %c0_245 = arith.constant 0 : index
    %c0_246 = arith.constant 0 : index
    %337 = vector.load %arg6[%c0_244, %c24, %c0_245, %c0_246] : memref<3x31x4x256xf32, #tpu.memory_space<vmem>>, vector<1x1x4x256xf32>
    %338 = vector.shape_cast %337 : vector<1x1x4x256xf32> to vector<4x256xf32>
    %339 = arith.mulf %336, %338 : vector<4x256xf32>
    %340 = arith.addf %331, %339 : vector<4x256xf32>
    %c1_247 = arith.constant 1 : index
    %c24_248 = arith.constant 24 : index
    %c0_249 = arith.constant 0 : index
    %c0_250 = arith.constant 0 : index
    %341 = vector.load %arg6[%c1_247, %c24_248, %c0_249, %c0_250] : memref<3x31x4x256xf32, #tpu.memory_space<vmem>>, vector<1x1x4x256xf32>
    %342 = vector.shape_cast %341 : vector<1x1x4x256xf32> to vector<4x256xf32>
    %343 = arith.mulf %336, %342 : vector<4x256xf32>
    %344 = arith.addf %335, %343 : vector<4x256xf32>
    %c10_i32 = arith.constant 10 : i32
    %345 = tpu.dynamic_rotate %3 by %c10_i32 dim 1 : vector<4x256xf32>, i32 -> vector<4x256xf32>
    %c0_251 = arith.constant 0 : index
    %c25 = arith.constant 25 : index
    %c0_252 = arith.constant 0 : index
    %c0_253 = arith.constant 0 : index
    %346 = vector.load %arg6[%c0_251, %c25, %c0_252, %c0_253] : memref<3x31x4x256xf32, #tpu.memory_space<vmem>>, vector<1x1x4x256xf32>
    %347 = vector.shape_cast %346 : vector<1x1x4x256xf32> to vector<4x256xf32>
    %348 = arith.mulf %345, %347 : vector<4x256xf32>
    %349 = arith.addf %340, %348 : vector<4x256xf32>
    %c1_254 = arith.constant 1 : index
    %c25_255 = arith.constant 25 : index
    %c0_256 = arith.constant 0 : index
    %c0_257 = arith.constant 0 : index
    %350 = vector.load %arg6[%c1_254, %c25_255, %c0_256, %c0_257] : memref<3x31x4x256xf32, #tpu.memory_space<vmem>>, vector<1x1x4x256xf32>
    %351 = vector.shape_cast %350 : vector<1x1x4x256xf32> to vector<4x256xf32>
    %352 = arith.mulf %345, %351 : vector<4x256xf32>
    %353 = arith.addf %344, %352 : vector<4x256xf32>
    %c11_i32 = arith.constant 11 : i32
    %354 = tpu.dynamic_rotate %3 by %c11_i32 dim 1 : vector<4x256xf32>, i32 -> vector<4x256xf32>
    %c0_258 = arith.constant 0 : index
    %c26 = arith.constant 26 : index
    %c0_259 = arith.constant 0 : index
    %c0_260 = arith.constant 0 : index
    %355 = vector.load %arg6[%c0_258, %c26, %c0_259, %c0_260] : memref<3x31x4x256xf32, #tpu.memory_space<vmem>>, vector<1x1x4x256xf32>
    %356 = vector.shape_cast %355 : vector<1x1x4x256xf32> to vector<4x256xf32>
    %357 = arith.mulf %354, %356 : vector<4x256xf32>
    %358 = arith.addf %349, %357 : vector<4x256xf32>
    %c1_261 = arith.constant 1 : index
    %c26_262 = arith.constant 26 : index
    %c0_263 = arith.constant 0 : index
    %c0_264 = arith.constant 0 : index
    %359 = vector.load %arg6[%c1_261, %c26_262, %c0_263, %c0_264] : memref<3x31x4x256xf32, #tpu.memory_space<vmem>>, vector<1x1x4x256xf32>
    %360 = vector.shape_cast %359 : vector<1x1x4x256xf32> to vector<4x256xf32>
    %361 = arith.mulf %354, %360 : vector<4x256xf32>
    %362 = arith.addf %353, %361 : vector<4x256xf32>
    %c12_i32 = arith.constant 12 : i32
    %363 = tpu.dynamic_rotate %3 by %c12_i32 dim 1 : vector<4x256xf32>, i32 -> vector<4x256xf32>
    %c0_265 = arith.constant 0 : index
    %c27 = arith.constant 27 : index
    %c0_266 = arith.constant 0 : index
    %c0_267 = arith.constant 0 : index
    %364 = vector.load %arg6[%c0_265, %c27, %c0_266, %c0_267] : memref<3x31x4x256xf32, #tpu.memory_space<vmem>>, vector<1x1x4x256xf32>
    %365 = vector.shape_cast %364 : vector<1x1x4x256xf32> to vector<4x256xf32>
    %366 = arith.mulf %363, %365 : vector<4x256xf32>
    %367 = arith.addf %358, %366 : vector<4x256xf32>
    %c1_268 = arith.constant 1 : index
    %c27_269 = arith.constant 27 : index
    %c0_270 = arith.constant 0 : index
    %c0_271 = arith.constant 0 : index
    %368 = vector.load %arg6[%c1_268, %c27_269, %c0_270, %c0_271] : memref<3x31x4x256xf32, #tpu.memory_space<vmem>>, vector<1x1x4x256xf32>
    %369 = vector.shape_cast %368 : vector<1x1x4x256xf32> to vector<4x256xf32>
    %370 = arith.mulf %363, %369 : vector<4x256xf32>
    %371 = arith.addf %362, %370 : vector<4x256xf32>
    %c13_i32 = arith.constant 13 : i32
    %372 = tpu.dynamic_rotate %3 by %c13_i32 dim 1 : vector<4x256xf32>, i32 -> vector<4x256xf32>
    %c0_272 = arith.constant 0 : index
    %c28 = arith.constant 28 : index
    %c0_273 = arith.constant 0 : index
    %c0_274 = arith.constant 0 : index
    %373 = vector.load %arg6[%c0_272, %c28, %c0_273, %c0_274] : memref<3x31x4x256xf32, #tpu.memory_space<vmem>>, vector<1x1x4x256xf32>
    %374 = vector.shape_cast %373 : vector<1x1x4x256xf32> to vector<4x256xf32>
    %375 = arith.mulf %372, %374 : vector<4x256xf32>
    %376 = arith.addf %367, %375 : vector<4x256xf32>
    %c1_275 = arith.constant 1 : index
    %c28_276 = arith.constant 28 : index
    %c0_277 = arith.constant 0 : index
    %c0_278 = arith.constant 0 : index
    %377 = vector.load %arg6[%c1_275, %c28_276, %c0_277, %c0_278] : memref<3x31x4x256xf32, #tpu.memory_space<vmem>>, vector<1x1x4x256xf32>
    %378 = vector.shape_cast %377 : vector<1x1x4x256xf32> to vector<4x256xf32>
    %379 = arith.mulf %372, %378 : vector<4x256xf32>
    %380 = arith.addf %371, %379 : vector<4x256xf32>
    %c14_i32 = arith.constant 14 : i32
    %381 = tpu.dynamic_rotate %3 by %c14_i32 dim 1 : vector<4x256xf32>, i32 -> vector<4x256xf32>
    %c0_279 = arith.constant 0 : index
    %c29 = arith.constant 29 : index
    %c0_280 = arith.constant 0 : index
    %c0_281 = arith.constant 0 : index
    %382 = vector.load %arg6[%c0_279, %c29, %c0_280, %c0_281] : memref<3x31x4x256xf32, #tpu.memory_space<vmem>>, vector<1x1x4x256xf32>
    %383 = vector.shape_cast %382 : vector<1x1x4x256xf32> to vector<4x256xf32>
    %384 = arith.mulf %381, %383 : vector<4x256xf32>
    %385 = arith.addf %376, %384 : vector<4x256xf32>
    %c1_282 = arith.constant 1 : index
    %c29_283 = arith.constant 29 : index
    %c0_284 = arith.constant 0 : index
    %c0_285 = arith.constant 0 : index
    %386 = vector.load %arg6[%c1_282, %c29_283, %c0_284, %c0_285] : memref<3x31x4x256xf32, #tpu.memory_space<vmem>>, vector<1x1x4x256xf32>
    %387 = vector.shape_cast %386 : vector<1x1x4x256xf32> to vector<4x256xf32>
    %388 = arith.mulf %381, %387 : vector<4x256xf32>
    %389 = arith.addf %380, %388 : vector<4x256xf32>
    %c15_i32_286 = arith.constant 15 : i32
    %390 = tpu.dynamic_rotate %3 by %c15_i32_286 dim 1 : vector<4x256xf32>, i32 -> vector<4x256xf32>
    %c0_287 = arith.constant 0 : index
    %c30 = arith.constant 30 : index
    %c0_288 = arith.constant 0 : index
    %c0_289 = arith.constant 0 : index
    %391 = vector.load %arg6[%c0_287, %c30, %c0_288, %c0_289] : memref<3x31x4x256xf32, #tpu.memory_space<vmem>>, vector<1x1x4x256xf32>
    %392 = vector.shape_cast %391 : vector<1x1x4x256xf32> to vector<4x256xf32>
    %393 = arith.mulf %390, %392 : vector<4x256xf32>
    %394 = arith.addf %385, %393 : vector<4x256xf32>
    %c1_290 = arith.constant 1 : index
    %c30_291 = arith.constant 30 : index
    %c0_292 = arith.constant 0 : index
    %c0_293 = arith.constant 0 : index
    %395 = vector.load %arg6[%c1_290, %c30_291, %c0_292, %c0_293] : memref<3x31x4x256xf32, #tpu.memory_space<vmem>>, vector<1x1x4x256xf32>
    %396 = vector.shape_cast %395 : vector<1x1x4x256xf32> to vector<4x256xf32>
    %397 = arith.mulf %390, %396 : vector<4x256xf32>
    %398 = arith.addf %389, %397 : vector<4x256xf32>
    %399 = arith.addf %112, %394 : vector<4x256xf32>
    %400 = arith.negf %399 : vector<4x256xf32>
    %401 = math.exp %400 : vector<4x256xf32>
    %cst_294 = arith.constant 1.000000e+00 : f32
    %402 = vector.broadcast %cst_294 : f32 to vector<4x256xf32>
    %403 = arith.addf %402, %401 : vector<4x256xf32>
    %404 = arith.divf %402, %403 : vector<4x256xf32>
    %405 = arith.addf %116, %398 : vector<4x256xf32>
    %cst_295 = arith.constant 1.000000e+00 : f32
    %406 = vector.broadcast %cst_295 : f32 to vector<4x256xf32>
    %407 = arith.addf %405, %406 : vector<4x256xf32>
    %408 = arith.negf %407 : vector<4x256xf32>
    %409 = math.exp %408 : vector<4x256xf32>
    %cst_296 = arith.constant 1.000000e+00 : f32
    %410 = vector.broadcast %cst_296 : f32 to vector<4x256xf32>
    %411 = arith.addf %410, %409 : vector<4x256xf32>
    %412 = arith.divf %410, %411 : vector<4x256xf32>
    %413 = math.tanh %114 : vector<4x256xf32>
    %414 = arith.mulf %412, %3 : vector<4x256xf32>
    %415 = arith.mulf %404, %413 : vector<4x256xf32>
    %416 = arith.addf %414, %415 : vector<4x256xf32>
    %cst_297 = arith.constant 0.000000e+00 : f32
    %417 = vector.broadcast %cst_297 : f32 to vector<4x256xf32>
    %c241_i32_298 = arith.constant 241 : i32
    %418 = tpu.dynamic_rotate %416 by %c241_i32_298 dim 1 : vector<4x256xf32>, i32 -> vector<4x256xf32>
    %c2_299 = arith.constant 2 : index
    %c0_300 = arith.constant 0 : index
    %c0_301 = arith.constant 0 : index
    %c0_302 = arith.constant 0 : index
    %419 = vector.load %arg6[%c2_299, %c0_300, %c0_301, %c0_302] : memref<3x31x4x256xf32, #tpu.memory_space<vmem>>, vector<1x1x4x256xf32>
    %420 = vector.shape_cast %419 : vector<1x1x4x256xf32> to vector<4x256xf32>
    %421 = arith.mulf %418, %420 : vector<4x256xf32>
    %422 = arith.addf %417, %421 : vector<4x256xf32>
    %c242_i32_303 = arith.constant 242 : i32
    %423 = tpu.dynamic_rotate %416 by %c242_i32_303 dim 1 : vector<4x256xf32>, i32 -> vector<4x256xf32>
    %c2_304 = arith.constant 2 : index
    %c1_305 = arith.constant 1 : index
    %c0_306 = arith.constant 0 : index
    %c0_307 = arith.constant 0 : index
    %424 = vector.load %arg6[%c2_304, %c1_305, %c0_306, %c0_307] : memref<3x31x4x256xf32, #tpu.memory_space<vmem>>, vector<1x1x4x256xf32>
    %425 = vector.shape_cast %424 : vector<1x1x4x256xf32> to vector<4x256xf32>
    %426 = arith.mulf %423, %425 : vector<4x256xf32>
    %427 = arith.addf %422, %426 : vector<4x256xf32>
    %c243_i32_308 = arith.constant 243 : i32
    %428 = tpu.dynamic_rotate %416 by %c243_i32_308 dim 1 : vector<4x256xf32>, i32 -> vector<4x256xf32>
    %c2_309 = arith.constant 2 : index
    %c2_310 = arith.constant 2 : index
    %c0_311 = arith.constant 0 : index
    %c0_312 = arith.constant 0 : index
    %429 = vector.load %arg6[%c2_309, %c2_310, %c0_311, %c0_312] : memref<3x31x4x256xf32, #tpu.memory_space<vmem>>, vector<1x1x4x256xf32>
    %430 = vector.shape_cast %429 : vector<1x1x4x256xf32> to vector<4x256xf32>
    %431 = arith.mulf %428, %430 : vector<4x256xf32>
    %432 = arith.addf %427, %431 : vector<4x256xf32>
    %c244_i32_313 = arith.constant 244 : i32
    %433 = tpu.dynamic_rotate %416 by %c244_i32_313 dim 1 : vector<4x256xf32>, i32 -> vector<4x256xf32>
    %c2_314 = arith.constant 2 : index
    %c3_315 = arith.constant 3 : index
    %c0_316 = arith.constant 0 : index
    %c0_317 = arith.constant 0 : index
    %434 = vector.load %arg6[%c2_314, %c3_315, %c0_316, %c0_317] : memref<3x31x4x256xf32, #tpu.memory_space<vmem>>, vector<1x1x4x256xf32>
    %435 = vector.shape_cast %434 : vector<1x1x4x256xf32> to vector<4x256xf32>
    %436 = arith.mulf %433, %435 : vector<4x256xf32>
    %437 = arith.addf %432, %436 : vector<4x256xf32>
    %c245_i32_318 = arith.constant 245 : i32
    %438 = tpu.dynamic_rotate %416 by %c245_i32_318 dim 1 : vector<4x256xf32>, i32 -> vector<4x256xf32>
    %c2_319 = arith.constant 2 : index
    %c4_320 = arith.constant 4 : index
    %c0_321 = arith.constant 0 : index
    %c0_322 = arith.constant 0 : index
    %439 = vector.load %arg6[%c2_319, %c4_320, %c0_321, %c0_322] : memref<3x31x4x256xf32, #tpu.memory_space<vmem>>, vector<1x1x4x256xf32>
    %440 = vector.shape_cast %439 : vector<1x1x4x256xf32> to vector<4x256xf32>
    %441 = arith.mulf %438, %440 : vector<4x256xf32>
    %442 = arith.addf %437, %441 : vector<4x256xf32>
    %c246_i32_323 = arith.constant 246 : i32
    %443 = tpu.dynamic_rotate %416 by %c246_i32_323 dim 1 : vector<4x256xf32>, i32 -> vector<4x256xf32>
    %c2_324 = arith.constant 2 : index
    %c5_325 = arith.constant 5 : index
    %c0_326 = arith.constant 0 : index
    %c0_327 = arith.constant 0 : index
    %444 = vector.load %arg6[%c2_324, %c5_325, %c0_326, %c0_327] : memref<3x31x4x256xf32, #tpu.memory_space<vmem>>, vector<1x1x4x256xf32>
    %445 = vector.shape_cast %444 : vector<1x1x4x256xf32> to vector<4x256xf32>
    %446 = arith.mulf %443, %445 : vector<4x256xf32>
    %447 = arith.addf %442, %446 : vector<4x256xf32>
    %c247_i32_328 = arith.constant 247 : i32
    %448 = tpu.dynamic_rotate %416 by %c247_i32_328 dim 1 : vector<4x256xf32>, i32 -> vector<4x256xf32>
    %c2_329 = arith.constant 2 : index
    %c6_330 = arith.constant 6 : index
    %c0_331 = arith.constant 0 : index
    %c0_332 = arith.constant 0 : index
    %449 = vector.load %arg6[%c2_329, %c6_330, %c0_331, %c0_332] : memref<3x31x4x256xf32, #tpu.memory_space<vmem>>, vector<1x1x4x256xf32>
    %450 = vector.shape_cast %449 : vector<1x1x4x256xf32> to vector<4x256xf32>
    %451 = arith.mulf %448, %450 : vector<4x256xf32>
    %452 = arith.addf %447, %451 : vector<4x256xf32>
    %c248_i32_333 = arith.constant 248 : i32
    %453 = tpu.dynamic_rotate %416 by %c248_i32_333 dim 1 : vector<4x256xf32>, i32 -> vector<4x256xf32>
    %c2_334 = arith.constant 2 : index
    %c7_335 = arith.constant 7 : index
    %c0_336 = arith.constant 0 : index
    %c0_337 = arith.constant 0 : index
    %454 = vector.load %arg6[%c2_334, %c7_335, %c0_336, %c0_337] : memref<3x31x4x256xf32, #tpu.memory_space<vmem>>, vector<1x1x4x256xf32>
    %455 = vector.shape_cast %454 : vector<1x1x4x256xf32> to vector<4x256xf32>
    %456 = arith.mulf %453, %455 : vector<4x256xf32>
    %457 = arith.addf %452, %456 : vector<4x256xf32>
    %c249_i32_338 = arith.constant 249 : i32
    %458 = tpu.dynamic_rotate %416 by %c249_i32_338 dim 1 : vector<4x256xf32>, i32 -> vector<4x256xf32>
    %c2_339 = arith.constant 2 : index
    %c8_340 = arith.constant 8 : index
    %c0_341 = arith.constant 0 : index
    %c0_342 = arith.constant 0 : index
    %459 = vector.load %arg6[%c2_339, %c8_340, %c0_341, %c0_342] : memref<3x31x4x256xf32, #tpu.memory_space<vmem>>, vector<1x1x4x256xf32>
    %460 = vector.shape_cast %459 : vector<1x1x4x256xf32> to vector<4x256xf32>
    %461 = arith.mulf %458, %460 : vector<4x256xf32>
    %462 = arith.addf %457, %461 : vector<4x256xf32>
    %c250_i32_343 = arith.constant 250 : i32
    %463 = tpu.dynamic_rotate %416 by %c250_i32_343 dim 1 : vector<4x256xf32>, i32 -> vector<4x256xf32>
    %c2_344 = arith.constant 2 : index
    %c9_345 = arith.constant 9 : index
    %c0_346 = arith.constant 0 : index
    %c0_347 = arith.constant 0 : index
    %464 = vector.load %arg6[%c2_344, %c9_345, %c0_346, %c0_347] : memref<3x31x4x256xf32, #tpu.memory_space<vmem>>, vector<1x1x4x256xf32>
    %465 = vector.shape_cast %464 : vector<1x1x4x256xf32> to vector<4x256xf32>
    %466 = arith.mulf %463, %465 : vector<4x256xf32>
    %467 = arith.addf %462, %466 : vector<4x256xf32>
    %c251_i32_348 = arith.constant 251 : i32
    %468 = tpu.dynamic_rotate %416 by %c251_i32_348 dim 1 : vector<4x256xf32>, i32 -> vector<4x256xf32>
    %c2_349 = arith.constant 2 : index
    %c10_350 = arith.constant 10 : index
    %c0_351 = arith.constant 0 : index
    %c0_352 = arith.constant 0 : index
    %469 = vector.load %arg6[%c2_349, %c10_350, %c0_351, %c0_352] : memref<3x31x4x256xf32, #tpu.memory_space<vmem>>, vector<1x1x4x256xf32>
    %470 = vector.shape_cast %469 : vector<1x1x4x256xf32> to vector<4x256xf32>
    %471 = arith.mulf %468, %470 : vector<4x256xf32>
    %472 = arith.addf %467, %471 : vector<4x256xf32>
    %c252_i32_353 = arith.constant 252 : i32
    %473 = tpu.dynamic_rotate %416 by %c252_i32_353 dim 1 : vector<4x256xf32>, i32 -> vector<4x256xf32>
    %c2_354 = arith.constant 2 : index
    %c11_355 = arith.constant 11 : index
    %c0_356 = arith.constant 0 : index
    %c0_357 = arith.constant 0 : index
    %474 = vector.load %arg6[%c2_354, %c11_355, %c0_356, %c0_357] : memref<3x31x4x256xf32, #tpu.memory_space<vmem>>, vector<1x1x4x256xf32>
    %475 = vector.shape_cast %474 : vector<1x1x4x256xf32> to vector<4x256xf32>
    %476 = arith.mulf %473, %475 : vector<4x256xf32>
    %477 = arith.addf %472, %476 : vector<4x256xf32>
    %c253_i32_358 = arith.constant 253 : i32
    %478 = tpu.dynamic_rotate %416 by %c253_i32_358 dim 1 : vector<4x256xf32>, i32 -> vector<4x256xf32>
    %c2_359 = arith.constant 2 : index
    %c12_360 = arith.constant 12 : index
    %c0_361 = arith.constant 0 : index
    %c0_362 = arith.constant 0 : index
    %479 = vector.load %arg6[%c2_359, %c12_360, %c0_361, %c0_362] : memref<3x31x4x256xf32, #tpu.memory_space<vmem>>, vector<1x1x4x256xf32>
    %480 = vector.shape_cast %479 : vector<1x1x4x256xf32> to vector<4x256xf32>
    %481 = arith.mulf %478, %480 : vector<4x256xf32>
    %482 = arith.addf %477, %481 : vector<4x256xf32>
    %c254_i32_363 = arith.constant 254 : i32
    %483 = tpu.dynamic_rotate %416 by %c254_i32_363 dim 1 : vector<4x256xf32>, i32 -> vector<4x256xf32>
    %c2_364 = arith.constant 2 : index
    %c13_365 = arith.constant 13 : index
    %c0_366 = arith.constant 0 : index
    %c0_367 = arith.constant 0 : index
    %484 = vector.load %arg6[%c2_364, %c13_365, %c0_366, %c0_367] : memref<3x31x4x256xf32, #tpu.memory_space<vmem>>, vector<1x1x4x256xf32>
    %485 = vector.shape_cast %484 : vector<1x1x4x256xf32> to vector<4x256xf32>
    %486 = arith.mulf %483, %485 : vector<4x256xf32>
    %487 = arith.addf %482, %486 : vector<4x256xf32>
    %c255_i32_368 = arith.constant 255 : i32
    %488 = tpu.dynamic_rotate %416 by %c255_i32_368 dim 1 : vector<4x256xf32>, i32 -> vector<4x256xf32>
    %c2_369 = arith.constant 2 : index
    %c14_370 = arith.constant 14 : index
    %c0_371 = arith.constant 0 : index
    %c0_372 = arith.constant 0 : index
    %489 = vector.load %arg6[%c2_369, %c14_370, %c0_371, %c0_372] : memref<3x31x4x256xf32, #tpu.memory_space<vmem>>, vector<1x1x4x256xf32>
    %490 = vector.shape_cast %489 : vector<1x1x4x256xf32> to vector<4x256xf32>
    %491 = arith.mulf %488, %490 : vector<4x256xf32>
    %492 = arith.addf %487, %491 : vector<4x256xf32>
    %c2_373 = arith.constant 2 : index
    %c15_374 = arith.constant 15 : index
    %c0_375 = arith.constant 0 : index
    %c0_376 = arith.constant 0 : index
    %493 = vector.load %arg6[%c2_373, %c15_374, %c0_375, %c0_376] : memref<3x31x4x256xf32, #tpu.memory_space<vmem>>, vector<1x1x4x256xf32>
    %494 = vector.shape_cast %493 : vector<1x1x4x256xf32> to vector<4x256xf32>
    %495 = arith.mulf %416, %494 : vector<4x256xf32>
    %496 = arith.addf %492, %495 : vector<4x256xf32>
    %c1_i32_377 = arith.constant 1 : i32
    %497 = tpu.dynamic_rotate %416 by %c1_i32_377 dim 1 : vector<4x256xf32>, i32 -> vector<4x256xf32>
    %c2_378 = arith.constant 2 : index
    %c16_379 = arith.constant 16 : index
    %c0_380 = arith.constant 0 : index
    %c0_381 = arith.constant 0 : index
    %498 = vector.load %arg6[%c2_378, %c16_379, %c0_380, %c0_381] : memref<3x31x4x256xf32, #tpu.memory_space<vmem>>, vector<1x1x4x256xf32>
    %499 = vector.shape_cast %498 : vector<1x1x4x256xf32> to vector<4x256xf32>
    %500 = arith.mulf %497, %499 : vector<4x256xf32>
    %501 = arith.addf %496, %500 : vector<4x256xf32>
    %c2_i32_382 = arith.constant 2 : i32
    %502 = tpu.dynamic_rotate %416 by %c2_i32_382 dim 1 : vector<4x256xf32>, i32 -> vector<4x256xf32>
    %c2_383 = arith.constant 2 : index
    %c17_384 = arith.constant 17 : index
    %c0_385 = arith.constant 0 : index
    %c0_386 = arith.constant 0 : index
    %503 = vector.load %arg6[%c2_383, %c17_384, %c0_385, %c0_386] : memref<3x31x4x256xf32, #tpu.memory_space<vmem>>, vector<1x1x4x256xf32>
    %504 = vector.shape_cast %503 : vector<1x1x4x256xf32> to vector<4x256xf32>
    %505 = arith.mulf %502, %504 : vector<4x256xf32>
    %506 = arith.addf %501, %505 : vector<4x256xf32>
    %c3_i32_387 = arith.constant 3 : i32
    %507 = tpu.dynamic_rotate %416 by %c3_i32_387 dim 1 : vector<4x256xf32>, i32 -> vector<4x256xf32>
    %c2_388 = arith.constant 2 : index
    %c18_389 = arith.constant 18 : index
    %c0_390 = arith.constant 0 : index
    %c0_391 = arith.constant 0 : index
    %508 = vector.load %arg6[%c2_388, %c18_389, %c0_390, %c0_391] : memref<3x31x4x256xf32, #tpu.memory_space<vmem>>, vector<1x1x4x256xf32>
    %509 = vector.shape_cast %508 : vector<1x1x4x256xf32> to vector<4x256xf32>
    %510 = arith.mulf %507, %509 : vector<4x256xf32>
    %511 = arith.addf %506, %510 : vector<4x256xf32>
    %c4_i32_392 = arith.constant 4 : i32
    %512 = tpu.dynamic_rotate %416 by %c4_i32_392 dim 1 : vector<4x256xf32>, i32 -> vector<4x256xf32>
    %c2_393 = arith.constant 2 : index
    %c19_394 = arith.constant 19 : index
    %c0_395 = arith.constant 0 : index
    %c0_396 = arith.constant 0 : index
    %513 = vector.load %arg6[%c2_393, %c19_394, %c0_395, %c0_396] : memref<3x31x4x256xf32, #tpu.memory_space<vmem>>, vector<1x1x4x256xf32>
    %514 = vector.shape_cast %513 : vector<1x1x4x256xf32> to vector<4x256xf32>
    %515 = arith.mulf %512, %514 : vector<4x256xf32>
    %516 = arith.addf %511, %515 : vector<4x256xf32>
    %c5_i32_397 = arith.constant 5 : i32
    %517 = tpu.dynamic_rotate %416 by %c5_i32_397 dim 1 : vector<4x256xf32>, i32 -> vector<4x256xf32>
    %c2_398 = arith.constant 2 : index
    %c20_399 = arith.constant 20 : index
    %c0_400 = arith.constant 0 : index
    %c0_401 = arith.constant 0 : index
    %518 = vector.load %arg6[%c2_398, %c20_399, %c0_400, %c0_401] : memref<3x31x4x256xf32, #tpu.memory_space<vmem>>, vector<1x1x4x256xf32>
    %519 = vector.shape_cast %518 : vector<1x1x4x256xf32> to vector<4x256xf32>
    %520 = arith.mulf %517, %519 : vector<4x256xf32>
    %521 = arith.addf %516, %520 : vector<4x256xf32>
    %c6_i32_402 = arith.constant 6 : i32
    %522 = tpu.dynamic_rotate %416 by %c6_i32_402 dim 1 : vector<4x256xf32>, i32 -> vector<4x256xf32>
    %c2_403 = arith.constant 2 : index
    %c21_404 = arith.constant 21 : index
    %c0_405 = arith.constant 0 : index
    %c0_406 = arith.constant 0 : index
    %523 = vector.load %arg6[%c2_403, %c21_404, %c0_405, %c0_406] : memref<3x31x4x256xf32, #tpu.memory_space<vmem>>, vector<1x1x4x256xf32>
    %524 = vector.shape_cast %523 : vector<1x1x4x256xf32> to vector<4x256xf32>
    %525 = arith.mulf %522, %524 : vector<4x256xf32>
    %526 = arith.addf %521, %525 : vector<4x256xf32>
    %c7_i32_407 = arith.constant 7 : i32
    %527 = tpu.dynamic_rotate %416 by %c7_i32_407 dim 1 : vector<4x256xf32>, i32 -> vector<4x256xf32>
    %c2_408 = arith.constant 2 : index
    %c22_409 = arith.constant 22 : index
    %c0_410 = arith.constant 0 : index
    %c0_411 = arith.constant 0 : index
    %528 = vector.load %arg6[%c2_408, %c22_409, %c0_410, %c0_411] : memref<3x31x4x256xf32, #tpu.memory_space<vmem>>, vector<1x1x4x256xf32>
    %529 = vector.shape_cast %528 : vector<1x1x4x256xf32> to vector<4x256xf32>
    %530 = arith.mulf %527, %529 : vector<4x256xf32>
    %531 = arith.addf %526, %530 : vector<4x256xf32>
    %c8_i32_412 = arith.constant 8 : i32
    %532 = tpu.dynamic_rotate %416 by %c8_i32_412 dim 1 : vector<4x256xf32>, i32 -> vector<4x256xf32>
    %c2_413 = arith.constant 2 : index
    %c23_414 = arith.constant 23 : index
    %c0_415 = arith.constant 0 : index
    %c0_416 = arith.constant 0 : index
    %533 = vector.load %arg6[%c2_413, %c23_414, %c0_415, %c0_416] : memref<3x31x4x256xf32, #tpu.memory_space<vmem>>, vector<1x1x4x256xf32>
    %534 = vector.shape_cast %533 : vector<1x1x4x256xf32> to vector<4x256xf32>
    %535 = arith.mulf %532, %534 : vector<4x256xf32>
    %536 = arith.addf %531, %535 : vector<4x256xf32>
    %c9_i32_417 = arith.constant 9 : i32
    %537 = tpu.dynamic_rotate %416 by %c9_i32_417 dim 1 : vector<4x256xf32>, i32 -> vector<4x256xf32>
    %c2_418 = arith.constant 2 : index
    %c24_419 = arith.constant 24 : index
    %c0_420 = arith.constant 0 : index
    %c0_421 = arith.constant 0 : index
    %538 = vector.load %arg6[%c2_418, %c24_419, %c0_420, %c0_421] : memref<3x31x4x256xf32, #tpu.memory_space<vmem>>, vector<1x1x4x256xf32>
    %539 = vector.shape_cast %538 : vector<1x1x4x256xf32> to vector<4x256xf32>
    %540 = arith.mulf %537, %539 : vector<4x256xf32>
    %541 = arith.addf %536, %540 : vector<4x256xf32>
    %c10_i32_422 = arith.constant 10 : i32
    %542 = tpu.dynamic_rotate %416 by %c10_i32_422 dim 1 : vector<4x256xf32>, i32 -> vector<4x256xf32>
    %c2_423 = arith.constant 2 : index
    %c25_424 = arith.constant 25 : index
    %c0_425 = arith.constant 0 : index
    %c0_426 = arith.constant 0 : index
    %543 = vector.load %arg6[%c2_423, %c25_424, %c0_425, %c0_426] : memref<3x31x4x256xf32, #tpu.memory_space<vmem>>, vector<1x1x4x256xf32>
    %544 = vector.shape_cast %543 : vector<1x1x4x256xf32> to vector<4x256xf32>
    %545 = arith.mulf %542, %544 : vector<4x256xf32>
    %546 = arith.addf %541, %545 : vector<4x256xf32>
    %c11_i32_427 = arith.constant 11 : i32
    %547 = tpu.dynamic_rotate %416 by %c11_i32_427 dim 1 : vector<4x256xf32>, i32 -> vector<4x256xf32>
    %c2_428 = arith.constant 2 : index
    %c26_429 = arith.constant 26 : index
    %c0_430 = arith.constant 0 : index
    %c0_431 = arith.constant 0 : index
    %548 = vector.load %arg6[%c2_428, %c26_429, %c0_430, %c0_431] : memref<3x31x4x256xf32, #tpu.memory_space<vmem>>, vector<1x1x4x256xf32>
    %549 = vector.shape_cast %548 : vector<1x1x4x256xf32> to vector<4x256xf32>
    %550 = arith.mulf %547, %549 : vector<4x256xf32>
    %551 = arith.addf %546, %550 : vector<4x256xf32>
    %c12_i32_432 = arith.constant 12 : i32
    %552 = tpu.dynamic_rotate %416 by %c12_i32_432 dim 1 : vector<4x256xf32>, i32 -> vector<4x256xf32>
    %c2_433 = arith.constant 2 : index
    %c27_434 = arith.constant 27 : index
    %c0_435 = arith.constant 0 : index
    %c0_436 = arith.constant 0 : index
    %553 = vector.load %arg6[%c2_433, %c27_434, %c0_435, %c0_436] : memref<3x31x4x256xf32, #tpu.memory_space<vmem>>, vector<1x1x4x256xf32>
    %554 = vector.shape_cast %553 : vector<1x1x4x256xf32> to vector<4x256xf32>
    %555 = arith.mulf %552, %554 : vector<4x256xf32>
    %556 = arith.addf %551, %555 : vector<4x256xf32>
    %c13_i32_437 = arith.constant 13 : i32
    %557 = tpu.dynamic_rotate %416 by %c13_i32_437 dim 1 : vector<4x256xf32>, i32 -> vector<4x256xf32>
    %c2_438 = arith.constant 2 : index
    %c28_439 = arith.constant 28 : index
    %c0_440 = arith.constant 0 : index
    %c0_441 = arith.constant 0 : index
    %558 = vector.load %arg6[%c2_438, %c28_439, %c0_440, %c0_441] : memref<3x31x4x256xf32, #tpu.memory_space<vmem>>, vector<1x1x4x256xf32>
    %559 = vector.shape_cast %558 : vector<1x1x4x256xf32> to vector<4x256xf32>
    %560 = arith.mulf %557, %559 : vector<4x256xf32>
    %561 = arith.addf %556, %560 : vector<4x256xf32>
    %c14_i32_442 = arith.constant 14 : i32
    %562 = tpu.dynamic_rotate %416 by %c14_i32_442 dim 1 : vector<4x256xf32>, i32 -> vector<4x256xf32>
    %c2_443 = arith.constant 2 : index
    %c29_444 = arith.constant 29 : index
    %c0_445 = arith.constant 0 : index
    %c0_446 = arith.constant 0 : index
    %563 = vector.load %arg6[%c2_443, %c29_444, %c0_445, %c0_446] : memref<3x31x4x256xf32, #tpu.memory_space<vmem>>, vector<1x1x4x256xf32>
    %564 = vector.shape_cast %563 : vector<1x1x4x256xf32> to vector<4x256xf32>
    %565 = arith.mulf %562, %564 : vector<4x256xf32>
    %566 = arith.addf %561, %565 : vector<4x256xf32>
    %c15_i32_447 = arith.constant 15 : i32
    %567 = tpu.dynamic_rotate %416 by %c15_i32_447 dim 1 : vector<4x256xf32>, i32 -> vector<4x256xf32>
    %c2_448 = arith.constant 2 : index
    %c30_449 = arith.constant 30 : index
    %c0_450 = arith.constant 0 : index
    %c0_451 = arith.constant 0 : index
    %568 = vector.load %arg6[%c2_448, %c30_449, %c0_450, %c0_451] : memref<3x31x4x256xf32, #tpu.memory_space<vmem>>, vector<1x1x4x256xf32>
    %569 = vector.shape_cast %568 : vector<1x1x4x256xf32> to vector<4x256xf32>
    %570 = arith.mulf %567, %569 : vector<4x256xf32>
    %571 = arith.addf %566, %570 : vector<4x256xf32>
    %572 = arith.addf %118, %571 : vector<4x256xf32>
    %573 = arith.negf %572 : vector<4x256xf32>
    %574 = math.exp %573 : vector<4x256xf32>
    %cst_452 = arith.constant 1.000000e+00 : f32
    %575 = vector.broadcast %cst_452 : f32 to vector<4x256xf32>
    %576 = arith.addf %575, %574 : vector<4x256xf32>
    %577 = arith.divf %575, %576 : vector<4x256xf32>
    %578 = math.tanh %416 : vector<4x256xf32>
    %579 = arith.mulf %577, %578 : vector<4x256xf32>
    %c0_453 = arith.constant 0 : index
    %c0_454 = arith.constant 0 : index
    %c0_455 = arith.constant 0 : index
    %580 = vector.load %arg7[%c0_453, %c0_454, %c0_455] : memref<1x4x256xf32, #tpu.memory_space<vmem>>, vector<1x4x256xf32>
    %581 = vector.shape_cast %580 : vector<1x4x256xf32> to vector<4x256xf32>
    %582 = vector.shape_cast %579 : vector<4x256xf32> to vector<1x4x256xf32>
    tpu.vector_store %arg7[%c0_453, %c0_454, %c0_455], %582 {strides = array<i32>} : memref<1x4x256xf32, #tpu.memory_space<vmem>>, vector<1x4x256xf32>,
    %c0_456 = arith.constant 0 : index
    %c0_457 = arith.constant 0 : index
    %c0_458 = arith.constant 0 : index
    %583 = vector.load %arg8[%c0_456, %c0_457, %c0_458] : memref<1x4x256xf32, #tpu.memory_space<vmem>>, vector<1x4x256xf32>
    %584 = vector.shape_cast %583 : vector<1x4x256xf32> to vector<4x256xf32>
    %585 = vector.shape_cast %416 : vector<4x256xf32> to vector<1x4x256xf32>
    tpu.vector_store %arg8[%c0_456, %c0_457, %c0_458], %585 {strides = array<i32>} : memref<1x4x256xf32, #tpu.memory_space<vmem>>, vector<1x4x256xf32>,
    return
  }
  func.func @transform_0(%arg0: i32) -> (i32, i32, i32) {
    %c0_i32 = arith.constant 0 : i32
    %c0_i32_0 = arith.constant 0 : i32
    %c0_i32_1 = arith.constant 0 : i32
    return %arg0, %c0_i32, %c0_i32_0 : i32, i32, i32
  }
  func.func @transform_1(%arg0: i32) -> (i32, i32, i32) {
    %c0_i32 = arith.constant 0 : i32
    %c0_i32_0 = arith.constant 0 : i32
    %c0_i32_1 = arith.constant 0 : i32
    return %arg0, %c0_i32, %c0_i32_0 : i32, i32, i32
  }
  func.func @transform_2(%arg0: i32) -> (i32, i32, i32) {
    %c0_i32 = arith.constant 0 : i32
    %c0_i32_0 = arith.constant 0 : i32
    %c0_i32_1 = arith.constant 0 : i32
    %c0_i32_2 = arith.constant 0 : i32
    return %c0_i32, %c0_i32_0, %c0_i32_1 : i32, i32, i32
  }
  func.func @transform_3(%arg0: i32) -> (i32, i32, i32) {
    %c0_i32 = arith.constant 0 : i32
    %c0_i32_0 = arith.constant 0 : i32
    %c0_i32_1 = arith.constant 0 : i32
    %c0_i32_2 = arith.constant 0 : i32
    return %c0_i32, %c0_i32_0, %c0_i32_1 : i32, i32, i32
  }
  func.func @transform_4(%arg0: i32) -> (i32, i32) {
    %c0_i32 = arith.constant 0 : i32
    %c0_i32_0 = arith.constant 0 : i32
    %c0_i32_1 = arith.constant 0 : i32
    return %c0_i32, %c0_i32_0 : i32, i32
  }
  func.func @transform_5(%arg0: i32) -> (i32, i32, i32, i32) {
    %c0_i32 = arith.constant 0 : i32
    %c0_i32_0 = arith.constant 0 : i32
    %c0_i32_1 = arith.constant 0 : i32
    %c0_i32_2 = arith.constant 0 : i32
    %c0_i32_3 = arith.constant 0 : i32
    return %c0_i32, %c0_i32_0, %c0_i32_1, %c0_i32_2 : i32, i32, i32, i32
  }
  func.func @transform_6(%arg0: i32) -> (i32, i32, i32) {
    %c0_i32 = arith.constant 0 : i32
    %c0_i32_0 = arith.constant 0 : i32
    %c0_i32_1 = arith.constant 0 : i32
    return %arg0, %c0_i32, %c0_i32_0 : i32, i32, i32
  }
  func.func @transform_7(%arg0: i32) -> (i32, i32, i32) {
    %c0_i32 = arith.constant 0 : i32
    %c0_i32_0 = arith.constant 0 : i32
    %c0_i32_1 = arith.constant 0 : i32
    return %arg0, %c0_i32, %c0_i32_0 : i32, i32, i32
  }
}

</mosaic_0001>

<llo_original>
// kernel: mims_forward.1
$region0: #{mims_forward.1}
  #allocation0 [shape = 'u32[]', space=smem, size = 0x4, offset = 0x4, fixed_abs, tag = 'smem constant byte address 0x4 - core index']
  #allocation1 [shape = 'u32[144,128]{1,0:T(1,128)}', space=vmem, size = 0x12000, scoped, tag = 'internal scratch']
  %s0 = inlined_call_operand.vmem [shape: f32[2,8,256], index: 0, kind: input, shape index: {}]
  %s1 = inlined_call_operand.vmem [shape: f32[2,4,256], index: 1, kind: input, shape index: {}]
  %s2 = inlined_call_operand.vmem [shape: bf16[9,32,8], index: 2, kind: input, shape index: {}]
  %s3 = inlined_call_operand.vmem [shape: f32[9,1,256], index: 3, kind: input, shape index: {}]
  %s4 = inlined_call_operand.vmem [shape: f32[16,1], index: 4, kind: input, shape index: {}]
  %s5 = inlined_call_operand.vmem [shape: f32[3,31,4,256], index: 5, kind: input, shape index: {}]
  %s6 = inlined_call_operand.vmem [shape: f32[2,4,256], index: 6, kind: output, shape index: {0}]
  %s7 = inlined_call_operand.vmem [shape: f32[2,4,256], index: 7, kind: output, shape index: {1}]
  %8 = xla_tuple %s6, %s7
  %s9 = sld [smem:[#allocation0]]
  $region65: #{mims_forward.1} parent=0
    _
  %s11 = ssub.s32 1, %s9
  %s12 = scalar_select 0, %s11, %s9
  loop: start=0, step=1, limit=4
  $region2: #{mims_forward.1} parent=0 // loop_pre_header
    _
  $region3: #{mims_forward.1} parent=0 // loop_header
    %s14 = sphi 0, %s18
    %p15 = scmp.ge.s32.totalorder %s14, 4
    %s24 = sphi 0, %s26
    %s27 = sphi 0, %s24
    %s28 = sphi 0, %s27
    %s44 = sphi 0, %s28
    %s50 = sphi 0, %s52
    %s53 = sphi 0, %s50
    %s54 = sphi 0, %s53
    %s70 = sphi 0, %s54
    %s74 = sphi 0, %s74
    %s76 = sphi 0, %s74
    %s77 = sphi 0, %s76
    %s91 = sphi 0, %s77
    %s95 = sphi 0, %s95
    %s97 = sphi 0, %s95
    %s98 = sphi 0, %s97
    %s112 = sphi 0, %s98
    %s116 = sphi 0, %s116
    %s118 = sphi 0, %s116
    %s119 = sphi 0, %s118
    %s133 = sphi 0, %s119
    %s137 = sphi 0, %s137
    %s139 = sphi 0, %s137
    %s140 = sphi 0, %s139
    %s154 = sphi 0, %s140
    %s160 = sphi 0, %s162
    %s163 = sphi 0, %s160
    %s164 = sphi 0, %s163
    %s180 = sphi 0, %s164
    %s186 = sphi 0, %s188
    %s189 = sphi 0, %s186
    %s190 = sphi 0, %s189
    %s206 = sphi 0, %s190
  $region4: #{mims_forward.1} parent=0 // loop_header_branch
    %17 = sbr.rel (%p15) target = $region8
  $region5: #{mims_forward.1} parent=0 // loop_body
    %s19 = ssub.s32 %s14, 1
    %s20 = ssub.s32 %s14, 2
    %s21 = sadd.s32 %s14, 1
    %s22 = ssub.s32 %s14, %s21
    %p23 = scmp.eq.s32.totalorder %s22, 0
    %s25 = sadd.s32 %s24, 1
    %s26 = scalar_select %p23, %s24, %s25
    %p29 = pneg %p23
    %p30 = scmp.eq.s32.totalorder %s14, 1
    %p31 = por %p29, %p30
    %p32 = scmp.ne.s32.totalorder %s24, %s27
    %p33 = scmp.eq.s32.totalorder %s14, 0
    %p34 = por %p32, %p33
    %p35 = scmp.ne.s32.totalorder %s24, %s27
    %p36 = scmp.eq.s32.totalorder %s19, 1
    %p37 = por %p35, %p36
    %p38 = scmp.ne.s32.totalorder %s27, %s28
    %p39 = scmp.eq.s32.totalorder %s19, 0
    %p40 = por %p38, %p39
    %p41 = scmp.ne.s32.totalorder %s27, %s28
    %p42 = scmp.eq.s32.totalorder %s20, 1
    %p43 = por %p41, %p42
    %p45 = scmp.ne.s32.totalorder %s28, %s44
    %p46 = scmp.eq.s32.totalorder %s20, 0
    %p47 = por %p45, %p46
    %s48 = ssub.s32 %s14, %s21
    %p49 = scmp.eq.s32.totalorder %s48, 0
    %s51 = sadd.s32 %s50, 1
    %s52 = scalar_select %p49, %s50, %s51
    %p55 = pneg %p49
    %p56 = scmp.eq.s32.totalorder %s14, 1
    %p57 = por %p55, %p56
    %p58 = scmp.ne.s32.totalorder %s50, %s53
    %p59 = scmp.eq.s32.totalorder %s14, 0
    %p60 = por %p58, %p59
    %p61 = scmp.ne.s32.totalorder %s50, %s53
    %p62 = scmp.eq.s32.totalorder %s19, 1
    %p63 = por %p61, %p62
    %p64 = scmp.ne.s32.totalorder %s53, %s54
    %p65 = scmp.eq.s32.totalorder %s19, 0
    %p66 = por %p64, %p65
    %p67 = scmp.ne.s32.totalorder %s53, %s54
    %p68 = scmp.eq.s32.totalorder %s20, 1
    %p69 = por %p67, %p68
    %p71 = scmp.ne.s32.totalorder %s54, %s70
    %p72 = scmp.eq.s32.totalorder %s20, 0
    %p73 = por %p71, %p72
    %s75 = sadd.s32 %s74, 1
    %p78 = scmp.eq.s32.totalorder %s14, 1
    %p79 = scmp.ne.s32.totalorder %s74, %s76
    %p80 = scmp.eq.s32.totalorder %s14, 0
    %p81 = por %p79, %p80
    %p82 = scmp.ne.s32.totalorder %s74, %s76
    %p83 = scmp.eq.s32.totalorder %s19, 1
    %p84 = por %p82, %p83
    %p85 = scmp.ne.s32.totalorder %s76, %s77
    %p86 = scmp.eq.s32.totalorder %s19, 0
    %p87 = por %p85, %p86
    %p88 = scmp.ne.s32.totalorder %s76, %s77
    %p89 = scmp.eq.s32.totalorder %s20, 1
    %p90 = por %p88, %p89
    %p92 = scmp.ne.s32.totalorder %s77, %s91
    %p93 = scmp.eq.s32.totalorder %s20, 0
    %p94 = por %p92, %p93
    %s96 = sadd.s32 %s95, 1
    %p99 = scmp.eq.s32.totalorder %s14, 1
    %p100 = scmp.ne.s32.totalorder %s95, %s97
    %p101 = scmp.eq.s32.totalorder %s14, 0
    %p102 = por %p100, %p101
    %p103 = scmp.ne.s32.totalorder %s95, %s97
    %p104 = scmp.eq.s32.totalorder %s19, 1
    %p105 = por %p103, %p104
    %p106 = scmp.ne.s32.totalorder %s97, %s98
    %p107 = scmp.eq.s32.totalorder %s19, 0
    %p108 = por %p106, %p107
    %p109 = scmp.ne.s32.totalorder %s97, %s98
    %p110 = scmp.eq.s32.totalorder %s20, 1
    %p111 = por %p109, %p110
    %p113 = scmp.ne.s32.totalorder %s98, %s112
    %p114 = scmp.eq.s32.totalorder %s20, 0
    %p115 = por %p113, %p114
    %s117 = sadd.s32 %s116, 1
    %p120 = scmp.eq.s32.totalorder %s14, 1
    %p121 = scmp.ne.s32.totalorder %s116, %s118
    %p122 = scmp.eq.s32.totalorder %s14, 0
    %p123 = por %p121, %p122
    %p124 = scmp.ne.s32.totalorder %s116, %s118
    %p125 = scmp.eq.s32.totalorder %s19, 1
    %p126 = por %p124, %p125
    %p127 = scmp.ne.s32.totalorder %s118, %s119
    %p128 = scmp.eq.s32.totalorder %s19, 0
    %p129 = por %p127, %p128
    %p130 = scmp.ne.s32.totalorder %s118, %s119
    %p131 = scmp.eq.s32.totalorder %s20, 1
    %p132 = por %p130, %p131
    %p134 = scmp.ne.s32.totalorder %s119, %s133
    %p135 = scmp.eq.s32.totalorder %s20, 0
    %p136 = por %p134, %p135
    %s138 = sadd.s32 %s137, 1
    %p141 = scmp.eq.s32.totalorder %s14, 1
    %p142 = scmp.ne.s32.totalorder %s137, %s139
    %p143 = scmp.eq.s32.totalorder %s14, 0
    %p144 = por %p142, %p143
    %p145 = scmp.ne.s32.totalorder %s137, %s139
    %p146 = scmp.eq.s32.totalorder %s19, 1
    %p147 = por %p145, %p146
    %p148 = scmp.ne.s32.totalorder %s139, %s140
    %p149 = scmp.eq.s32.totalorder %s19, 0
    %p150 = por %p148, %p149
    %p151 = scmp.ne.s32.totalorder %s139, %s140
    %p152 = scmp.eq.s32.totalorder %s20, 1
    %p153 = por %p151, %p152
    %p155 = scmp.ne.s32.totalorder %s140, %s154
    %p156 = scmp.eq.s32.totalorder %s20, 0
    %p157 = por %p155, %p156
    %s158 = ssub.s32 %s14, %s21
    %p159 = scmp.eq.s32.totalorder %s158, 0
    %s161 = sadd.s32 %s160, 1
    %s162 = scalar_select %p159, %s160, %s161
    %p165 = pneg %p159
    %p166 = scmp.eq.s32.totalorder %s14, 1
    %p167 = por %p165, %p166
    %p168 = scmp.ne.s32.totalorder %s160, %s163
    %p169 = scmp.eq.s32.totalorder %s14, 0
    %p170 = por %p168, %p169
    %p171 = scmp.ne.s32.totalorder %s160, %s163
    %p172 = scmp.eq.s32.totalorder %s19, 1
    %p173 = por %p171, %p172
    %p174 = scmp.ne.s32.totalorder %s163, %s164
    %p175 = scmp.eq.s32.totalorder %s19, 0
    %p176 = por %p174, %p175
    %p177 = scmp.ne.s32.totalorder %s163, %s164
    %p178 = scmp.eq.s32.totalorder %s20, 1
    %p179 = por %p177, %p178
    %p181 = scmp.ne.s32.totalorder %s164, %s180
    %p182 = scmp.eq.s32.totalorder %s20, 0
    %p183 = por %p181, %p182
    %s184 = ssub.s32 %s14, %s21
    %p185 = scmp.eq.s32.totalorder %s184, 0
    %s187 = sadd.s32 %s186, 1
    %s188 = scalar_select %p185, %s186, %s187
    %p191 = pneg %p185
    %p192 = scmp.eq.s32.totalorder %s14, 1
    %p193 = por %p191, %p192
    %p194 = scmp.ne.s32.totalorder %s186, %s189
    %p195 = scmp.eq.s32.totalorder %s14, 0
    %p196 = por %p194, %p195
    %p197 = scmp.ne.s32.totalorder %s186, %s189
    %p198 = scmp.eq.s32.totalorder %s19, 1
    %p199 = por %p197, %p198
    %p200 = scmp.ne.s32.totalorder %s189, %s190
    %p201 = scmp.eq.s32.totalorder %s19, 0
    %p202 = por %p200, %p201
    %p203 = scmp.ne.s32.totalorder %s189, %s190
    %p204 = scmp.eq.s32.totalorder %s20, 1
    %p205 = por %p203, %p204
    %p207 = scmp.ne.s32.totalorder %s190, %s206
    %p208 = scmp.eq.s32.totalorder %s20, 0
    %p209 = por %p207, %p208
    %p210 = scmp.le.s32.totalorder 1, %s14
    %p211 = scmp.lt.s32.totalorder %s14, 3
    %p212 = pnand %p210, %p211
    %p213 = pneg %p212
    // Predicated region
    $region9: #{mims_forward.1} parent=5 // pred_check
      _
    $region10: #{mims_forward.1} parent=5 // pred_check_branch
      %215 = sbr.rel (%p212) target = $region12
    $region11: #{mims_forward.1} parent=5 // pred_region
      %s216 = ssub.s32 %s14, 1
      // Predicated region
      $region13: #{mims_forward.1} parent=11 // pred_check
        %p217 = pneg %p87
      $region14: #{mims_forward.1} parent=11 // pred_check_branch
        %219 = sbr.rel (%p217) target = $region16
      $region15: #{mims_forward.1} parent=11 // pred_region
        _
      $region16: #{mims_forward.1} parent=11 // pred_fallthru
        _
      // Predicated region
      $region17: #{mims_forward.1} parent=11 // pred_check
        %p220 = pneg %p108
      $region18: #{mims_forward.1} parent=11 // pred_check_branch
        %222 = sbr.rel (%p220) target = $region20
      $region19: #{mims_forward.1} parent=11 // pred_region
        _
      $region20: #{mims_forward.1} parent=11 // pred_fallthru
        _
      // Predicated region
      $region21: #{mims_forward.1} parent=11 // pred_check
        %p223 = pneg %p129
      $region22: #{mims_forward.1} parent=11 // pred_check_branch
        %225 = sbr.rel (%p223) target = $region24
      $region23: #{mims_forward.1} parent=11 // pred_region
        _
      $region24: #{mims_forward.1} parent=11 // pred_fallthru
        _
      // Predicated region
      $region25: #{mims_forward.1} parent=11 // pred_check
        %p226 = pneg %p150
      $region26: #{mims_forward.1} parent=11 // pred_check_branch
        %228 = sbr.rel (%p226) target = $region28
      $region27: #{mims_forward.1} parent=11 // pred_region
        _
      $region28: #{mims_forward.1} parent=11 // pred_fallthru
        _
    $region12: #{mims_forward.1} parent=5 // pred_fallthru
      _
    %p229 = scmp.lt.s32.totalorder %s14, 2
    // Predicated region
    $region29: #{mims_forward.1} parent=5 // pred_check
      %p230 = pneg %p229
    $region30: #{mims_forward.1} parent=5 // pred_check_branch
      %232 = sbr.rel (%p230) target = $region32
    $region31: #{mims_forward.1} parent=5 // pred_region
      // Predicated region
      $region33: #{mims_forward.1} parent=31 // pred_check
        %p233 = pneg %p34
      $region34: #{mims_forward.1} parent=31 // pred_check_branch
        %235 = sbr.rel (%p233) target = $region36
      $region35: #{mims_forward.1} parent=31 // pred_region
        %p236 = scmp.lt.s32.totalorder %s14, 1
        %s237 = scalar_select %p236, %s14, 1
        %s238 = smul.addr %s237, 2
        %s239 = smul.addr %s238, 8
        %s240 = scalar_lea.vmem %s0, %s239
      $region36: #{mims_forward.1} parent=31 // pred_fallthru
        _
      // Predicated region
      $region37: #{mims_forward.1} parent=31 // pred_check
        %p241 = pneg %p60
      $region38: #{mims_forward.1} parent=31 // pred_check_branch
        %243 = sbr.rel (%p241) target = $region40
      $region39: #{mims_forward.1} parent=31 // pred_region
        %p244 = scmp.lt.s32.totalorder %s14, 1
        %s245 = scalar_select %p244, %s14, 1
        %s246 = smul.addr %s245, 2
        %s247 = smul.addr %s246, 4
        %s248 = scalar_lea.vmem %s1, %s247
      $region40: #{mims_forward.1} parent=31 // pred_fallthru
        _
    $region32: #{mims_forward.1} parent=5 // pred_fallthru
      _
    %p249 = scmp.le.s32.totalorder 1, %s14
    %p250 = scmp.lt.s32.totalorder %s14, 3
    %p251 = pnand %p249, %p250
    %p252 = pneg %p251
    // Predicated region
    $region41: #{mims_forward.1} parent=5 // pred_check
      _
    $region42: #{mims_forward.1} parent=5 // pred_check_branch
      %254 = sbr.rel (%p251) target = $region44
    $region43: #{mims_forward.1} parent=5 // pred_region
      %s255 = ssub.s32 %s14, 1
      %p256 = scmp.lt.s32.totalorder %s19, 1
      %s257 = scalar_select %p256, %s19, 1
      %s258 = smul.addr %s257, 2
      %s259 = smul.addr %s258, 8
      %s260 = scalar_lea.vmem %s0, %s259
      %p261 = pneg %p40
      %p262 = pneg %p37
      %p263 = scmp.lt.s32.totalorder %s19, 1
      %s264 = scalar_select %p263, %s19, 1
      %s265 = smul.addr %s264, 2
      %s266 = smul.addr %s265, 4
      %s267 = scalar_lea.vmem %s1, %s266
      %p268 = pneg %p66
      %p269 = pneg %p63
      %p270 = pneg %p87
      %p271 = pneg %p84
      %p272 = pneg %p108
      %p273 = pneg %p105
      %p274 = pneg %p129
      %p275 = pneg %p126
      %p276 = pneg %p150
      %p277 = pneg %p147
      %p278 = pneg %p176
      %p279 = pneg %p173
      %p280 = scmp.lt.s32.totalorder %s19, 1
      %s281 = scalar_select %p280, %s19, 1
      %s282 = smul.addr %s281, 2
      %s283 = smul.addr %s282, 4
      %s284 = scalar_lea.vmem %s6, %s283
      %p285 = pneg %p202
      %p286 = pneg %p199
      %p287 = scmp.lt.s32.totalorder %s19, 1
      %s288 = scalar_select %p287, %s19, 1
      %s289 = smul.addr %s288, 2
      %s290 = smul.addr %s289, 4
      %s291 = scalar_lea.vmem %s7, %s290
      %p292 = scmp.lt.s32.totalorder %s19, 1
      %s293 = scalar_select %p292, %s19, 1
      %s294 = smul.addr %s293, 2
      %s295 = smul.addr %s294, 8
      %s296 = scalar_lea.vmem %s0, %s295
      %p297 = scmp.lt.s32.totalorder %s19, 1
      %s298 = scalar_select %p297, %s19, 1
      %s299 = smul.addr %s298, 2
      %s300 = smul.addr %s299, 4
      %s301 = scalar_lea.vmem %s1, %s300
      %p302 = scmp.lt.s32.totalorder %s19, 1
      %s303 = scalar_select %p302, %s19, 1
      %s304 = smul.addr %s303, 2
      %s305 = smul.addr %s304, 4
      %s306 = scalar_lea.vmem %s6, %s305
      %p307 = scmp.lt.s32.totalorder %s19, 1
      %s308 = scalar_select %p307, %s19, 1
      %s309 = smul.addr %s308, 2
      %s310 = smul.addr %s309, 4
      %s311 = scalar_lea.vmem %s7, %s310
      %v313 = vld [vmem:[%s296] sm:$0xff]
      %v314 = vld [vmem:[%s296 + $0x8] sm:$0xff]
      %v315 = vld [vmem:[%s301] sm:$0xff]
      %v316 = vld [vmem:[%s4] sm:$0xff]
      %v317 = vld [vmem:[%s4 + $0x8] sm:$0xff]
      %318 = vrot.lane.b32.xlu0 %v313, 17
      %v319 = vpop.permute.xlu0 %318
      %320 = vrot.lane.b32.xlu0 %v314, 17
      %v321 = vpop.permute.xlu0 %320
      %v322 = vlaneseq
      %v323 = vand.u32 %v322, 127
      %vm324 = vcmp.lt.s32.totalorder %v323, 17
      %v325 = vsel %vm324, %v319, %v321
      %v326 = vsel %vm324, %v321, %v319
      %v327 = vld [vmem:[%s3] sm:$0x3]
      %v329 = vlaneseq
      %v330 = vshrl.u32 %v329, 7
      %v331 = vsub.s32 0, %v330
      %v332 = vrot.slane %v327, %v331
      %v333 = vlaneseq
      %v334 = vshrl.u32 %v333, 7
      %v335 = vsub.s32 1, %v334
      %v336 = vrot.slane %v327, %v335
      %v339 = vmul.f32 %v326, %v332
      %v340 = vmul.f32 %v325, %v336
      %v341 = vpack.c.bf16 %v339, %v339
      %v342 = vpack.c.bf16 %v340, %v340
      %v343 = vld [vmem:[%s2] sm:$0xf]
      %v344 = vld [vmem:[%s2 + $0x4] sm:$0xf]
      %v345 = vld [vmem:[%s2 + $0x8] sm:$0xf]
      %v346 = vld [vmem:[%s2 + $0xc] sm:$0xf]
      %347 = vrot.lane.b32.xlu0 %v313, 16
      %v348 = vpop.permute.xlu0 %347
      %349 = vrot.lane.b32.xlu0 %v314, 16
      %v350 = vpop.permute.xlu0 %349
      %vm351 = vcmp.lt.s32.totalorder %v323, 16
      %v352 = vsel %vm351, %v348, %v350
      %v353 = vsel %vm351, %v350, %v348
      %s354 = scalar_lea.vmem %s3, 2
      %v355 = vld [vmem:[%s354] sm:$0x3]
      %v357 = vlaneseq
      %v358 = vshrl.u32 %v357, 7
      %v359 = vsub.s32 0, %v358
      %v360 = vrot.slane %v355, %v359
      %v361 = vlaneseq
      %v362 = vshrl.u32 %v361, 7
      %v363 = vsub.s32 1, %v362
      %v364 = vrot.slane %v355, %v363
      %v367 = vmul.f32 %v353, %v360
      %v368 = vmul.f32 %v352, %v364
      %v369 = vpack.c.bf16 %v367, %v367
      %v370 = vpack.c.bf16 %v368, %v368
      %s371 = scalar_lea.vmem %s2, 16
      %v372 = vld [vmem:[%s371] sm:$0xf]
      %v373 = vld [vmem:[%s371 + $0x4] sm:$0xf]
      %v374 = vld [vmem:[%s371 + $0x8] sm:$0xf]
      %v375 = vld [vmem:[%s371 + $0xc] sm:$0xf]
      %v380 = vunpack.c.l.b16 %v372
      %v381 = vunpack.c.l.b16 %v373
      %v382 = vunpack.c.l.b16 %v374
      %v383 = vunpack.c.l.b16 %v375
      %v384 = vpack.c.b16 %v381, %v380
      %v385 = vpack.c.b16 %v383, %v382
      %vm386 = vcmask 64512
      %v388 = vsel %vm386, %v384, 0
      %v391 = vsel %vm386, %v385, 0
      %vm393 = vcmask 1043456
      %v395 = vsel %vm393, %v369, 0
      %v398 = vsel %vm393, %v370, 0
      %400 = vmatprep.subr.bf16.mxu0 %v398
      %401 = vmatpush1.bf16.msra.mxu0 %v395
      %402 = vmatprep.subr.bf16.mxu0 0
      %403 = vmatpush1.bf16.msra.mxu0 0
      %404 = vmatprep.subr.bf16.mxu0 0
      %405 = vmatpush1.bf16.msra.mxu0 0
      %406 = vmatprep.subr.bf16.mxu0 0
      %407 = vmatpush1.bf16.msra.mxu0 0
      %408 = vmatprep.subr.bf16.mxu0 0
      %409 = vmatpush1.bf16.msra.mxu0 0
      %410 = vmatprep.subr.bf16.mxu0 0
      %411 = vmatpush1.bf16.msra.mxu0 0
      %412 = vmatprep.subr.bf16.mxu0 0
      %413 = vmatpush1.bf16.msra.mxu0 0
      %414 = vmatprep.subr.bf16.mxu0 0
      %415 = vmatpush1.bf16.msra.mxu0 0
      %416 = vmatprep.subr.bf16.mxu0 0
      %417 = vmatpush1.bf16.msra.mxu0 0
      %418 = vmatprep.subr.bf16.mxu0 0
      %419 = vmatpush1.bf16.msra.mxu0 0
      %420 = vmatprep.subr.bf16.mxu0 0
      %421 = vmatpush1.bf16.msra.mxu0 0
      %422 = vmatprep.subr.bf16.mxu0 0
      %423 = vmatpush1.bf16.msra.mxu0 0
      %424 = vmatprep.subr.bf16.mxu0 0
      %425 = vmatpush1.bf16.msra.mxu0 0
      %426 = vmatprep.subr.bf16.mxu0 0
      %427 = vmatpush1.bf16.msra.mxu0 0
      %428 = vmatprep.subr.bf16.mxu0 0
      %429 = vmatpush1.bf16.msra.mxu0 0
      %430 = vmatprep.subr.bf16.mxu0 0
      %431 = vmatpush1.bf16.msra.mxu0 0
      %432 = vmatprep.mubr.bf16.mxu0 0
      %433 = vmatmul.mubr.bf16.gmra.mrb[0].mxu0 %v388
      %v434 = vpop.f32.mrb[0].mxu0
      %v435 = vadd.f32 0.0, %v434
      %v436 = vpop.f32.mrb[0].mxu0
      %v437 = vadd.f32 0.0, %v436
      %v438 = vpop.f32.mrb[0].mxu0
      %v439 = vadd.f32 0.0, %v438
      %v440 = vpop.f32.mrb[0].mxu0
      %v441 = vadd.f32 0.0, %v440
      %442 = vmatprep.mubr.bf16.mxu0 0
      %443 = vmatmul.mubr.bf16.gmra.mrb[0].mxu0 %v391
      %v444 = vpop.f32.mrb[0].mxu0
      %v445 = vadd.f32 0.0, %v444
      %v446 = vpop.f32.mrb[0].mxu0
      %v447 = vadd.f32 0.0, %v446
      %v448 = vpop.f32.mrb[0].mxu0
      %v449 = vadd.f32 0.0, %v448
      %v450 = vpop.f32.mrb[0].mxu0
      %v451 = vadd.f32 0.0, %v450
      %452 = vdwg.mxu0
      %v457 = vunpack.c.l.b16 %v343
      %v458 = vunpack.c.l.b16 %v344
      %v459 = vunpack.c.l.b16 %v345
      %v460 = vunpack.c.l.b16 %v346
      %v461 = vpack.c.b16 %v458, %v457
      %v462 = vpack.c.b16 %v460, %v459
      %v464 = vsel %vm386, %v461, 0
      %v467 = vsel %vm386, %v462, 0
      %v470 = vsel %vm393, %v341, 0
      %v473 = vsel %vm393, %v342, 0
      %475 = vmatprep.subr.bf16.mxu0 %v473
      %476 = vmatpush1.bf16.msra.mxu0 %v470
      %477 = vmatprep.subr.bf16.mxu0 0
      %478 = vmatpush1.bf16.msra.mxu0 0
      %479 = vmatprep.subr.bf16.mxu0 0
      %480 = vmatpush1.bf16.msra.mxu0 0
      %481 = vmatprep.subr.bf16.mxu0 0
      %482 = vmatpush1.bf16.msra.mxu0 0
      %483 = vmatprep.subr.bf16.mxu0 0
      %484 = vmatpush1.bf16.msra.mxu0 0
      %485 = vmatprep.subr.bf16.mxu0 0
      %486 = vmatpush1.bf16.msra.mxu0 0
      %487 = vmatprep.subr.bf16.mxu0 0
      %488 = vmatpush1.bf16.msra.mxu0 0
      %489 = vmatprep.subr.bf16.mxu0 0
      %490 = vmatpush1.bf16.msra.mxu0 0
      %491 = vmatprep.subr.bf16.mxu0 0
      %492 = vmatpush1.bf16.msra.mxu0 0
      %493 = vmatprep.subr.bf16.mxu0 0
      %494 = vmatpush1.bf16.msra.mxu0 0
      %495 = vmatprep.subr.bf16.mxu0 0
      %496 = vmatpush1.bf16.msra.mxu0 0
      %497 = vmatprep.subr.bf16.mxu0 0
      %498 = vmatpush1.bf16.msra.mxu0 0
      %499 = vmatprep.subr.bf16.mxu0 0
      %500 = vmatpush1.bf16.msra.mxu0 0
      %501 = vmatprep.subr.bf16.mxu0 0
      %502 = vmatpush1.bf16.msra.mxu0 0
      %503 = vmatprep.subr.bf16.mxu0 0
      %504 = vmatpush1.bf16.msra.mxu0 0
      %505 = vmatprep.subr.bf16.mxu0 0
      %506 = vmatpush1.bf16.msra.mxu0 0
      %507 = vmatprep.mubr.bf16.mxu0 0
      %508 = vmatmul.mubr.bf16.gmra.mrb[0].mxu0 %v464
      %v509 = vpop.f32.mrb[0].mxu0
      %v510 = vadd.f32 %v435, %v509
      %v511 = vpop.f32.mrb[0].mxu0
      %v512 = vadd.f32 %v437, %v511
      %v513 = vpop.f32.mrb[0].mxu0
      %v514 = vadd.f32 %v439, %v513
      %v515 = vpop.f32.mrb[0].mxu0
      %v516 = vadd.f32 %v441, %v515
      %517 = vmatprep.mubr.bf16.mxu0 0
      %518 = vmatmul.mubr.bf16.gmra.mrb[0].mxu0 %v467
      %v519 = vpop.f32.mrb[0].mxu0
      %v520 = vadd.f32 %v445, %v519
      %v521 = vpop.f32.mrb[0].mxu0
      %v522 = vadd.f32 %v447, %v521
      %v523 = vpop.f32.mrb[0].mxu0
      %v524 = vadd.f32 %v449, %v523
      %v525 = vpop.f32.mrb[0].mxu0
      %v526 = vadd.f32 %v451, %v525
      %527 = vdwg.mxu0
      %528 = vrot.lane.b32.xlu0 %v313, 15
      %v529 = vpop.permute.xlu0 %528
      %530 = vrot.lane.b32.xlu0 %v314, 15
      %v531 = vpop.permute.xlu0 %530
      %vm532 = vcmp.lt.s32.totalorder %v323, 15
      %v533 = vsel %vm532, %v529, %v531
      %v534 = vsel %vm532, %v531, %v529
      %s535 = scalar_lea.vmem %s3, 4
      %v536 = vld [vmem:[%s535] sm:$0x3]
      %v538 = vlaneseq
      %v539 = vshrl.u32 %v538, 7
      %v540 = vsub.s32 0, %v539
      %v541 = vrot.slane %v536, %v540
      %v542 = vlaneseq
      %v543 = vshrl.u32 %v542, 7
      %v544 = vsub.s32 1, %v543
      %v545 = vrot.slane %v536, %v544
      %v548 = vmul.f32 %v534, %v541
      %v549 = vmul.f32 %v533, %v545
      %v550 = vpack.c.bf16 %v548, %v548
      %v551 = vpack.c.bf16 %v549, %v549
      %s552 = scalar_lea.vmem %s2, 32
      %v553 = vld [vmem:[%s552] sm:$0xf]
      %v554 = vld [vmem:[%s552 + $0x4] sm:$0xf]
      %v555 = vld [vmem:[%s552 + $0x8] sm:$0xf]
      %v556 = vld [vmem:[%s552 + $0xc] sm:$0xf]
      %v561 = vunpack.c.l.b16 %v553
      %v562 = vunpack.c.l.b16 %v554
      %v563 = vunpack.c.l.b16 %v555
      %v564 = vunpack.c.l.b16 %v556
      %v565 = vpack.c.b16 %v562, %v561
      %v566 = vpack.c.b16 %v564, %v563
      %v568 = vsel %vm386, %v565, 0
      %v571 = vsel %vm386, %v566, 0
      %v574 = vsel %vm393, %v550, 0
      %v577 = vsel %vm393, %v551, 0
      %579 = vmatprep.subr.bf16.mxu0 %v577
      %580 = vmatpush1.bf16.msra.mxu0 %v574
      %581 = vmatprep.subr.bf16.mxu0 0
      %582 = vmatpush1.bf16.msra.mxu0 0
      %583 = vmatprep.subr.bf16.mxu0 0
      %584 = vmatpush1.bf16.msra.mxu0 0
      %585 = vmatprep.subr.bf16.mxu0 0
      %586 = vmatpush1.bf16.msra.mxu0 0
      %587 = vmatprep.subr.bf16.mxu0 0
      %588 = vmatpush1.bf16.msra.mxu0 0
      %589 = vmatprep.subr.bf16.mxu0 0
      %590 = vmatpush1.bf16.msra.mxu0 0
      %591 = vmatprep.subr.bf16.mxu0 0
      %592 = vmatpush1.bf16.msra.mxu0 0
      %593 = vmatprep.subr.bf16.mxu0 0
      %594 = vmatpush1.bf16.msra.mxu0 0
      %595 = vmatprep.subr.bf16.mxu0 0
      %596 = vmatpush1.bf16.msra.mxu0 0
      %597 = vmatprep.subr.bf16.mxu0 0
      %598 = vmatpush1.bf16.msra.mxu0 0
      %599 = vmatprep.subr.bf16.mxu0 0
      %600 = vmatpush1.bf16.msra.mxu0 0
      %601 = vmatprep.subr.bf16.mxu0 0
      %602 = vmatpush1.bf16.msra.mxu0 0
      %603 = vmatprep.subr.bf16.mxu0 0
      %604 = vmatpush1.bf16.msra.mxu0 0
      %605 = vmatprep.subr.bf16.mxu0 0
      %606 = vmatpush1.bf16.msra.mxu0 0
      %607 = vmatprep.subr.bf16.mxu0 0
      %608 = vmatpush1.bf16.msra.mxu0 0
      %609 = vmatprep.subr.bf16.mxu0 0
      %610 = vmatpush1.bf16.msra.mxu0 0
      %611 = vmatprep.mubr.bf16.mxu0 0
      %612 = vmatmul.mubr.bf16.gmra.mrb[0].mxu0 %v568
      %v613 = vpop.f32.mrb[0].mxu0
      %v614 = vadd.f32 0.0, %v613
      %v615 = vpop.f32.mrb[0].mxu0
      %v616 = vadd.f32 0.0, %v615
      %v617 = vpop.f32.mrb[0].mxu0
      %v618 = vadd.f32 0.0, %v617
      %v619 = vpop.f32.mrb[0].mxu0
      %v620 = vadd.f32 0.0, %v619
      %621 = vmatprep.mubr.bf16.mxu0 0
      %622 = vmatmul.mubr.bf16.gmra.mrb[0].mxu0 %v571
      %v623 = vpop.f32.mrb[0].mxu0
      %v624 = vadd.f32 0.0, %v623
      %v625 = vpop.f32.mrb[0].mxu0
      %v626 = vadd.f32 0.0, %v625
      %v627 = vpop.f32.mrb[0].mxu0
      %v628 = vadd.f32 0.0, %v627
      %v629 = vpop.f32.mrb[0].mxu0
      %v630 = vadd.f32 0.0, %v629
      %631 = vdwg.mxu0
      %v632 = vadd.f32 %v510, %v614
      %v633 = vadd.f32 %v512, %v616
      %v634 = vadd.f32 %v514, %v618
      %v635 = vadd.f32 %v516, %v620
      %v636 = vadd.f32 %v520, %v624
      %v637 = vadd.f32 %v522, %v626
      %v638 = vadd.f32 %v524, %v628
      %v639 = vadd.f32 %v526, %v630
      %640 = vrot.lane.b32.xlu0 %v313, 1
      %v641 = vpop.permute.xlu0 %640
      %642 = vrot.lane.b32.xlu0 %v314, 1
      %v643 = vpop.permute.xlu0 %642
      %vm644 = vcmp.lt.s32.totalorder %v323, 1
      %v645 = vsel %vm644, %v641, %v643
      %v646 = vsel %vm644, %v643, %v641
      %s647 = scalar_lea.vmem %s3, 6
      %v648 = vld [vmem:[%s647] sm:$0x3]
      %v650 = vlaneseq
      %v651 = vshrl.u32 %v650, 7
      %v652 = vsub.s32 0, %v651
      %v653 = vrot.slane %v648, %v652
      %v654 = vlaneseq
      %v655 = vshrl.u32 %v654, 7
      %v656 = vsub.s32 1, %v655
      %v657 = vrot.slane %v648, %v656
      %v660 = vmul.f32 %v646, %v653
      %v661 = vmul.f32 %v645, %v657
      %v662 = vpack.c.bf16 %v660, %v660
      %v663 = vpack.c.bf16 %v661, %v661
      %s664 = scalar_lea.vmem %s2, 48
      %v665 = vld [vmem:[%s664] sm:$0xf]
      %v666 = vld [vmem:[%s664 + $0x4] sm:$0xf]
      %v667 = vld [vmem:[%s664 + $0x8] sm:$0xf]
      %v668 = vld [vmem:[%s664 + $0xc] sm:$0xf]
      %v673 = vunpack.c.l.b16 %v665
      %v674 = vunpack.c.l.b16 %v666
      %v675 = vunpack.c.l.b16 %v667
      %v676 = vunpack.c.l.b16 %v668
      %v677 = vpack.c.b16 %v674, %v673
      %v678 = vpack.c.b16 %v676, %v675
      %v680 = vsel %vm386, %v677, 0
      %v683 = vsel %vm386, %v678, 0
      %v686 = vsel %vm393, %v662, 0
      %v689 = vsel %vm393, %v663, 0
      %691 = vmatprep.subr.bf16.mxu0 %v689
      %692 = vmatpush1.bf16.msra.mxu0 %v686
      %693 = vmatprep.subr.bf16.mxu0 0
      %694 = vmatpush1.bf16.msra.mxu0 0
      %695 = vmatprep.subr.bf16.mxu0 0
      %696 = vmatpush1.bf16.msra.mxu0 0
      %697 = vmatprep.subr.bf16.mxu0 0
      %698 = vmatpush1.bf16.msra.mxu0 0
      %699 = vmatprep.subr.bf16.mxu0 0
      %700 = vmatpush1.bf16.msra.mxu0 0
      %701 = vmatprep.subr.bf16.mxu0 0
      %702 = vmatpush1.bf16.msra.mxu0 0
      %703 = vmatprep.subr.bf16.mxu0 0
      %704 = vmatpush1.bf16.msra.mxu0 0
      %705 = vmatprep.subr.bf16.mxu0 0
      %706 = vmatpush1.bf16.msra.mxu0 0
      %707 = vmatprep.subr.bf16.mxu0 0
      %708 = vmatpush1.bf16.msra.mxu0 0
      %709 = vmatprep.subr.bf16.mxu0 0
      %710 = vmatpush1.bf16.msra.mxu0 0
      %711 = vmatprep.subr.bf16.mxu0 0
      %712 = vmatpush1.bf16.msra.mxu0 0
      %713 = vmatprep.subr.bf16.mxu0 0
      %714 = vmatpush1.bf16.msra.mxu0 0
      %715 = vmatprep.subr.bf16.mxu0 0
      %716 = vmatpush1.bf16.msra.mxu0 0
      %717 = vmatprep.subr.bf16.mxu0 0
      %718 = vmatpush1.bf16.msra.mxu0 0
      %719 = vmatprep.subr.bf16.mxu0 0
      %720 = vmatpush1.bf16.msra.mxu0 0
      %721 = vmatprep.subr.bf16.mxu0 0
      %722 = vmatpush1.bf16.msra.mxu0 0
      %723 = vmatprep.mubr.bf16.mxu0 0
      %724 = vmatmul.mubr.bf16.gmra.mrb[0].mxu0 %v680
      %v725 = vpop.f32.mrb[0].mxu0
      %v726 = vadd.f32 0.0, %v725
      %v727 = vpop.f32.mrb[0].mxu0
      %v728 = vadd.f32 0.0, %v727
      %v729 = vpop.f32.mrb[0].mxu0
      %v730 = vadd.f32 0.0, %v729
      %v731 = vpop.f32.mrb[0].mxu0
      %v732 = vadd.f32 0.0, %v731
      %733 = vmatprep.mubr.bf16.mxu0 0
      %734 = vmatmul.mubr.bf16.gmra.mrb[0].mxu0 %v683
      %v735 = vpop.f32.mrb[0].mxu0
      %v736 = vadd.f32 0.0, %v735
      %v737 = vpop.f32.mrb[0].mxu0
      %v738 = vadd.f32 0.0, %v737
      %v739 = vpop.f32.mrb[0].mxu0
      %v740 = vadd.f32 0.0, %v739
      %v741 = vpop.f32.mrb[0].mxu0
      %v742 = vadd.f32 0.0, %v741
      %743 = vdwg.mxu0
      %v744 = vadd.f32 %v632, %v726
      %v745 = vadd.f32 %v633, %v728
      %v746 = vadd.f32 %v634, %v730
      %v747 = vadd.f32 %v635, %v732
      %v748 = vadd.f32 %v636, %v736
      %v749 = vadd.f32 %v637, %v738
      %v750 = vadd.f32 %v638, %v740
      %v751 = vadd.f32 %v639, %v742
      %s752 = scalar_lea.vmem %s3, 8
      %v753 = vld [vmem:[%s752] sm:$0x3]
      %v755 = vlaneseq
      %v756 = vshrl.u32 %v755, 7
      %v757 = vsub.s32 0, %v756
      %v758 = vrot.slane %v753, %v757
      %v759 = vlaneseq
      %v760 = vshrl.u32 %v759, 7
      %v761 = vsub.s32 1, %v760
      %v762 = vrot.slane %v753, %v761
      %v765 = vmul.f32 %v313, %v758
      %v766 = vmul.f32 %v314, %v762
      %v767 = vpack.c.bf16 %v765, %v765
      %v768 = vpack.c.bf16 %v766, %v766
      %s769 = scalar_lea.vmem %s2, 64
      %v770 = vld [vmem:[%s769] sm:$0xf]
      %v771 = vld [vmem:[%s769 + $0x4] sm:$0xf]
      %v772 = vld [vmem:[%s769 + $0x8] sm:$0xf]
      %v773 = vld [vmem:[%s769 + $0xc] sm:$0xf]
      %v778 = vunpack.c.l.b16 %v770
      %v779 = vunpack.c.l.b16 %v771
      %v780 = vunpack.c.l.b16 %v772
      %v781 = vunpack.c.l.b16 %v773
      %v782 = vpack.c.b16 %v779, %v778
      %v783 = vpack.c.b16 %v781, %v780
      %v785 = vsel %vm386, %v782, 0
      %v788 = vsel %vm386, %v783, 0
      %v791 = vsel %vm393, %v767, 0
      %v794 = vsel %vm393, %v768, 0
      %796 = vmatprep.subr.bf16.mxu0 %v794
      %797 = vmatpush1.bf16.msra.mxu0 %v791
      %798 = vmatprep.subr.bf16.mxu0 0
      %799 = vmatpush1.bf16.msra.mxu0 0
      %800 = vmatprep.subr.bf16.mxu0 0
      %801 = vmatpush1.bf16.msra.mxu0 0
      %802 = vmatprep.subr.bf16.mxu0 0
      %803 = vmatpush1.bf16.msra.mxu0 0
      %804 = vmatprep.subr.bf16.mxu0 0
      %805 = vmatpush1.bf16.msra.mxu0 0
      %806 = vmatprep.subr.bf16.mxu0 0
      %807 = vmatpush1.bf16.msra.mxu0 0
      %808 = vmatprep.subr.bf16.mxu0 0
      %809 = vmatpush1.bf16.msra.mxu0 0
      %810 = vmatprep.subr.bf16.mxu0 0
      %811 = vmatpush1.bf16.msra.mxu0 0
      %812 = vmatprep.subr.bf16.mxu0 0
      %813 = vmatpush1.bf16.msra.mxu0 0
      %814 = vmatprep.subr.bf16.mxu0 0
      %815 = vmatpush1.bf16.msra.mxu0 0
      %816 = vmatprep.subr.bf16.mxu0 0
      %817 = vmatpush1.bf16.msra.mxu0 0
      %818 = vmatprep.subr.bf16.mxu0 0
      %819 = vmatpush1.bf16.msra.mxu0 0
      %820 = vmatprep.subr.bf16.mxu0 0
      %821 = vmatpush1.bf16.msra.mxu0 0
      %822 = vmatprep.subr.bf16.mxu0 0
      %823 = vmatpush1.bf16.msra.mxu0 0
      %824 = vmatprep.subr.bf16.mxu0 0
      %825 = vmatpush1.bf16.msra.mxu0 0
      %826 = vmatprep.subr.bf16.mxu0 0
      %827 = vmatpush1.bf16.msra.mxu0 0
      %828 = vmatprep.mubr.bf16.mxu0 0
      %829 = vmatmul.mubr.bf16.gmra.mrb[0].mxu0 %v785
      %v830 = vpop.f32.mrb[0].mxu0
      %v831 = vadd.f32 0.0, %v830
      %v832 = vpop.f32.mrb[0].mxu0
      %v833 = vadd.f32 0.0, %v832
      %v834 = vpop.f32.mrb[0].mxu0
      %v835 = vadd.f32 0.0, %v834
      %v836 = vpop.f32.mrb[0].mxu0
      %v837 = vadd.f32 0.0, %v836
      %838 = vmatprep.mubr.bf16.mxu0 0
      %839 = vmatmul.mubr.bf16.gmra.mrb[0].mxu0 %v788
      %v840 = vpop.f32.mrb[0].mxu0
      %v841 = vadd.f32 0.0, %v840
      %v842 = vpop.f32.mrb[0].mxu0
      %v843 = vadd.f32 0.0, %v842
      %v844 = vpop.f32.mrb[0].mxu0
      %v845 = vadd.f32 0.0, %v844
      %v846 = vpop.f32.mrb[0].mxu0
      %v847 = vadd.f32 0.0, %v846
      %848 = vdwg.mxu0
      %v849 = vadd.f32 %v744, %v831
      %v850 = vadd.f32 %v745, %v833
      %v851 = vadd.f32 %v746, %v835
      %v852 = vadd.f32 %v747, %v837
      %v853 = vadd.f32 %v748, %v841
      %v854 = vadd.f32 %v749, %v843
      %v855 = vadd.f32 %v750, %v845
      %v856 = vadd.f32 %v751, %v847
      %857 = vrot.lane.b32.xlu0 %v313, 127
      %v858 = vpop.permute.xlu0 %857
      %859 = vrot.lane.b32.xlu0 %v314, 127
      %v860 = vpop.permute.xlu0 %859
      %vm861 = vcmp.lt.s32.totalorder %v323, 127
      %v862 = vsel %vm861, %v858, %v860
      %v863 = vsel %vm861, %v860, %v858
      %s864 = scalar_lea.vmem %s3, 10
      %v865 = vld [vmem:[%s864] sm:$0x3]
      %v867 = vlaneseq
      %v868 = vshrl.u32 %v867, 7
      %v869 = vsub.s32 0, %v868
      %v870 = vrot.slane %v865, %v869
      %v871 = vlaneseq
      %v872 = vshrl.u32 %v871, 7
      %v873 = vsub.s32 1, %v872
      %v874 = vrot.slane %v865, %v873
      %v877 = vmul.f32 %v862, %v870
      %v878 = vmul.f32 %v863, %v874
      %v879 = vpack.c.bf16 %v877, %v877
      %v880 = vpack.c.bf16 %v878, %v878
      %s881 = scalar_lea.vmem %s2, 80
      %v882 = vld [vmem:[%s881] sm:$0xf]
      %v883 = vld [vmem:[%s881 + $0x4] sm:$0xf]
      %v884 = vld [vmem:[%s881 + $0x8] sm:$0xf]
      %v885 = vld [vmem:[%s881 + $0xc] sm:$0xf]
      %v890 = vunpack.c.l.b16 %v882
      %v891 = vunpack.c.l.b16 %v883
      %v892 = vunpack.c.l.b16 %v884
      %v893 = vunpack.c.l.b16 %v885
      %v894 = vpack.c.b16 %v891, %v890
      %v895 = vpack.c.b16 %v893, %v892
      %v897 = vsel %vm386, %v894, 0
      %v900 = vsel %vm386, %v895, 0
      %v903 = vsel %vm393, %v879, 0
      %v906 = vsel %vm393, %v880, 0
      %908 = vmatprep.subr.bf16.mxu0 %v906
      %909 = vmatpush1.bf16.msra.mxu0 %v903
      %910 = vmatprep.subr.bf16.mxu0 0
      %911 = vmatpush1.bf16.msra.mxu0 0
      %912 = vmatprep.subr.bf16.mxu0 0
      %913 = vmatpush1.bf16.msra.mxu0 0
      %914 = vmatprep.subr.bf16.mxu0 0
      %915 = vmatpush1.bf16.msra.mxu0 0
      %916 = vmatprep.subr.bf16.mxu0 0
      %917 = vmatpush1.bf16.msra.mxu0 0
      %918 = vmatprep.subr.bf16.mxu0 0
      %919 = vmatpush1.bf16.msra.mxu0 0
      %920 = vmatprep.subr.bf16.mxu0 0
      %921 = vmatpush1.bf16.msra.mxu0 0
      %922 = vmatprep.subr.bf16.mxu0 0
      %923 = vmatpush1.bf16.msra.mxu0 0
      %924 = vmatprep.subr.bf16.mxu0 0
      %925 = vmatpush1.bf16.msra.mxu0 0
      %926 = vmatprep.subr.bf16.mxu0 0
      %927 = vmatpush1.bf16.msra.mxu0 0
      %928 = vmatprep.subr.bf16.mxu0 0
      %929 = vmatpush1.bf16.msra.mxu0 0
      %930 = vmatprep.subr.bf16.mxu0 0
      %931 = vmatpush1.bf16.msra.mxu0 0
      %932 = vmatprep.subr.bf16.mxu0 0
      %933 = vmatpush1.bf16.msra.mxu0 0
      %934 = vmatprep.subr.bf16.mxu0 0
      %935 = vmatpush1.bf16.msra.mxu0 0
      %936 = vmatprep.subr.bf16.mxu0 0
      %937 = vmatpush1.bf16.msra.mxu0 0
      %938 = vmatprep.subr.bf16.mxu0 0
      %939 = vmatpush1.bf16.msra.mxu0 0
      %940 = vmatprep.mubr.bf16.mxu0 0
      %941 = vmatmul.mubr.bf16.gmra.mrb[0].mxu0 %v897
      %v942 = vpop.f32.mrb[0].mxu0
      %v943 = vadd.f32 0.0, %v942
      %v944 = vpop.f32.mrb[0].mxu0
      %v945 = vadd.f32 0.0, %v944
      %v946 = vpop.f32.mrb[0].mxu0
      %v947 = vadd.f32 0.0, %v946
      %v948 = vpop.f32.mrb[0].mxu0
      %v949 = vadd.f32 0.0, %v948
      %950 = vmatprep.mubr.bf16.mxu0 0
      %951 = vmatmul.mubr.bf16.gmra.mrb[0].mxu0 %v900
      %v952 = vpop.f32.mrb[0].mxu0
      %v953 = vadd.f32 0.0, %v952
      %v954 = vpop.f32.mrb[0].mxu0
      %v955 = vadd.f32 0.0, %v954
      %v956 = vpop.f32.mrb[0].mxu0
      %v957 = vadd.f32 0.0, %v956
      %v958 = vpop.f32.mrb[0].mxu0
      %v959 = vadd.f32 0.0, %v958
      %960 = vdwg.mxu0
      %v961 = vadd.f32 %v849, %v943
      %v962 = vadd.f32 %v850, %v945
      %v963 = vadd.f32 %v851, %v947
      %v964 = vadd.f32 %v852, %v949
      %v965 = vadd.f32 %v853, %v953
      %v966 = vadd.f32 %v854, %v955
      %v967 = vadd.f32 %v855, %v957
      %v968 = vadd.f32 %v856, %v959
      %969 = vrot.lane.b32.xlu0 %v313, 113
      %v970 = vpop.permute.xlu0 %969
      %971 = vrot.lane.b32.xlu0 %v314, 113
      %v972 = vpop.permute.xlu0 %971
      %vm973 = vcmp.lt.s32.totalorder %v323, 113
      %v974 = vsel %vm973, %v970, %v972
      %v975 = vsel %vm973, %v972, %v970
      %s976 = scalar_lea.vmem %s3, 12
      %v977 = vld [vmem:[%s976] sm:$0x3]
      %v979 = vlaneseq
      %v980 = vshrl.u32 %v979, 7
      %v981 = vsub.s32 0, %v980
      %v982 = vrot.slane %v977, %v981
      %v983 = vlaneseq
      %v984 = vshrl.u32 %v983, 7
      %v985 = vsub.s32 1, %v984
      %v986 = vrot.slane %v977, %v985
      %v989 = vmul.f32 %v974, %v982
      %v990 = vmul.f32 %v975, %v986
      %v991 = vpack.c.bf16 %v989, %v989
      %v992 = vpack.c.bf16 %v990, %v990
      %s993 = scalar_lea.vmem %s2, 96
      %v994 = vld [vmem:[%s993] sm:$0xf]
      %v995 = vld [vmem:[%s993 + $0x4] sm:$0xf]
      %v996 = vld [vmem:[%s993 + $0x8] sm:$0xf]
      %v997 = vld [vmem:[%s993 + $0xc] sm:$0xf]
      %v1002 = vunpack.c.l.b16 %v994
      %v1003 = vunpack.c.l.b16 %v995
      %v1004 = vunpack.c.l.b16 %v996
      %v1005 = vunpack.c.l.b16 %v997
      %v1006 = vpack.c.b16 %v1003, %v1002
      %v1007 = vpack.c.b16 %v1005, %v1004
      %v1009 = vsel %vm386, %v1006, 0
      %v1012 = vsel %vm386, %v1007, 0
      %v1015 = vsel %vm393, %v991, 0
      %v1018 = vsel %vm393, %v992, 0
      %1020 = vmatprep.subr.bf16.mxu0 %v1018
      %1021 = vmatpush1.bf16.msra.mxu0 %v1015
      %1022 = vmatprep.subr.bf16.mxu0 0
      %1023 = vmatpush1.bf16.msra.mxu0 0
      %1024 = vmatprep.subr.bf16.mxu0 0
      %1025 = vmatpush1.bf16.msra.mxu0 0
      %1026 = vmatprep.subr.bf16.mxu0 0
      %1027 = vmatpush1.bf16.msra.mxu0 0
      %1028 = vmatprep.subr.bf16.mxu0 0
      %1029 = vmatpush1.bf16.msra.mxu0 0
      %1030 = vmatprep.subr.bf16.mxu0 0
      %1031 = vmatpush1.bf16.msra.mxu0 0
      %1032 = vmatprep.subr.bf16.mxu0 0
      %1033 = vmatpush1.bf16.msra.mxu0 0
      %1034 = vmatprep.subr.bf16.mxu0 0
      %1035 = vmatpush1.bf16.msra.mxu0 0
      %1036 = vmatprep.subr.bf16.mxu0 0
      %1037 = vmatpush1.bf16.msra.mxu0 0
      %1038 = vmatprep.subr.bf16.mxu0 0
      %1039 = vmatpush1.bf16.msra.mxu0 0
      %1040 = vmatprep.subr.bf16.mxu0 0
      %1041 = vmatpush1.bf16.msra.mxu0 0
      %1042 = vmatprep.subr.bf16.mxu0 0
      %1043 = vmatpush1.bf16.msra.mxu0 0
      %1044 = vmatprep.subr.bf16.mxu0 0
      %1045 = vmatpush1.bf16.msra.mxu0 0
      %1046 = vmatprep.subr.bf16.mxu0 0
      %1047 = vmatpush1.bf16.msra.mxu0 0
      %1048 = vmatprep.subr.bf16.mxu0 0
      %1049 = vmatpush1.bf16.msra.mxu0 0
      %1050 = vmatprep.subr.bf16.mxu0 0
      %1051 = vmatpush1.bf16.msra.mxu0 0
      %1052 = vmatprep.mubr.bf16.mxu0 0
      %1053 = vmatmul.mubr.bf16.gmra.mrb[0].mxu0 %v1009
      %v1054 = vpop.f32.mrb[0].mxu0
      %v1055 = vadd.f32 0.0, %v1054
      %v1056 = vpop.f32.mrb[0].mxu0
      %v1057 = vadd.f32 0.0, %v1056
      %v1058 = vpop.f32.mrb[0].mxu0
      %v1059 = vadd.f32 0.0, %v1058
      %v1060 = vpop.f32.mrb[0].mxu0
      %v1061 = vadd.f32 0.0, %v1060
      %1062 = vmatprep.mubr.bf16.mxu0 0
      %1063 = vmatmul.mubr.bf16.gmra.mrb[0].mxu0 %v1012
      %v1064 = vpop.f32.mrb[0].mxu0
      %v1065 = vadd.f32 0.0, %v1064
      %v1066 = vpop.f32.mrb[0].mxu0
      %v1067 = vadd.f32 0.0, %v1066
      %v1068 = vpop.f32.mrb[0].mxu0
      %v1069 = vadd.f32 0.0, %v1068
      %v1070 = vpop.f32.mrb[0].mxu0
      %v1071 = vadd.f32 0.0, %v1070
      %1072 = vdwg.mxu0
      %v1073 = vadd.f32 %v961, %v1055
      %v1074 = vadd.f32 %v962, %v1057
      %v1075 = vadd.f32 %v963, %v1059
      %v1076 = vadd.f32 %v964, %v1061
      %v1077 = vadd.f32 %v965, %v1065
      %v1078 = vadd.f32 %v966, %v1067
      %v1079 = vadd.f32 %v967, %v1069
      %v1080 = vadd.f32 %v968, %v1071
      %1081 = vrot.lane.b32.xlu0 %v313, 112
      %v1082 = vpop.permute.xlu0 %1081
      %1083 = vrot.lane.b32.xlu0 %v314, 112
      %v1084 = vpop.permute.xlu0 %1083
      %vm1085 = vcmp.lt.s32.totalorder %v323, 112
      %v1086 = vsel %vm1085, %v1082, %v1084
      %v1087 = vsel %vm1085, %v1084, %v1082
      %s1088 = scalar_lea.vmem %s3, 14
      %v1089 = vld [vmem:[%s1088] sm:$0x3]
      %v1091 = vlaneseq
      %v1092 = vshrl.u32 %v1091, 7
      %v1093 = vsub.s32 0, %v1092
      %v1094 = vrot.slane %v1089, %v1093
      %v1095 = vlaneseq
      %v1096 = vshrl.u32 %v1095, 7
      %v1097 = vsub.s32 1, %v1096
      %v1098 = vrot.slane %v1089, %v1097
      %v1101 = vmul.f32 %v1086, %v1094
      %v1102 = vmul.f32 %v1087, %v1098
      %v1103 = vpack.c.bf16 %v1101, %v1101
      %v1104 = vpack.c.bf16 %v1102, %v1102
      %s1105 = scalar_lea.vmem %s2, 112
      %v1106 = vld [vmem:[%s1105] sm:$0xf]
      %v1107 = vld [vmem:[%s1105 + $0x4] sm:$0xf]
      %v1108 = vld [vmem:[%s1105 + $0x8] sm:$0xf]
      %v1109 = vld [vmem:[%s1105 + $0xc] sm:$0xf]
      %v1114 = vunpack.c.l.b16 %v1106
      %v1115 = vunpack.c.l.b16 %v1107
      %v1116 = vunpack.c.l.b16 %v1108
      %v1117 = vunpack.c.l.b16 %v1109
      %v1118 = vpack.c.b16 %v1115, %v1114
      %v1119 = vpack.c.b16 %v1117, %v1116
      %v1121 = vsel %vm386, %v1118, 0
      %v1124 = vsel %vm386, %v1119, 0
      %v1127 = vsel %vm393, %v1103, 0
      %v1130 = vsel %vm393, %v1104, 0
      %1132 = vmatprep.subr.bf16.mxu0 %v1130
      %1133 = vmatpush1.bf16.msra.mxu0 %v1127
      %1134 = vmatprep.subr.bf16.mxu0 0
      %1135 = vmatpush1.bf16.msra.mxu0 0
      %1136 = vmatprep.subr.bf16.mxu0 0
      %1137 = vmatpush1.bf16.msra.mxu0 0
      %1138 = vmatprep.subr.bf16.mxu0 0
      %1139 = vmatpush1.bf16.msra.mxu0 0
      %1140 = vmatprep.subr.bf16.mxu0 0
      %1141 = vmatpush1.bf16.msra.mxu0 0
      %1142 = vmatprep.subr.bf16.mxu0 0
      %1143 = vmatpush1.bf16.msra.mxu0 0
      %1144 = vmatprep.subr.bf16.mxu0 0
      %1145 = vmatpush1.bf16.msra.mxu0 0
      %1146 = vmatprep.subr.bf16.mxu0 0
      %1147 = vmatpush1.bf16.msra.mxu0 0
      %1148 = vmatprep.subr.bf16.mxu0 0
      %1149 = vmatpush1.bf16.msra.mxu0 0
      %1150 = vmatprep.subr.bf16.mxu0 0
      %1151 = vmatpush1.bf16.msra.mxu0 0
      %1152 = vmatprep.subr.bf16.mxu0 0
      %1153 = vmatpush1.bf16.msra.mxu0 0
      %1154 = vmatprep.subr.bf16.mxu0 0
      %1155 = vmatpush1.bf16.msra.mxu0 0
      %1156 = vmatprep.subr.bf16.mxu0 0
      %1157 = vmatpush1.bf16.msra.mxu0 0
      %1158 = vmatprep.subr.bf16.mxu0 0
      %1159 = vmatpush1.bf16.msra.mxu0 0
      %1160 = vmatprep.subr.bf16.mxu0 0
      %1161 = vmatpush1.bf16.msra.mxu0 0
      %1162 = vmatprep.subr.bf16.mxu0 0
      %1163 = vmatpush1.bf16.msra.mxu0 0
      %1164 = vmatprep.mubr.bf16.mxu0 0
      %1165 = vmatmul.mubr.bf16.gmra.mrb[0].mxu0 %v1121
      %v1166 = vpop.f32.mrb[0].mxu0
      %v1167 = vadd.f32 0.0, %v1166
      %v1168 = vpop.f32.mrb[0].mxu0
      %v1169 = vadd.f32 0.0, %v1168
      %v1170 = vpop.f32.mrb[0].mxu0
      %v1171 = vadd.f32 0.0, %v1170
      %v1172 = vpop.f32.mrb[0].mxu0
      %v1173 = vadd.f32 0.0, %v1172
      %1174 = vmatprep.mubr.bf16.mxu0 0
      %1175 = vmatmul.mubr.bf16.gmra.mrb[0].mxu0 %v1124
      %v1176 = vpop.f32.mrb[0].mxu0
      %v1177 = vadd.f32 0.0, %v1176
      %v1178 = vpop.f32.mrb[0].mxu0
      %v1179 = vadd.f32 0.0, %v1178
      %v1180 = vpop.f32.mrb[0].mxu0
      %v1181 = vadd.f32 0.0, %v1180
      %v1182 = vpop.f32.mrb[0].mxu0
      %v1183 = vadd.f32 0.0, %v1182
      %1184 = vdwg.mxu0
      %v1185 = vadd.f32 %v1073, %v1167
      %v1186 = vadd.f32 %v1074, %v1169
      %v1187 = vadd.f32 %v1075, %v1171
      %v1188 = vadd.f32 %v1076, %v1173
      %v1189 = vadd.f32 %v1077, %v1177
      %v1190 = vadd.f32 %v1078, %v1179
      %v1191 = vadd.f32 %v1079, %v1181
      %v1192 = vadd.f32 %v1080, %v1183
      %1193 = vrot.lane.b32.xlu0 %v313, 111
      %v1194 = vpop.permute.xlu0 %1193
      %1195 = vrot.lane.b32.xlu0 %v314, 111
      %v1196 = vpop.permute.xlu0 %1195
      %vm1197 = vcmp.lt.s32.totalorder %v323, 111
      %v1198 = vsel %vm1197, %v1194, %v1196
      %v1199 = vsel %vm1197, %v1196, %v1194
      %s1200 = scalar_lea.vmem %s3, 16
      %v1201 = vld [vmem:[%s1200] sm:$0x3]
      %v1203 = vlaneseq
      %v1204 = vshrl.u32 %v1203, 7
      %v1205 = vsub.s32 0, %v1204
      %v1206 = vrot.slane %v1201, %v1205
      %v1207 = vlaneseq
      %v1208 = vshrl.u32 %v1207, 7
      %v1209 = vsub.s32 1, %v1208
      %v1210 = vrot.slane %v1201, %v1209
      %v1213 = vmul.f32 %v1198, %v1206
      %v1214 = vmul.f32 %v1199, %v1210
      %v1215 = vpack.c.bf16 %v1213, %v1213
      %v1216 = vpack.c.bf16 %v1214, %v1214
      %s1217 = scalar_lea.vmem %s2, 128
      %v1218 = vld [vmem:[%s1217] sm:$0xf]
      %v1219 = vld [vmem:[%s1217 + $0x4] sm:$0xf]
      %v1220 = vld [vmem:[%s1217 + $0x8] sm:$0xf]
      %v1221 = vld [vmem:[%s1217 + $0xc] sm:$0xf]
      %v1226 = vunpack.c.l.b16 %v1218
      %v1227 = vunpack.c.l.b16 %v1219
      %v1228 = vunpack.c.l.b16 %v1220
      %v1229 = vunpack.c.l.b16 %v1221
      %v1230 = vpack.c.b16 %v1227, %v1226
      %v1231 = vpack.c.b16 %v1229, %v1228
      %v1233 = vsel %vm386, %v1230, 0
      %v1236 = vsel %vm386, %v1231, 0
      %v1239 = vsel %vm393, %v1215, 0
      %v1242 = vsel %vm393, %v1216, 0
      %1244 = vmatprep.subr.bf16.mxu0 %v1242
      %1245 = vmatpush1.bf16.msra.mxu0 %v1239
      %1246 = vmatprep.subr.bf16.mxu0 0
      %1247 = vmatpush1.bf16.msra.mxu0 0
      %1248 = vmatprep.subr.bf16.mxu0 0
      %1249 = vmatpush1.bf16.msra.mxu0 0
      %1250 = vmatprep.subr.bf16.mxu0 0
      %1251 = vmatpush1.bf16.msra.mxu0 0
      %1252 = vmatprep.subr.bf16.mxu0 0
      %1253 = vmatpush1.bf16.msra.mxu0 0
      %1254 = vmatprep.subr.bf16.mxu0 0
      %1255 = vmatpush1.bf16.msra.mxu0 0
      %1256 = vmatprep.subr.bf16.mxu0 0
      %1257 = vmatpush1.bf16.msra.mxu0 0
      %1258 = vmatprep.subr.bf16.mxu0 0
      %1259 = vmatpush1.bf16.msra.mxu0 0
      %1260 = vmatprep.subr.bf16.mxu0 0
      %1261 = vmatpush1.bf16.msra.mxu0 0
      %1262 = vmatprep.subr.bf16.mxu0 0
      %1263 = vmatpush1.bf16.msra.mxu0 0
      %1264 = vmatprep.subr.bf16.mxu0 0
      %1265 = vmatpush1.bf16.msra.mxu0 0
      %1266 = vmatprep.subr.bf16.mxu0 0
      %1267 = vmatpush1.bf16.msra.mxu0 0
      %1268 = vmatprep.subr.bf16.mxu0 0
      %1269 = vmatpush1.bf16.msra.mxu0 0
      %1270 = vmatprep.subr.bf16.mxu0 0
      %1271 = vmatpush1.bf16.msra.mxu0 0
      %1272 = vmatprep.subr.bf16.mxu0 0
      %1273 = vmatpush1.bf16.msra.mxu0 0
      %1274 = vmatprep.subr.bf16.mxu0 0
      %1275 = vmatpush1.bf16.msra.mxu0 0
      %1276 = vmatprep.mubr.bf16.mxu0 0
      %1277 = vmatmul.mubr.bf16.gmra.mrb[0].mxu0 %v1233
      %v1278 = vpop.f32.mrb[0].mxu0
      %v1279 = vadd.f32 0.0, %v1278
      %v1280 = vpop.f32.mrb[0].mxu0
      %v1281 = vadd.f32 0.0, %v1280
      %v1282 = vpop.f32.mrb[0].mxu0
      %v1283 = vadd.f32 0.0, %v1282
      %v1284 = vpop.f32.mrb[0].mxu0
      %v1285 = vadd.f32 0.0, %v1284
      %1286 = vmatprep.mubr.bf16.mxu0 0
      %1287 = vmatmul.mubr.bf16.gmra.mrb[0].mxu0 %v1236
      %v1288 = vpop.f32.mrb[0].mxu0
      %v1289 = vadd.f32 0.0, %v1288
      %v1290 = vpop.f32.mrb[0].mxu0
      %v1291 = vadd.f32 0.0, %v1290
      %v1292 = vpop.f32.mrb[0].mxu0
      %v1293 = vadd.f32 0.0, %v1292
      %v1294 = vpop.f32.mrb[0].mxu0
      %v1295 = vadd.f32 0.0, %v1294
      %1296 = vdwg.mxu0
      %v1297 = vadd.f32 %v1185, %v1279
      %v1298 = vadd.f32 %v1186, %v1281
      %v1299 = vadd.f32 %v1187, %v1283
      %v1300 = vadd.f32 %v1188, %v1285
      %v1301 = vadd.f32 %v1189, %v1289
      %v1302 = vadd.f32 %v1190, %v1291
      %v1303 = vadd.f32 %v1191, %v1293
      %v1304 = vadd.f32 %v1192, %v1295
      %1306 = vset.pattern.permute.xlu0 0
      %1307 = vperm.xlu0 %1306, %v316
      %v1308 = vpop.permute.xlu0 %1307
      %v1310 = vadd.f32 %v1297, %v1308
      %v1311 = vadd.f32 %v1298, %v1308
      %1313 = vset.pattern.permute.xlu0 0
      %1314 = vperm.xlu0 %1313, %v317
      %v1315 = vpop.permute.xlu0 %1314
      %v1317 = vadd.f32 %v1299, %v1315
      %v1318 = vadd.f32 %v1300, %v1315
      %v1319 = vadd.f32 %v1310, %v1301
      %v1320 = vadd.f32 %v1311, %v1302
      %v1321 = vadd.f32 %v1317, %v1303
      %v1322 = vadd.f32 %v1318, %v1304
      %v1324 = vcombine.high %v315, %v315
      %1326 = vrot.lane.b32.xlu0 %v315, 113
      %v1327 = vpop.permute.xlu0 %1326
      %1328 = vrot.lane.b32.xlu0 %v1324, 113
      %v1329 = vpop.permute.xlu0 %1328
      %v1330 = vsel %vm973, %v1327, %v1329
      %v1331 = vsel %vm973, %v1329, %v1327
      %v1332 = vld [vmem:[%s5] sm:$0xff]
      %v1334 = vcombine.high %v1332, %v1332
      %v1336 = vmul.f32 %v1330, %v1332
      %v1337 = vmul.f32 %v1331, %v1334
      %v1338 = vadd.f32 %v1336, 0.0
      %v1339 = vadd.f32 %v1337, 0.0
      %s1340 = scalar_lea.vmem %s5, 248
      %v1341 = vld [vmem:[%s1340] sm:$0xff]
      %v1343 = vcombine.high %v1341, %v1341
      %v1345 = vmul.f32 %v1330, %v1341
      %v1346 = vmul.f32 %v1331, %v1343
      %v1347 = vadd.f32 %v1345, 0.0
      %v1348 = vadd.f32 %v1346, 0.0
      %1349 = vrot.lane.b32.xlu0 %v315, 114
      %v1350 = vpop.permute.xlu0 %1349
      %1351 = vrot.lane.b32.xlu0 %v1324, 114
      %v1352 = vpop.permute.xlu0 %1351
      %vm1353 = vcmp.lt.s32.totalorder %v323, 114
      %v1354 = vsel %vm1353, %v1350, %v1352
      %v1355 = vsel %vm1353, %v1352, %v1350
      %s1356 = scalar_lea.vmem %s5, 8
      %v1357 = vld [vmem:[%s1356] sm:$0xff]
      %v1359 = vcombine.high %v1357, %v1357
      %v1361 = vmul.f32 %v1354, %v1357
      %v1362 = vmul.f32 %v1355, %v1359
      %v1363 = vadd.f32 %v1338, %v1361
      %v1364 = vadd.f32 %v1339, %v1362
      %s1365 = scalar_lea.vmem %s5, 256
      %v1366 = vld [vmem:[%s1365] sm:$0xff]
      %v1368 = vcombine.high %v1366, %v1366
      %v1370 = vmul.f32 %v1354, %v1366
      %v1371 = vmul.f32 %v1355, %v1368
      %v1372 = vadd.f32 %v1347, %v1370
      %v1373 = vadd.f32 %v1348, %v1371
      %1374 = vrot.lane.b32.xlu0 %v315, 115
      %v1375 = vpop.permute.xlu0 %1374
      %1376 = vrot.lane.b32.xlu0 %v1324, 115
      %v1377 = vpop.permute.xlu0 %1376
      %vm1378 = vcmp.lt.s32.totalorder %v323, 115
      %v1379 = vsel %vm1378, %v1375, %v1377
      %v1380 = vsel %vm1378, %v1377, %v1375
      %s1381 = scalar_lea.vmem %s5, 16
      %v1382 = vld [vmem:[%s1381] sm:$0xff]
      %v1384 = vcombine.high %v1382, %v1382
      %v1386 = vmul.f32 %v1379, %v1382
      %v1387 = vmul.f32 %v1380, %v1384
      %v1388 = vadd.f32 %v1363, %v1386
      %v1389 = vadd.f32 %v1364, %v1387
      %s1390 = scalar_lea.vmem %s5, 264
      %v1391 = vld [vmem:[%s1390] sm:$0xff]
      %v1393 = vcombine.high %v1391, %v1391
      %v1395 = vmul.f32 %v1379, %v1391
      %v1396 = vmul.f32 %v1380, %v1393
      %v1397 = vadd.f32 %v1372, %v1395
      %v1398 = vadd.f32 %v1373, %v1396
      %1399 = vrot.lane.b32.xlu0 %v315, 116
      %v1400 = vpop.permute.xlu0 %1399
      %1401 = vrot.lane.b32.xlu0 %v1324, 116
      %v1402 = vpop.permute.xlu0 %1401
      %vm1403 = vcmp.lt.s32.totalorder %v323, 116
      %v1404 = vsel %vm1403, %v1400, %v1402
      %v1405 = vsel %vm1403, %v1402, %v1400
      %s1406 = scalar_lea.vmem %s5, 24
      %v1407 = vld [vmem:[%s1406] sm:$0xff]
      %v1409 = vcombine.high %v1407, %v1407
      %v1411 = vmul.f32 %v1404, %v1407
      %v1412 = vmul.f32 %v1405, %v1409
      %v1413 = vadd.f32 %v1388, %v1411
      %v1414 = vadd.f32 %v1389, %v1412
      %s1415 = scalar_lea.vmem %s5, 272
      %v1416 = vld [vmem:[%s1415] sm:$0xff]
      %v1418 = vcombine.high %v1416, %v1416
      %v1420 = vmul.f32 %v1404, %v1416
      %v1421 = vmul.f32 %v1405, %v1418
      %v1422 = vadd.f32 %v1397, %v1420
      %v1423 = vadd.f32 %v1398, %v1421
      %1424 = vrot.lane.b32.xlu0 %v315, 117
      %v1425 = vpop.permute.xlu0 %1424
      %1426 = vrot.lane.b32.xlu0 %v1324, 117
      %v1427 = vpop.permute.xlu0 %1426
      %vm1428 = vcmp.lt.s32.totalorder %v323, 117
      %v1429 = vsel %vm1428, %v1425, %v1427
      %v1430 = vsel %vm1428, %v1427, %v1425
      %s1431 = scalar_lea.vmem %s5, 32
      %v1432 = vld [vmem:[%s1431] sm:$0xff]
      %v1434 = vcombine.high %v1432, %v1432
      %v1436 = vmul.f32 %v1429, %v1432
      %v1437 = vmul.f32 %v1430, %v1434
      %v1438 = vadd.f32 %v1413, %v1436
      %v1439 = vadd.f32 %v1414, %v1437
      %s1440 = scalar_lea.vmem %s5, 280
      %v1441 = vld [vmem:[%s1440] sm:$0xff]
      %v1443 = vcombine.high %v1441, %v1441
      %v1445 = vmul.f32 %v1429, %v1441
      %v1446 = vmul.f32 %v1430, %v1443
      %v1447 = vadd.f32 %v1422, %v1445
      %v1448 = vadd.f32 %v1423, %v1446
      %1449 = vrot.lane.b32.xlu0 %v315, 118
      %v1450 = vpop.permute.xlu0 %1449
      %1451 = vrot.lane.b32.xlu0 %v1324, 118
      %v1452 = vpop.permute.xlu0 %1451
      %vm1453 = vcmp.lt.s32.totalorder %v323, 118
      %v1454 = vsel %vm1453, %v1450, %v1452
      %v1455 = vsel %vm1453, %v1452, %v1450
      %s1456 = scalar_lea.vmem %s5, 40
      %v1457 = vld [vmem:[%s1456] sm:$0xff]
      %v1459 = vcombine.high %v1457, %v1457
      %v1461 = vmul.f32 %v1454, %v1457
      %v1462 = vmul.f32 %v1455, %v1459
      %v1463 = vadd.f32 %v1438, %v1461
      %v1464 = vadd.f32 %v1439, %v1462
      %s1465 = scalar_lea.vmem %s5, 288
      %v1466 = vld [vmem:[%s1465] sm:$0xff]
      %v1468 = vcombine.high %v1466, %v1466
      %v1470 = vmul.f32 %v1454, %v1466
      %v1471 = vmul.f32 %v1455, %v1468
      %v1472 = vadd.f32 %v1447, %v1470
      %v1473 = vadd.f32 %v1448, %v1471
      %1474 = vrot.lane.b32.xlu0 %v315, 119
      %v1475 = vpop.permute.xlu0 %1474
      %1476 = vrot.lane.b32.xlu0 %v1324, 119
      %v1477 = vpop.permute.xlu0 %1476
      %vm1478 = vcmp.lt.s32.totalorder %v323, 119
      %v1479 = vsel %vm1478, %v1475, %v1477
      %v1480 = vsel %vm1478, %v1477, %v1475
      %s1481 = scalar_lea.vmem %s5, 48
      %v1482 = vld [vmem:[%s1481] sm:$0xff]
      %v1484 = vcombine.high %v1482, %v1482
      %v1486 = vmul.f32 %v1479, %v1482
      %v1487 = vmul.f32 %v1480, %v1484
      %v1488 = vadd.f32 %v1463, %v1486
      %v1489 = vadd.f32 %v1464, %v1487
      %s1490 = scalar_lea.vmem %s5, 296
      %v1491 = vld [vmem:[%s1490] sm:$0xff]
      %v1493 = vcombine.high %v1491, %v1491
      %v1495 = vmul.f32 %v1479, %v1491
      %v1496 = vmul.f32 %v1480, %v1493
      %v1497 = vadd.f32 %v1472, %v1495
      %v1498 = vadd.f32 %v1473, %v1496
      %1499 = vrot.lane.b32.xlu0 %v315, 120
      %v1500 = vpop.permute.xlu0 %1499
      %1501 = vrot.lane.b32.xlu0 %v1324, 120
      %v1502 = vpop.permute.xlu0 %1501
      %vm1503 = vcmp.lt.s32.totalorder %v323, 120
      %v1504 = vsel %vm1503, %v1500, %v1502
      %v1505 = vsel %vm1503, %v1502, %v1500
      %s1506 = scalar_lea.vmem %s5, 56
      %v1507 = vld [vmem:[%s1506] sm:$0xff]
      %v1509 = vcombine.high %v1507, %v1507
      %v1511 = vmul.f32 %v1504, %v1507
      %v1512 = vmul.f32 %v1505, %v1509
      %v1513 = vadd.f32 %v1488, %v1511
      %v1514 = vadd.f32 %v1489, %v1512
      %s1515 = scalar_lea.vmem %s5, 304
      %v1516 = vld [vmem:[%s1515] sm:$0xff]
      %v1518 = vcombine.high %v1516, %v1516
      %v1520 = vmul.f32 %v1504, %v1516
      %v1521 = vmul.f32 %v1505, %v1518
      %v1522 = vadd.f32 %v1497, %v1520
      %v1523 = vadd.f32 %v1498, %v1521
      %1524 = vrot.lane.b32.xlu0 %v315, 121
      %v1525 = vpop.permute.xlu0 %1524
      %1526 = vrot.lane.b32.xlu0 %v1324, 121
      %v1527 = vpop.permute.xlu0 %1526
      %vm1528 = vcmp.lt.s32.totalorder %v323, 121
      %v1529 = vsel %vm1528, %v1525, %v1527
      %v1530 = vsel %vm1528, %v1527, %v1525
      %s1531 = scalar_lea.vmem %s5, 64
      %v1532 = vld [vmem:[%s1531] sm:$0xff]
      %v1534 = vcombine.high %v1532, %v1532
      %v1536 = vmul.f32 %v1529, %v1532
      %v1537 = vmul.f32 %v1530, %v1534
      %v1538 = vadd.f32 %v1513, %v1536
      %v1539 = vadd.f32 %v1514, %v1537
      %s1540 = scalar_lea.vmem %s5, 312
      %v1541 = vld [vmem:[%s1540] sm:$0xff]
      %v1543 = vcombine.high %v1541, %v1541
      %v1545 = vmul.f32 %v1529, %v1541
      %v1546 = vmul.f32 %v1530, %v1543
      %v1547 = vadd.f32 %v1522, %v1545
      %v1548 = vadd.f32 %v1523, %v1546
      %1549 = vrot.lane.b32.xlu0 %v315, 122
      %v1550 = vpop.permute.xlu0 %1549
      %1551 = vrot.lane.b32.xlu0 %v1324, 122
      %v1552 = vpop.permute.xlu0 %1551
      %vm1553 = vcmp.lt.s32.totalorder %v323, 122
      %v1554 = vsel %vm1553, %v1550, %v1552
      %v1555 = vsel %vm1553, %v1552, %v1550
      %s1556 = scalar_lea.vmem %s5, 72
      %v1557 = vld [vmem:[%s1556] sm:$0xff]
      %v1559 = vcombine.high %v1557, %v1557
      %v1561 = vmul.f32 %v1554, %v1557
      %v1562 = vmul.f32 %v1555, %v1559
      %v1563 = vadd.f32 %v1538, %v1561
      %v1564 = vadd.f32 %v1539, %v1562
      %s1565 = scalar_lea.vmem %s5, 320
      %v1566 = vld [vmem:[%s1565] sm:$0xff]
      %v1568 = vcombine.high %v1566, %v1566
      %v1570 = vmul.f32 %v1554, %v1566
      %v1571 = vmul.f32 %v1555, %v1568
      %v1572 = vadd.f32 %v1547, %v1570
      %v1573 = vadd.f32 %v1548, %v1571
      %1574 = vrot.lane.b32.xlu0 %v315, 123
      %v1575 = vpop.permute.xlu0 %1574
      %1576 = vrot.lane.b32.xlu0 %v1324, 123
      %v1577 = vpop.permute.xlu0 %1576
      %vm1578 = vcmp.lt.s32.totalorder %v323, 123
      %v1579 = vsel %vm1578, %v1575, %v1577
      %v1580 = vsel %vm1578, %v1577, %v1575
      %s1581 = scalar_lea.vmem %s5, 80
      %v1582 = vld [vmem:[%s1581] sm:$0xff]
      %v1584 = vcombine.high %v1582, %v1582
      %v1586 = vmul.f32 %v1579, %v1582
      %v1587 = vmul.f32 %v1580, %v1584
      %v1588 = vadd.f32 %v1563, %v1586
      %v1589 = vadd.f32 %v1564, %v1587
      %s1590 = scalar_lea.vmem %s5, 328
      %v1591 = vld [vmem:[%s1590] sm:$0xff]
      %v1593 = vcombine.high %v1591, %v1591
      %v1595 = vmul.f32 %v1579, %v1591
      %v1596 = vmul.f32 %v1580, %v1593
      %v1597 = vadd.f32 %v1572, %v1595
      %v1598 = vadd.f32 %v1573, %v1596
      %1599 = vrot.lane.b32.xlu0 %v315, 124
      %v1600 = vpop.permute.xlu0 %1599
      %1601 = vrot.lane.b32.xlu0 %v1324, 124
      %v1602 = vpop.permute.xlu0 %1601
      %vm1603 = vcmp.lt.s32.totalorder %v323, 124
      %v1604 = vsel %vm1603, %v1600, %v1602
      %v1605 = vsel %vm1603, %v1602, %v1600
      %s1606 = scalar_lea.vmem %s5, 88
      %v1607 = vld [vmem:[%s1606] sm:$0xff]
      %v1609 = vcombine.high %v1607, %v1607
      %v1611 = vmul.f32 %v1604, %v1607
      %v1612 = vmul.f32 %v1605, %v1609
      %v1613 = vadd.f32 %v1588, %v1611
      %v1614 = vadd.f32 %v1589, %v1612
      %s1615 = scalar_lea.vmem %s5, 336
      %v1616 = vld [vmem:[%s1615] sm:$0xff]
      %v1618 = vcombine.high %v1616, %v1616
      %v1620 = vmul.f32 %v1604, %v1616
      %v1621 = vmul.f32 %v1605, %v1618
      %v1622 = vadd.f32 %v1597, %v1620
      %v1623 = vadd.f32 %v1598, %v1621
      %1624 = vrot.lane.b32.xlu0 %v315, 125
      %v1625 = vpop.permute.xlu0 %1624
      %1626 = vrot.lane.b32.xlu0 %v1324, 125
      %v1627 = vpop.permute.xlu0 %1626
      %vm1628 = vcmp.lt.s32.totalorder %v323, 125
      %v1629 = vsel %vm1628, %v1625, %v1627
      %v1630 = vsel %vm1628, %v1627, %v1625
      %s1631 = scalar_lea.vmem %s5, 96
      %v1632 = vld [vmem:[%s1631] sm:$0xff]
      %v1634 = vcombine.high %v1632, %v1632
      %v1636 = vmul.f32 %v1629, %v1632
      %v1637 = vmul.f32 %v1630, %v1634
      %v1638 = vadd.f32 %v1613, %v1636
      %v1639 = vadd.f32 %v1614, %v1637
      %s1640 = scalar_lea.vmem %s5, 344
      %v1641 = vld [vmem:[%s1640] sm:$0xff]
      %v1643 = vcombine.high %v1641, %v1641
      %v1645 = vmul.f32 %v1629, %v1641
      %v1646 = vmul.f32 %v1630, %v1643
      %v1647 = vadd.f32 %v1622, %v1645
      %v1648 = vadd.f32 %v1623, %v1646
      %1649 = vrot.lane.b32.xlu0 %v315, 126
      %v1650 = vpop.permute.xlu0 %1649
      %1651 = vrot.lane.b32.xlu0 %v1324, 126
      %v1652 = vpop.permute.xlu0 %1651
      %vm1653 = vcmp.lt.s32.totalorder %v323, 126
      %v1654 = vsel %vm1653, %v1650, %v1652
      %v1655 = vsel %vm1653, %v1652, %v1650
      %s1656 = scalar_lea.vmem %s5, 104
      %v1657 = vld [vmem:[%s1656] sm:$0xff]
      %v1659 = vcombine.high %v1657, %v1657
      %v1661 = vmul.f32 %v1654, %v1657
      %v1662 = vmul.f32 %v1655, %v1659
      %v1663 = vadd.f32 %v1638, %v1661
      %v1664 = vadd.f32 %v1639, %v1662
      %s1665 = scalar_lea.vmem %s5, 352
      %v1666 = vld [vmem:[%s1665] sm:$0xff]
      %v1668 = vcombine.high %v1666, %v1666
      %v1670 = vmul.f32 %v1654, %v1666
      %v1671 = vmul.f32 %v1655, %v1668
      %v1672 = vadd.f32 %v1647, %v1670
      %v1673 = vadd.f32 %v1648, %v1671
      %1674 = vrot.lane.b32.xlu0 %v315, 127
      %v1675 = vpop.permute.xlu0 %1674
      %1676 = vrot.lane.b32.xlu0 %v1324, 127
      %v1677 = vpop.permute.xlu0 %1676
      %v1678 = vsel %vm861, %v1675, %v1677
      %v1679 = vsel %vm861, %v1677, %v1675
      %s1680 = scalar_lea.vmem %s5, 112
      %v1681 = vld [vmem:[%s1680] sm:$0xff]
      %v1683 = vcombine.high %v1681, %v1681
      %v1685 = vmul.f32 %v1678, %v1681
      %v1686 = vmul.f32 %v1679, %v1683
      %v1687 = vadd.f32 %v1663, %v1685
      %v1688 = vadd.f32 %v1664, %v1686
      %s1689 = scalar_lea.vmem %s5, 360
      %v1690 = vld [vmem:[%s1689] sm:$0xff]
      %v1692 = vcombine.high %v1690, %v1690
      %v1694 = vmul.f32 %v1678, %v1690
      %v1695 = vmul.f32 %v1679, %v1692
      %v1696 = vadd.f32 %v1672, %v1694
      %v1697 = vadd.f32 %v1673, %v1695
      %s1698 = scalar_lea.vmem %s5, 120
      %v1699 = vld [vmem:[%s1698] sm:$0xff]
      %v1700 = vmul.f32 %v315, %v1699
      %v1702 = vcombine.high %v1700, %v1700
      %v1704 = vadd.f32 %v1687, %v1700
      %v1705 = vadd.f32 %v1688, %v1702
      %s1706 = scalar_lea.vmem %s5, 368
      %v1707 = vld [vmem:[%s1706] sm:$0xff]
      %v1708 = vmul.f32 %v315, %v1707
      %v1710 = vcombine.high %v1708, %v1708
      %v1712 = vadd.f32 %v1696, %v1708
      %v1713 = vadd.f32 %v1697, %v1710
      %1714 = vrot.lane.b32.xlu0 %v315, 1
      %v1715 = vpop.permute.xlu0 %1714
      %1716 = vrot.lane.b32.xlu0 %v1324, 1
      %v1717 = vpop.permute.xlu0 %1716
      %v1718 = vsel %vm644, %v1715, %v1717
      %v1719 = vsel %vm644, %v1717, %v1715
      %s1720 = scalar_lea.vmem %s5, 128
      %v1721 = vld [vmem:[%s1720] sm:$0xff]
      %v1723 = vcombine.high %v1721, %v1721
      %v1725 = vmul.f32 %v1719, %v1721
      %v1726 = vmul.f32 %v1718, %v1723
      %v1727 = vadd.f32 %v1704, %v1725
      %v1728 = vadd.f32 %v1705, %v1726
      %s1729 = scalar_lea.vmem %s5, 376
      %v1730 = vld [vmem:[%s1729] sm:$0xff]
      %v1732 = vcombine.high %v1730, %v1730
      %v1734 = vmul.f32 %v1719, %v1730
      %v1735 = vmul.f32 %v1718, %v1732
      %v1736 = vadd.f32 %v1712, %v1734
      %v1737 = vadd.f32 %v1713, %v1735
      %1738 = vrot.lane.b32.xlu0 %v315, 2
      %v1739 = vpop.permute.xlu0 %1738
      %1740 = vrot.lane.b32.xlu0 %v1324, 2
      %v1741 = vpop.permute.xlu0 %1740
      %vm1742 = vcmp.lt.s32.totalorder %v323, 2
      %v1743 = vsel %vm1742, %v1739, %v1741
      %v1744 = vsel %vm1742, %v1741, %v1739
      %s1745 = scalar_lea.vmem %s5, 136
      %v1746 = vld [vmem:[%s1745] sm:$0xff]
      %v1748 = vcombine.high %v1746, %v1746
      %v1750 = vmul.f32 %v1744, %v1746
      %v1751 = vmul.f32 %v1743, %v1748
      %v1752 = vadd.f32 %v1727, %v1750
      %v1753 = vadd.f32 %v1728, %v1751
      %s1754 = scalar_lea.vmem %s5, 384
      %v1755 = vld [vmem:[%s1754] sm:$0xff]
      %v1757 = vcombine.high %v1755, %v1755
      %v1759 = vmul.f32 %v1744, %v1755
      %v1760 = vmul.f32 %v1743, %v1757
      %v1761 = vadd.f32 %v1736, %v1759
      %v1762 = vadd.f32 %v1737, %v1760
      %1763 = vrot.lane.b32.xlu0 %v315, 3
      %v1764 = vpop.permute.xlu0 %1763
      %1765 = vrot.lane.b32.xlu0 %v1324, 3
      %v1766 = vpop.permute.xlu0 %1765
      %vm1767 = vcmp.lt.s32.totalorder %v323, 3
      %v1768 = vsel %vm1767, %v1764, %v1766
      %v1769 = vsel %vm1767, %v1766, %v1764
      %s1770 = scalar_lea.vmem %s5, 144
      %v1771 = vld [vmem:[%s1770] sm:$0xff]
      %v1773 = vcombine.high %v1771, %v1771
      %v1775 = vmul.f32 %v1769, %v1771
      %v1776 = vmul.f32 %v1768, %v1773
      %v1777 = vadd.f32 %v1752, %v1775
      %v1778 = vadd.f32 %v1753, %v1776
      %s1779 = scalar_lea.vmem %s5, 392
      %v1780 = vld [vmem:[%s1779] sm:$0xff]
      %v1782 = vcombine.high %v1780, %v1780
      %v1784 = vmul.f32 %v1769, %v1780
      %v1785 = vmul.f32 %v1768, %v1782
      %v1786 = vadd.f32 %v1761, %v1784
      %v1787 = vadd.f32 %v1762, %v1785
      %1788 = vrot.lane.b32.xlu0 %v315, 4
      %v1789 = vpop.permute.xlu0 %1788
      %1790 = vrot.lane.b32.xlu0 %v1324, 4
      %v1791 = vpop.permute.xlu0 %1790
      %vm1792 = vcmp.lt.s32.totalorder %v323, 4
      %v1793 = vsel %vm1792, %v1789, %v1791
      %v1794 = vsel %vm1792, %v1791, %v1789
      %s1795 = scalar_lea.vmem %s5, 152
      %v1796 = vld [vmem:[%s1795] sm:$0xff]
      %v1798 = vcombine.high %v1796, %v1796
      %v1800 = vmul.f32 %v1794, %v1796
      %v1801 = vmul.f32 %v1793, %v1798
      %v1802 = vadd.f32 %v1777, %v1800
      %v1803 = vadd.f32 %v1778, %v1801
      %s1804 = scalar_lea.vmem %s5, 400
      %v1805 = vld [vmem:[%s1804] sm:$0xff]
      %v1807 = vcombine.high %v1805, %v1805
      %v1809 = vmul.f32 %v1794, %v1805
      %v1810 = vmul.f32 %v1793, %v1807
      %v1811 = vadd.f32 %v1786, %v1809
      %v1812 = vadd.f32 %v1787, %v1810
      %1813 = vrot.lane.b32.xlu0 %v315, 5
      %v1814 = vpop.permute.xlu0 %1813
      %1815 = vrot.lane.b32.xlu0 %v1324, 5
      %v1816 = vpop.permute.xlu0 %1815
      %vm1817 = vcmp.lt.s32.totalorder %v323, 5
      %v1818 = vsel %vm1817, %v1814, %v1816
      %v1819 = vsel %vm1817, %v1816, %v1814
      %s1820 = scalar_lea.vmem %s5, 160
      %v1821 = vld [vmem:[%s1820] sm:$0xff]
      %v1823 = vcombine.high %v1821, %v1821
      %v1825 = vmul.f32 %v1819, %v1821
      %v1826 = vmul.f32 %v1818, %v1823
      %v1827 = vadd.f32 %v1802, %v1825
      %v1828 = vadd.f32 %v1803, %v1826
      %s1829 = scalar_lea.vmem %s5, 408
      %v1830 = vld [vmem:[%s1829] sm:$0xff]
      %v1832 = vcombine.high %v1830, %v1830
      %v1834 = vmul.f32 %v1819, %v1830
      %v1835 = vmul.f32 %v1818, %v1832
      %v1836 = vadd.f32 %v1811, %v1834
      %v1837 = vadd.f32 %v1812, %v1835
      %1838 = vrot.lane.b32.xlu0 %v315, 6
      %v1839 = vpop.permute.xlu0 %1838
      %1840 = vrot.lane.b32.xlu0 %v1324, 6
      %v1841 = vpop.permute.xlu0 %1840
      %vm1842 = vcmp.lt.s32.totalorder %v323, 6
      %v1843 = vsel %vm1842, %v1839, %v1841
      %v1844 = vsel %vm1842, %v1841, %v1839
      %s1845 = scalar_lea.vmem %s5, 168
      %v1846 = vld [vmem:[%s1845] sm:$0xff]
      %v1848 = vcombine.high %v1846, %v1846
      %v1850 = vmul.f32 %v1844, %v1846
      %v1851 = vmul.f32 %v1843, %v1848
      %v1852 = vadd.f32 %v1827, %v1850
      %v1853 = vadd.f32 %v1828, %v1851
      %s1854 = scalar_lea.vmem %s5, 416
      %v1855 = vld [vmem:[%s1854] sm:$0xff]
      %v1857 = vcombine.high %v1855, %v1855
      %v1859 = vmul.f32 %v1844, %v1855
      %v1860 = vmul.f32 %v1843, %v1857
      %v1861 = vadd.f32 %v1836, %v1859
      %v1862 = vadd.f32 %v1837, %v1860
      %1863 = vrot.lane.b32.xlu0 %v315, 7
      %v1864 = vpop.permute.xlu0 %1863
      %1865 = vrot.lane.b32.xlu0 %v1324, 7
      %v1866 = vpop.permute.xlu0 %1865
      %vm1867 = vcmp.lt.s32.totalorder %v323, 7
      %v1868 = vsel %vm1867, %v1864, %v1866
      %v1869 = vsel %vm1867, %v1866, %v1864
      %s1870 = scalar_lea.vmem %s5, 176
      %v1871 = vld [vmem:[%s1870] sm:$0xff]
      %v1873 = vcombine.high %v1871, %v1871
      %v1875 = vmul.f32 %v1869, %v1871
      %v1876 = vmul.f32 %v1868, %v1873
      %v1877 = vadd.f32 %v1852, %v1875
      %v1878 = vadd.f32 %v1853, %v1876
      %s1879 = scalar_lea.vmem %s5, 424
      %v1880 = vld [vmem:[%s1879] sm:$0xff]
      %v1882 = vcombine.high %v1880, %v1880
      %v1884 = vmul.f32 %v1869, %v1880
      %v1885 = vmul.f32 %v1868, %v1882
      %v1886 = vadd.f32 %v1861, %v1884
      %v1887 = vadd.f32 %v1862, %v1885
      %1888 = vrot.lane.b32.xlu0 %v315, 8
      %v1889 = vpop.permute.xlu0 %1888
      %1890 = vrot.lane.b32.xlu0 %v1324, 8
      %v1891 = vpop.permute.xlu0 %1890
      %vm1892 = vcmp.lt.s32.totalorder %v323, 8
      %v1893 = vsel %vm1892, %v1889, %v1891
      %v1894 = vsel %vm1892, %v1891, %v1889
      %s1895 = scalar_lea.vmem %s5, 184
      %v1896 = vld [vmem:[%s1895] sm:$0xff]
      %v1898 = vcombine.high %v1896, %v1896
      %v1900 = vmul.f32 %v1894, %v1896
      %v1901 = vmul.f32 %v1893, %v1898
      %v1902 = vadd.f32 %v1877, %v1900
      %v1903 = vadd.f32 %v1878, %v1901
      %s1904 = scalar_lea.vmem %s5, 432
      %v1905 = vld [vmem:[%s1904] sm:$0xff]
      %v1907 = vcombine.high %v1905, %v1905
      %v1909 = vmul.f32 %v1894, %v1905
      %v1910 = vmul.f32 %v1893, %v1907
      %v1911 = vadd.f32 %v1886, %v1909
      %v1912 = vadd.f32 %v1887, %v1910
      %1913 = vrot.lane.b32.xlu0 %v315, 9
      %v1914 = vpop.permute.xlu0 %1913
      %1915 = vrot.lane.b32.xlu0 %v1324, 9
      %v1916 = vpop.permute.xlu0 %1915
      %vm1917 = vcmp.lt.s32.totalorder %v323, 9
      %v1918 = vsel %vm1917, %v1914, %v1916
      %v1919 = vsel %vm1917, %v1916, %v1914
      %s1920 = scalar_lea.vmem %s5, 192
      %v1921 = vld [vmem:[%s1920] sm:$0xff]
      %v1923 = vcombine.high %v1921, %v1921
      %v1925 = vmul.f32 %v1919, %v1921
      %v1926 = vmul.f32 %v1918, %v1923
      %v1927 = vadd.f32 %v1902, %v1925
      %v1928 = vadd.f32 %v1903, %v1926
      %s1929 = scalar_lea.vmem %s5, 440
      %v1930 = vld [vmem:[%s1929] sm:$0xff]
      %v1932 = vcombine.high %v1930, %v1930
      %v1934 = vmul.f32 %v1919, %v1930
      %v1935 = vmul.f32 %v1918, %v1932
      %v1936 = vadd.f32 %v1911, %v1934
      %v1937 = vadd.f32 %v1912, %v1935
      %1938 = vrot.lane.b32.xlu0 %v315, 10
      %v1939 = vpop.permute.xlu0 %1938
      %1940 = vrot.lane.b32.xlu0 %v1324, 10
      %v1941 = vpop.permute.xlu0 %1940
      %vm1942 = vcmp.lt.s32.totalorder %v323, 10
      %v1943 = vsel %vm1942, %v1939, %v1941
      %v1944 = vsel %vm1942, %v1941, %v1939
      %s1945 = scalar_lea.vmem %s5, 200
      %v1946 = vld [vmem:[%s1945] sm:$0xff]
      %v1948 = vcombine.high %v1946, %v1946
      %v1950 = vmul.f32 %v1944, %v1946
      %v1951 = vmul.f32 %v1943, %v1948
      %v1952 = vadd.f32 %v1927, %v1950
      %v1953 = vadd.f32 %v1928, %v1951
      %s1954 = scalar_lea.vmem %s5, 448
      %v1955 = vld [vmem:[%s1954] sm:$0xff]
      %v1957 = vcombine.high %v1955, %v1955
      %v1959 = vmul.f32 %v1944, %v1955
      %v1960 = vmul.f32 %v1943, %v1957
      %v1961 = vadd.f32 %v1936, %v1959
      %v1962 = vadd.f32 %v1937, %v1960
      %1963 = vrot.lane.b32.xlu0 %v315, 11
      %v1964 = vpop.permute.xlu0 %1963
      %1965 = vrot.lane.b32.xlu0 %v1324, 11
      %v1966 = vpop.permute.xlu0 %1965
      %vm1967 = vcmp.lt.s32.totalorder %v323, 11
      %v1968 = vsel %vm1967, %v1964, %v1966
      %v1969 = vsel %vm1967, %v1966, %v1964
      %s1970 = scalar_lea.vmem %s5, 208
      %v1971 = vld [vmem:[%s1970] sm:$0xff]
      %v1973 = vcombine.high %v1971, %v1971
      %v1975 = vmul.f32 %v1969, %v1971
      %v1976 = vmul.f32 %v1968, %v1973
      %v1977 = vadd.f32 %v1952, %v1975
      %v1978 = vadd.f32 %v1953, %v1976
      %s1979 = scalar_lea.vmem %s5, 456
      %v1980 = vld [vmem:[%s1979] sm:$0xff]
      %v1982 = vcombine.high %v1980, %v1980
      %v1984 = vmul.f32 %v1969, %v1980
      %v1985 = vmul.f32 %v1968, %v1982
      %v1986 = vadd.f32 %v1961, %v1984
      %v1987 = vadd.f32 %v1962, %v1985
      %1988 = vrot.lane.b32.xlu0 %v315, 12
      %v1989 = vpop.permute.xlu0 %1988
      %1990 = vrot.lane.b32.xlu0 %v1324, 12
      %v1991 = vpop.permute.xlu0 %1990
      %vm1992 = vcmp.lt.s32.totalorder %v323, 12
      %v1993 = vsel %vm1992, %v1989, %v1991
      %v1994 = vsel %vm1992, %v1991, %v1989
      %s1995 = scalar_lea.vmem %s5, 216
      %v1996 = vld [vmem:[%s1995] sm:$0xff]
      %v1998 = vcombine.high %v1996, %v1996
      %v2000 = vmul.f32 %v1994, %v1996
      %v2001 = vmul.f32 %v1993, %v1998
      %v2002 = vadd.f32 %v1977, %v2000
      %v2003 = vadd.f32 %v1978, %v2001
      %s2004 = scalar_lea.vmem %s5, 464
      %v2005 = vld [vmem:[%s2004] sm:$0xff]
      %v2007 = vcombine.high %v2005, %v2005
      %v2009 = vmul.f32 %v1994, %v2005
      %v2010 = vmul.f32 %v1993, %v2007
      %v2011 = vadd.f32 %v1986, %v2009
      %v2012 = vadd.f32 %v1987, %v2010
      %2013 = vrot.lane.b32.xlu0 %v315, 13
      %v2014 = vpop.permute.xlu0 %2013
      %2015 = vrot.lane.b32.xlu0 %v1324, 13
      %v2016 = vpop.permute.xlu0 %2015
      %vm2017 = vcmp.lt.s32.totalorder %v323, 13
      %v2018 = vsel %vm2017, %v2014, %v2016
      %v2019 = vsel %vm2017, %v2016, %v2014
      %s2020 = scalar_lea.vmem %s5, 224
      %v2021 = vld [vmem:[%s2020] sm:$0xff]
      %v2023 = vcombine.high %v2021, %v2021
      %v2025 = vmul.f32 %v2019, %v2021
      %v2026 = vmul.f32 %v2018, %v2023
      %v2027 = vadd.f32 %v2002, %v2025
      %v2028 = vadd.f32 %v2003, %v2026
      %s2029 = scalar_lea.vmem %s5, 472
      %v2030 = vld [vmem:[%s2029] sm:$0xff]
      %v2032 = vcombine.high %v2030, %v2030
      %v2034 = vmul.f32 %v2019, %v2030
      %v2035 = vmul.f32 %v2018, %v2032
      %v2036 = vadd.f32 %v2011, %v2034
      %v2037 = vadd.f32 %v2012, %v2035
      %2038 = vrot.lane.b32.xlu0 %v315, 14
      %v2039 = vpop.permute.xlu0 %2038
      %2040 = vrot.lane.b32.xlu0 %v1324, 14
      %v2041 = vpop.permute.xlu0 %2040
      %vm2042 = vcmp.lt.s32.totalorder %v323, 14
      %v2043 = vsel %vm2042, %v2039, %v2041
      %v2044 = vsel %vm2042, %v2041, %v2039
      %s2045 = scalar_lea.vmem %s5, 232
      %v2046 = vld [vmem:[%s2045] sm:$0xff]
      %v2048 = vcombine.high %v2046, %v2046
      %v2050 = vmul.f32 %v2044, %v2046
      %v2051 = vmul.f32 %v2043, %v2048
      %v2052 = vadd.f32 %v2027, %v2050
      %v2053 = vadd.f32 %v2028, %v2051
      %s2054 = scalar_lea.vmem %s5, 480
      %v2055 = vld [vmem:[%s2054] sm:$0xff]
      %v2057 = vcombine.high %v2055, %v2055
      %v2059 = vmul.f32 %v2044, %v2055
      %v2060 = vmul.f32 %v2043, %v2057
      %v2061 = vadd.f32 %v2036, %v2059
      %v2062 = vadd.f32 %v2037, %v2060
      %2063 = vrot.lane.b32.xlu0 %v315, 15
      %v2064 = vpop.permute.xlu0 %2063
      %2065 = vrot.lane.b32.xlu0 %v1324, 15
      %v2066 = vpop.permute.xlu0 %2065
      %v2067 = vsel %vm532, %v2064, %v2066
      %v2068 = vsel %vm532, %v2066, %v2064
      %s2069 = scalar_lea.vmem %s5, 240
      %v2070 = vld [vmem:[%s2069] sm:$0xff]
      %v2072 = vcombine.high %v2070, %v2070
      %v2074 = vmul.f32 %v2068, %v2070
      %v2075 = vmul.f32 %v2067, %v2072
      %v2076 = vadd.f32 %v2052, %v2074
      %v2077 = vadd.f32 %v2053, %v2075
      %s2078 = scalar_lea.vmem %s5, 488
      %v2079 = vld [vmem:[%s2078] sm:$0xff]
      %v2081 = vcombine.high %v2079, %v2079
      %v2083 = vmul.f32 %v2068, %v2079
      %v2084 = vmul.f32 %v2067, %v2081
      %v2085 = vadd.f32 %v2061, %v2083
      %v2086 = vadd.f32 %v2062, %v2084
      %v2087 = vadd.f32 %v1319, %v2076
      %v2088 = vadd.f32 %v1320, %v2077
      %v2089 = vxor.u32 %v2087, 2147483648
      %v2090 = vxor.u32 %v2088, 2147483648
      %v2091 = vmul.f32 %v2089, 1.442695
      %v2092 = vpow.pop %v2091
      %v2093 = vmul.f32 %v2090, 1.442695
      %v2094 = vpow.pop %v2093
      %v2095 = vadd.f32 %v2092, 1.0
      %v2096 = vadd.f32 %v2094, 1.0
      %v2097 = vrcp.pop %v2095
      %v2098 = vmul.f32 1.0, %v2097
      %v2099 = vrcp.pop %v2096
      %v2100 = vmul.f32 1.0, %v2099
      %v2101 = vadd.f32 %v1321, %v2085
      %v2102 = vadd.f32 %v1322, %v2086
      %v2103 = vadd.f32 %v2101, 1.0
      %v2104 = vadd.f32 %v2102, 1.0
      %v2105 = vxor.u32 %v2103, 2147483648
      %v2106 = vxor.u32 %v2104, 2147483648
      %v2107 = vmul.f32 %v2105, 1.442695
      %v2108 = vpow.pop %v2107
      %v2109 = vmul.f32 %v2106, 1.442695
      %v2110 = vpow.pop %v2109
      %v2111 = vadd.f32 %v2108, 1.0
      %v2112 = vadd.f32 %v2110, 1.0
      %v2113 = vrcp.pop %v2111
      %v2114 = vmul.f32 1.0, %v2113
      %v2115 = vrcp.pop %v2112
      %v2116 = vmul.f32 1.0, %v2115
      %v2117 = vtanh.pop %v1319
      %v2118 = vtanh.pop %v1320
      %v2119 = vmul.f32 %v2114, %v315
      %v2120 = vmul.f32 %v2116, %v1324
      %v2123 = vrot.slane %v2117, 4
      %v2124 = vrot.slane %v2118, 4
      %v2127 = vmul.f32 %v2098, %v2123
      %v2128 = vmul.f32 %v2100, %v2124
      %v2129 = vadd.f32 %v2119, %v2127
      %v2130 = vadd.f32 %v2120, %v2128
      %2131 = vrot.lane.b32.xlu0 %v2129, 113
      %v2132 = vpop.permute.xlu0 %2131
      %2133 = vrot.lane.b32.xlu0 %v2130, 113
      %v2134 = vpop.permute.xlu0 %2133
      %v2135 = vsel %vm973, %v2132, %v2134
      %v2136 = vsel %vm973, %v2134, %v2132
      %s2137 = scalar_lea.vmem %s5, 496
      %v2138 = vld [vmem:[%s2137] sm:$0xff]
      %v2140 = vcombine.high %v2138, %v2138
      %v2142 = vmul.f32 %v2135, %v2138
      %v2143 = vmul.f32 %v2136, %v2140
      %v2144 = vadd.f32 %v2142, 0.0
      %v2145 = vadd.f32 %v2143, 0.0
      %2146 = vrot.lane.b32.xlu0 %v2129, 114
      %v2147 = vpop.permute.xlu0 %2146
      %2148 = vrot.lane.b32.xlu0 %v2130, 114
      %v2149 = vpop.permute.xlu0 %2148
      %v2150 = vsel %vm1353, %v2147, %v2149
      %v2151 = vsel %vm1353, %v2149, %v2147
      %s2152 = scalar_lea.vmem %s5, 504
      %v2153 = vld [vmem:[%s2152] sm:$0xff]
      %v2155 = vcombine.high %v2153, %v2153
      %v2157 = vmul.f32 %v2150, %v2153
      %v2158 = vmul.f32 %v2151, %v2155
      %v2159 = vadd.f32 %v2144, %v2157
      %v2160 = vadd.f32 %v2145, %v2158
      %2161 = vrot.lane.b32.xlu0 %v2129, 115
      %v2162 = vpop.permute.xlu0 %2161
      %2163 = vrot.lane.b32.xlu0 %v2130, 115
      %v2164 = vpop.permute.xlu0 %2163
      %v2165 = vsel %vm1378, %v2162, %v2164
      %v2166 = vsel %vm1378, %v2164, %v2162
      %s2167 = scalar_lea.vmem %s5, 512
      %v2168 = vld [vmem:[%s2167] sm:$0xff]
      %v2170 = vcombine.high %v2168, %v2168
      %v2172 = vmul.f32 %v2165, %v2168
      %v2173 = vmul.f32 %v2166, %v2170
      %v2174 = vadd.f32 %v2159, %v2172
      %v2175 = vadd.f32 %v2160, %v2173
      %2176 = vrot.lane.b32.xlu0 %v2129, 116
      %v2177 = vpop.permute.xlu0 %2176
      %2178 = vrot.lane.b32.xlu0 %v2130, 116
      %v2179 = vpop.permute.xlu0 %2178
      %v2180 = vsel %vm1403, %v2177, %v2179
      %v2181 = vsel %vm1403, %v2179, %v2177
      %s2182 = scalar_lea.vmem %s5, 520
      %v2183 = vld [vmem:[%s2182] sm:$0xff]
      %v2185 = vcombine.high %v2183, %v2183
      %v2187 = vmul.f32 %v2180, %v2183
      %v2188 = vmul.f32 %v2181, %v2185
      %v2189 = vadd.f32 %v2174, %v2187
      %v2190 = vadd.f32 %v2175, %v2188
      %2191 = vrot.lane.b32.xlu0 %v2129, 117
      %v2192 = vpop.permute.xlu0 %2191
      %2193 = vrot.lane.b32.xlu0 %v2130, 117
      %v2194 = vpop.permute.xlu0 %2193
      %v2195 = vsel %vm1428, %v2192, %v2194
      %v2196 = vsel %vm1428, %v2194, %v2192
      %s2197 = scalar_lea.vmem %s5, 528
      %v2198 = vld [vmem:[%s2197] sm:$0xff]
      %v2200 = vcombine.high %v2198, %v2198
      %v2202 = vmul.f32 %v2195, %v2198
      %v2203 = vmul.f32 %v2196, %v2200
      %v2204 = vadd.f32 %v2189, %v2202
      %v2205 = vadd.f32 %v2190, %v2203
      %2206 = vrot.lane.b32.xlu0 %v2129, 118
      %v2207 = vpop.permute.xlu0 %2206
      %2208 = vrot.lane.b32.xlu0 %v2130, 118
      %v2209 = vpop.permute.xlu0 %2208
      %v2210 = vsel %vm1453, %v2207, %v2209
      %v2211 = vsel %vm1453, %v2209, %v2207
      %s2212 = scalar_lea.vmem %s5, 536
      %v2213 = vld [vmem:[%s2212] sm:$0xff]
      %v2215 = vcombine.high %v2213, %v2213
      %v2217 = vmul.f32 %v2210, %v2213
      %v2218 = vmul.f32 %v2211, %v2215
      %v2219 = vadd.f32 %v2204, %v2217
      %v2220 = vadd.f32 %v2205, %v2218
      %2221 = vrot.lane.b32.xlu0 %v2129, 119
      %v2222 = vpop.permute.xlu0 %2221
      %2223 = vrot.lane.b32.xlu0 %v2130, 119
      %v2224 = vpop.permute.xlu0 %2223
      %v2225 = vsel %vm1478, %v2222, %v2224
      %v2226 = vsel %vm1478, %v2224, %v2222
      %s2227 = scalar_lea.vmem %s5, 544
      %v2228 = vld [vmem:[%s2227] sm:$0xff]
      %v2230 = vcombine.high %v2228, %v2228
      %v2232 = vmul.f32 %v2225, %v2228
      %v2233 = vmul.f32 %v2226, %v2230
      %v2234 = vadd.f32 %v2219, %v2232
      %v2235 = vadd.f32 %v2220, %v2233
      %2236 = vrot.lane.b32.xlu0 %v2129, 120
      %v2237 = vpop.permute.xlu0 %2236
      %2238 = vrot.lane.b32.xlu0 %v2130, 120
      %v2239 = vpop.permute.xlu0 %2238
      %v2240 = vsel %vm1503, %v2237, %v2239
      %v2241 = vsel %vm1503, %v2239, %v2237
      %s2242 = scalar_lea.vmem %s5, 552
      %v2243 = vld [vmem:[%s2242] sm:$0xff]
      %v2245 = vcombine.high %v2243, %v2243
      %v2247 = vmul.f32 %v2240, %v2243
      %v2248 = vmul.f32 %v2241, %v2245
      %v2249 = vadd.f32 %v2234, %v2247
      %v2250 = vadd.f32 %v2235, %v2248
      %2251 = vrot.lane.b32.xlu0 %v2129, 121
      %v2252 = vpop.permute.xlu0 %2251
      %2253 = vrot.lane.b32.xlu0 %v2130, 121
      %v2254 = vpop.permute.xlu0 %2253
      %v2255 = vsel %vm1528, %v2252, %v2254
      %v2256 = vsel %vm1528, %v2254, %v2252
      %s2257 = scalar_lea.vmem %s5, 560
      %v2258 = vld [vmem:[%s2257] sm:$0xff]
      %v2260 = vcombine.high %v2258, %v2258
      %v2262 = vmul.f32 %v2255, %v2258
      %v2263 = vmul.f32 %v2256, %v2260
      %v2264 = vadd.f32 %v2249, %v2262
      %v2265 = vadd.f32 %v2250, %v2263
      %2266 = vrot.lane.b32.xlu0 %v2129, 122
      %v2267 = vpop.permute.xlu0 %2266
      %2268 = vrot.lane.b32.xlu0 %v2130, 122
      %v2269 = vpop.permute.xlu0 %2268
      %v2270 = vsel %vm1553, %v2267, %v2269
      %v2271 = vsel %vm1553, %v2269, %v2267
      %s2272 = scalar_lea.vmem %s5, 568
      %v2273 = vld [vmem:[%s2272] sm:$0xff]
      %v2275 = vcombine.high %v2273, %v2273
      %v2277 = vmul.f32 %v2270, %v2273
      %v2278 = vmul.f32 %v2271, %v2275
      %v2279 = vadd.f32 %v2264, %v2277
      %v2280 = vadd.f32 %v2265, %v2278
      %2281 = vrot.lane.b32.xlu0 %v2129, 123
      %v2282 = vpop.permute.xlu0 %2281
      %2283 = vrot.lane.b32.xlu0 %v2130, 123
      %v2284 = vpop.permute.xlu0 %2283
      %v2285 = vsel %vm1578, %v2282, %v2284
      %v2286 = vsel %vm1578, %v2284, %v2282
      %s2287 = scalar_lea.vmem %s5, 576
      %v2288 = vld [vmem:[%s2287] sm:$0xff]
      %v2290 = vcombine.high %v2288, %v2288
      %v2292 = vmul.f32 %v2285, %v2288
      %v2293 = vmul.f32 %v2286, %v2290
      %v2294 = vadd.f32 %v2279, %v2292
      %v2295 = vadd.f32 %v2280, %v2293
      %2296 = vrot.lane.b32.xlu0 %v2129, 124
      %v2297 = vpop.permute.xlu0 %2296
      %2298 = vrot.lane.b32.xlu0 %v2130, 124
      %v2299 = vpop.permute.xlu0 %2298
      %v2300 = vsel %vm1603, %v2297, %v2299
      %v2301 = vsel %vm1603, %v2299, %v2297
      %s2302 = scalar_lea.vmem %s5, 584
      %v2303 = vld [vmem:[%s2302] sm:$0xff]
      %v2305 = vcombine.high %v2303, %v2303
      %v2307 = vmul.f32 %v2300, %v2303
      %v2308 = vmul.f32 %v2301, %v2305
      %v2309 = vadd.f32 %v2294, %v2307
      %v2310 = vadd.f32 %v2295, %v2308
      %2311 = vrot.lane.b32.xlu0 %v2129, 125
      %v2312 = vpop.permute.xlu0 %2311
      %2313 = vrot.lane.b32.xlu0 %v2130, 125
      %v2314 = vpop.permute.xlu0 %2313
      %v2315 = vsel %vm1628, %v2312, %v2314
      %v2316 = vsel %vm1628, %v2314, %v2312
      %s2317 = scalar_lea.vmem %s5, 592
      %v2318 = vld [vmem:[%s2317] sm:$0xff]
      %v2320 = vcombine.high %v2318, %v2318
      %v2322 = vmul.f32 %v2315, %v2318
      %v2323 = vmul.f32 %v2316, %v2320
      %v2324 = vadd.f32 %v2309, %v2322
      %v2325 = vadd.f32 %v2310, %v2323
      %2326 = vrot.lane.b32.xlu0 %v2129, 126
      %v2327 = vpop.permute.xlu0 %2326
      %2328 = vrot.lane.b32.xlu0 %v2130, 126
      %v2329 = vpop.permute.xlu0 %2328
      %v2330 = vsel %vm1653, %v2327, %v2329
      %v2331 = vsel %vm1653, %v2329, %v2327
      %s2332 = scalar_lea.vmem %s5, 600
      %v2333 = vld [vmem:[%s2332] sm:$0xff]
      %v2335 = vcombine.high %v2333, %v2333
      %v2337 = vmul.f32 %v2330, %v2333
      %v2338 = vmul.f32 %v2331, %v2335
      %v2339 = vadd.f32 %v2324, %v2337
      %v2340 = vadd.f32 %v2325, %v2338
      %2341 = vrot.lane.b32.xlu0 %v2129, 127
      %v2342 = vpop.permute.xlu0 %2341
      %2343 = vrot.lane.b32.xlu0 %v2130, 127
      %v2344 = vpop.permute.xlu0 %2343
      %v2345 = vsel %vm861, %v2342, %v2344
      %v2346 = vsel %vm861, %v2344, %v2342
      %s2347 = scalar_lea.vmem %s5, 608
      %v2348 = vld [vmem:[%s2347] sm:$0xff]
      %v2350 = vcombine.high %v2348, %v2348
      %v2352 = vmul.f32 %v2345, %v2348
      %v2353 = vmul.f32 %v2346, %v2350
      %v2354 = vadd.f32 %v2339, %v2352
      %v2355 = vadd.f32 %v2340, %v2353
      %s2356 = scalar_lea.vmem %s5, 616
      %v2357 = vld [vmem:[%s2356] sm:$0xff]
      %v2359 = vcombine.high %v2357, %v2357
      %v2361 = vmul.f32 %v2129, %v2357
      %v2362 = vmul.f32 %v2130, %v2359
      %v2363 = vadd.f32 %v2354, %v2361
      %v2364 = vadd.f32 %v2355, %v2362
      %2365 = vrot.lane.b32.xlu0 %v2129, 1
      %v2366 = vpop.permute.xlu0 %2365
      %2367 = vrot.lane.b32.xlu0 %v2130, 1
      %v2368 = vpop.permute.xlu0 %2367
      %v2369 = vsel %vm644, %v2366, %v2368
      %v2370 = vsel %vm644, %v2368, %v2366
      %s2371 = scalar_lea.vmem %s5, 624
      %v2372 = vld [vmem:[%s2371] sm:$0xff]
      %v2374 = vcombine.high %v2372, %v2372
      %v2376 = vmul.f32 %v2370, %v2372
      %v2377 = vmul.f32 %v2369, %v2374
      %v2378 = vadd.f32 %v2363, %v2376
      %v2379 = vadd.f32 %v2364, %v2377
      %2380 = vrot.lane.b32.xlu0 %v2129, 2
      %v2381 = vpop.permute.xlu0 %2380
      %2382 = vrot.lane.b32.xlu0 %v2130, 2
      %v2383 = vpop.permute.xlu0 %2382
      %v2384 = vsel %vm1742, %v2381, %v2383
      %v2385 = vsel %vm1742, %v2383, %v2381
      %s2386 = scalar_lea.vmem %s5, 632
      %v2387 = vld [vmem:[%s2386] sm:$0xff]
      %v2389 = vcombine.high %v2387, %v2387
      %v2391 = vmul.f32 %v2385, %v2387
      %v2392 = vmul.f32 %v2384, %v2389
      %v2393 = vadd.f32 %v2378, %v2391
      %v2394 = vadd.f32 %v2379, %v2392
      %2395 = vrot.lane.b32.xlu0 %v2129, 3
      %v2396 = vpop.permute.xlu0 %2395
      %2397 = vrot.lane.b32.xlu0 %v2130, 3
      %v2398 = vpop.permute.xlu0 %2397
      %v2399 = vsel %vm1767, %v2396, %v2398
      %v2400 = vsel %vm1767, %v2398, %v2396
      %s2401 = scalar_lea.vmem %s5, 640
      %v2402 = vld [vmem:[%s2401] sm:$0xff]
      %v2404 = vcombine.high %v2402, %v2402
      %v2406 = vmul.f32 %v2400, %v2402
      %v2407 = vmul.f32 %v2399, %v2404
      %v2408 = vadd.f32 %v2393, %v2406
      %v2409 = vadd.f32 %v2394, %v2407
      %2410 = vrot.lane.b32.xlu0 %v2129, 4
      %v2411 = vpop.permute.xlu0 %2410
      %2412 = vrot.lane.b32.xlu0 %v2130, 4
      %v2413 = vpop.permute.xlu0 %2412
      %v2414 = vsel %vm1792, %v2411, %v2413
      %v2415 = vsel %vm1792, %v2413, %v2411
      %s2416 = scalar_lea.vmem %s5, 648
      %v2417 = vld [vmem:[%s2416] sm:$0xff]
      %v2419 = vcombine.high %v2417, %v2417
      %v2421 = vmul.f32 %v2415, %v2417
      %v2422 = vmul.f32 %v2414, %v2419
      %v2423 = vadd.f32 %v2408, %v2421
      %v2424 = vadd.f32 %v2409, %v2422
      %2425 = vrot.lane.b32.xlu0 %v2129, 5
      %v2426 = vpop.permute.xlu0 %2425
      %2427 = vrot.lane.b32.xlu0 %v2130, 5
      %v2428 = vpop.permute.xlu0 %2427
      %v2429 = vsel %vm1817, %v2426, %v2428
      %v2430 = vsel %vm1817, %v2428, %v2426
      %s2431 = scalar_lea.vmem %s5, 656
      %v2432 = vld [vmem:[%s2431] sm:$0xff]
      %v2434 = vcombine.high %v2432, %v2432
      %v2436 = vmul.f32 %v2430, %v2432
      %v2437 = vmul.f32 %v2429, %v2434
      %v2438 = vadd.f32 %v2423, %v2436
      %v2439 = vadd.f32 %v2424, %v2437
      %2440 = vrot.lane.b32.xlu0 %v2129, 6
      %v2441 = vpop.permute.xlu0 %2440
      %2442 = vrot.lane.b32.xlu0 %v2130, 6
      %v2443 = vpop.permute.xlu0 %2442
      %v2444 = vsel %vm1842, %v2441, %v2443
      %v2445 = vsel %vm1842, %v2443, %v2441
      %s2446 = scalar_lea.vmem %s5, 664
      %v2447 = vld [vmem:[%s2446] sm:$0xff]
      %v2449 = vcombine.high %v2447, %v2447
      %v2451 = vmul.f32 %v2445, %v2447
      %v2452 = vmul.f32 %v2444, %v2449
      %v2453 = vadd.f32 %v2438, %v2451
      %v2454 = vadd.f32 %v2439, %v2452
      %2455 = vrot.lane.b32.xlu0 %v2129, 7
      %v2456 = vpop.permute.xlu0 %2455
      %2457 = vrot.lane.b32.xlu0 %v2130, 7
      %v2458 = vpop.permute.xlu0 %2457
      %v2459 = vsel %vm1867, %v2456, %v2458
      %v2460 = vsel %vm1867, %v2458, %v2456
      %s2461 = scalar_lea.vmem %s5, 672
      %v2462 = vld [vmem:[%s2461] sm:$0xff]
      %v2464 = vcombine.high %v2462, %v2462
      %v2466 = vmul.f32 %v2460, %v2462
      %v2467 = vmul.f32 %v2459, %v2464
      %v2468 = vadd.f32 %v2453, %v2466
      %v2469 = vadd.f32 %v2454, %v2467
      %2470 = vrot.lane.b32.xlu0 %v2129, 8
      %v2471 = vpop.permute.xlu0 %2470
      %2472 = vrot.lane.b32.xlu0 %v2130, 8
      %v2473 = vpop.permute.xlu0 %2472
      %v2474 = vsel %vm1892, %v2471, %v2473
      %v2475 = vsel %vm1892, %v2473, %v2471
      %s2476 = scalar_lea.vmem %s5, 680
      %v2477 = vld [vmem:[%s2476] sm:$0xff]
      %v2479 = vcombine.high %v2477, %v2477
      %v2481 = vmul.f32 %v2475, %v2477
      %v2482 = vmul.f32 %v2474, %v2479
      %v2483 = vadd.f32 %v2468, %v2481
      %v2484 = vadd.f32 %v2469, %v2482
      %2485 = vrot.lane.b32.xlu0 %v2129, 9
      %v2486 = vpop.permute.xlu0 %2485
      %2487 = vrot.lane.b32.xlu0 %v2130, 9
      %v2488 = vpop.permute.xlu0 %2487
      %v2489 = vsel %vm1917, %v2486, %v2488
      %v2490 = vsel %vm1917, %v2488, %v2486
      %s2491 = scalar_lea.vmem %s5, 688
      %v2492 = vld [vmem:[%s2491] sm:$0xff]
      %v2494 = vcombine.high %v2492, %v2492
      %v2496 = vmul.f32 %v2490, %v2492
      %v2497 = vmul.f32 %v2489, %v2494
      %v2498 = vadd.f32 %v2483, %v2496
      %v2499 = vadd.f32 %v2484, %v2497
      %2500 = vrot.lane.b32.xlu0 %v2129, 10
      %v2501 = vpop.permute.xlu0 %2500
      %2502 = vrot.lane.b32.xlu0 %v2130, 10
      %v2503 = vpop.permute.xlu0 %2502
      %v2504 = vsel %vm1942, %v2501, %v2503
      %v2505 = vsel %vm1942, %v2503, %v2501
      %s2506 = scalar_lea.vmem %s5, 696
      %v2507 = vld [vmem:[%s2506] sm:$0xff]
      %v2509 = vcombine.high %v2507, %v2507
      %v2511 = vmul.f32 %v2505, %v2507
      %v2512 = vmul.f32 %v2504, %v2509
      %v2513 = vadd.f32 %v2498, %v2511
      %v2514 = vadd.f32 %v2499, %v2512
      %2515 = vrot.lane.b32.xlu0 %v2129, 11
      %v2516 = vpop.permute.xlu0 %2515
      %2517 = vrot.lane.b32.xlu0 %v2130, 11
      %v2518 = vpop.permute.xlu0 %2517
      %v2519 = vsel %vm1967, %v2516, %v2518
      %v2520 = vsel %vm1967, %v2518, %v2516
      %s2521 = scalar_lea.vmem %s5, 704
      %v2522 = vld [vmem:[%s2521] sm:$0xff]
      %v2524 = vcombine.high %v2522, %v2522
      %v2526 = vmul.f32 %v2520, %v2522
      %v2527 = vmul.f32 %v2519, %v2524
      %v2528 = vadd.f32 %v2513, %v2526
      %v2529 = vadd.f32 %v2514, %v2527
      %2530 = vrot.lane.b32.xlu0 %v2129, 12
      %v2531 = vpop.permute.xlu0 %2530
      %2532 = vrot.lane.b32.xlu0 %v2130, 12
      %v2533 = vpop.permute.xlu0 %2532
      %v2534 = vsel %vm1992, %v2531, %v2533
      %v2535 = vsel %vm1992, %v2533, %v2531
      %s2536 = scalar_lea.vmem %s5, 712
      %v2537 = vld [vmem:[%s2536] sm:$0xff]
      %v2539 = vcombine.high %v2537, %v2537
      %v2541 = vmul.f32 %v2535, %v2537
      %v2542 = vmul.f32 %v2534, %v2539
      %v2543 = vadd.f32 %v2528, %v2541
      %v2544 = vadd.f32 %v2529, %v2542
      %2545 = vrot.lane.b32.xlu0 %v2129, 13
      %v2546 = vpop.permute.xlu0 %2545
      %2547 = vrot.lane.b32.xlu0 %v2130, 13
      %v2548 = vpop.permute.xlu0 %2547
      %v2549 = vsel %vm2017, %v2546, %v2548
      %v2550 = vsel %vm2017, %v2548, %v2546
      %s2551 = scalar_lea.vmem %s5, 720
      %v2552 = vld [vmem:[%s2551] sm:$0xff]
      %v2554 = vcombine.high %v2552, %v2552
      %v2556 = vmul.f32 %v2550, %v2552
      %v2557 = vmul.f32 %v2549, %v2554
      %v2558 = vadd.f32 %v2543, %v2556
      %v2559 = vadd.f32 %v2544, %v2557
      %2560 = vrot.lane.b32.xlu0 %v2129, 14
      %v2561 = vpop.permute.xlu0 %2560
      %2562 = vrot.lane.b32.xlu0 %v2130, 14
      %v2563 = vpop.permute.xlu0 %2562
      %v2564 = vsel %vm2042, %v2561, %v2563
      %v2565 = vsel %vm2042, %v2563, %v2561
      %s2566 = scalar_lea.vmem %s5, 728
      %v2567 = vld [vmem:[%s2566] sm:$0xff]
      %v2569 = vcombine.high %v2567, %v2567
      %v2571 = vmul.f32 %v2565, %v2567
      %v2572 = vmul.f32 %v2564, %v2569
      %v2573 = vadd.f32 %v2558, %v2571
      %v2574 = vadd.f32 %v2559, %v2572
      %2575 = vrot.lane.b32.xlu0 %v2129, 15
      %v2576 = vpop.permute.xlu0 %2575
      %2577 = vrot.lane.b32.xlu0 %v2130, 15
      %v2578 = vpop.permute.xlu0 %2577
      %v2579 = vsel %vm532, %v2576, %v2578
      %v2580 = vsel %vm532, %v2578, %v2576
      %s2581 = scalar_lea.vmem %s5, 736
      %v2582 = vld [vmem:[%s2581] sm:$0xff]
      %v2584 = vcombine.high %v2582, %v2582
      %v2586 = vmul.f32 %v2580, %v2582
      %v2587 = vmul.f32 %v2579, %v2584
      %v2588 = vadd.f32 %v2573, %v2586
      %v2589 = vadd.f32 %v2574, %v2587
      %v2592 = vrot.slane %v2588, 4
      %v2593 = vrot.slane %v2589, 4
      %v2596 = vadd.f32 %v1321, %v2592
      %v2597 = vadd.f32 %v1322, %v2593
      %v2598 = vxor.u32 %v2596, 2147483648
      %v2599 = vxor.u32 %v2597, 2147483648
      %v2600 = vmul.f32 %v2598, 1.442695
      %v2601 = vpow.pop %v2600
      %v2602 = vmul.f32 %v2599, 1.442695
      %v2603 = vpow.pop %v2602
      %v2604 = vadd.f32 %v2601, 1.0
      %v2605 = vadd.f32 %v2603, 1.0
      %v2606 = vrcp.pop %v2604
      %v2607 = vmul.f32 1.0, %v2606
      %v2608 = vrcp.pop %v2605
      %v2609 = vmul.f32 1.0, %v2608
      %v2610 = vtanh.pop %v2129
      %v2611 = vtanh.pop %v2130
      %v2614 = vrot.slane %v2610, 4
      %v2615 = vrot.slane %v2611, 4
      %v2618 = vmul.f32 %v2607, %v2614
      %v2619 = vmul.f32 %v2609, %v2615
      %v2622 = vcombine.high %v2618, %v2619
      %2624 = vst [vmem:[%s306] sm:$0xff] %v2622
      %v2627 = vcombine.low %v2129, %v2130
      %2629 = vst [vmem:[%s311] sm:$0xff] %v2627
      %p2630 = scmp.lt.s32.totalorder %s19, 1
      %s2631 = scalar_select %p2630, %s19, 1
      %s2632 = smul.addr %s2631, 2
      %s2633 = smul.addr %s2632, 4
      %s2634 = scalar_lea.vmem %s6, %s2633
      %p2635 = scmp.lt.s32.totalorder %s19, 1
      %s2636 = scalar_select %p2635, %s19, 1
      %s2637 = smul.addr %s2636, 2
      %s2638 = smul.addr %s2637, 4
      %s2639 = scalar_lea.vmem %s7, %s2638
      // Predicated region
      $region45: #{mims_forward.1} parent=43 // pred_check
        %p2640 = pneg %p173
      $region46: #{mims_forward.1} parent=43 // pred_check_branch
        %2642 = sbr.rel (%p2640) target = $region48
      $region47: #{mims_forward.1} parent=43 // pred_region
        _
      $region48: #{mims_forward.1} parent=43 // pred_fallthru
        _
      // Predicated region
      $region49: #{mims_forward.1} parent=43 // pred_check
        %p2643 = pneg %p199
      $region50: #{mims_forward.1} parent=43 // pred_check_branch
        %2645 = sbr.rel (%p2643) target = $region52
      $region51: #{mims_forward.1} parent=43 // pred_region
        _
      $region52: #{mims_forward.1} parent=43 // pred_fallthru
        _
    $region44: #{mims_forward.1} parent=5 // pred_fallthru
      _
    %p2646 = scmp.le.s32.totalorder 2, %s14
    // Predicated region
    $region53: #{mims_forward.1} parent=5 // pred_check
      %p2647 = pneg %p2646
    $region54: #{mims_forward.1} parent=5 // pred_check_branch
      %2649 = sbr.rel (%p2647) target = $region56
    $region55: #{mims_forward.1} parent=5 // pred_region
      %s2650 = ssub.s32 %s14, 2
      // Predicated region
      $region57: #{mims_forward.1} parent=55 // pred_check
        %p2651 = pneg %p179
      $region58: #{mims_forward.1} parent=55 // pred_check_branch
        %2653 = sbr.rel (%p2651) target = $region60
      $region59: #{mims_forward.1} parent=55 // pred_region
        %p2654 = scmp.lt.s32.totalorder %s20, 1
        %s2655 = scalar_select %p2654, %s20, 1
        %s2656 = smul.addr %s2655, 2
        %s2657 = smul.addr %s2656, 4
        %s2658 = scalar_lea.vmem %s6, %s2657
      $region60: #{mims_forward.1} parent=55 // pred_fallthru
        _
      // Predicated region
      $region61: #{mims_forward.1} parent=55 // pred_check
        %p2659 = pneg %p205
      $region62: #{mims_forward.1} parent=55 // pred_check_branch
        %2661 = sbr.rel (%p2659) target = $region64
      $region63: #{mims_forward.1} parent=55 // pred_region
        %p2662 = scmp.lt.s32.totalorder %s20, 1
        %s2663 = scalar_select %p2662, %s20, 1
        %s2664 = smul.addr %s2663, 2
        %s2665 = smul.addr %s2664, 4
        %s2666 = scalar_lea.vmem %s7, %s2665
      $region64: #{mims_forward.1} parent=55 // pred_fallthru
        _
    $region56: #{mims_forward.1} parent=5 // pred_fallthru
      _
  $region6: #{mims_forward.1} parent=0 // loop_footer
    %s18 = sadd.s32 1, %s14
  $region7: #{mims_forward.1} parent=0 // loop_footer_branch
    %13 = sbr.rel target = $region3
  $region8: #{mims_forward.1} parent=0 // loop_exit
    _

</llo_original>
